<compile_context>
chip_gen: v5e
topology: v5e:2x2
jax: 0.10.0
libtpu: 0.0.40
codegen_flags: <defaults>
</compile_context>

<pallas_src>
import functools

import jax
import jax.numpy as jnp
import numpy as np
from jax.experimental import pallas as pl
from jax.experimental.pallas import tpu as pltpu

NEG_SLOPE = 0.01   # nn.LeakyReLU default negative slope
GROWTH = 4         # internal channel growth of ResidualDenseBlock_out


# ----------------------------------------------------------------------------
# Pallas kernel
# ----------------------------------------------------------------------------
def _rdb_kernel(x_ref, w1, w2, w3, w4, w5, b1, b2, b3, b4, b5,
                out_ref, buf_ref, *, H, W, CIN, LEAD, TRAIL):
    HW = H * W
    BUFLEN = LEAD + HW + TRAIL
    C_ROWS = buf_ref.shape[0]

    # Zero the halo bands (vertical zero padding for dy = +-1 taps).
    # NOTE: the data path below only ever writes lanes [LEAD, LEAD+HW), so the
    # halo lanes stay zero for the whole step.  Do NOT write into the halo
    # region elsewhere, or the dy=+-1 taps will read corrupted values.
    buf_ref[:, 0:LEAD] = jnp.zeros((C_ROWS, LEAD), jnp.float32)
    buf_ref[:, LEAD + HW:BUFLEN] = jnp.zeros((C_ROWS, TRAIL), jnp.float32)

    # Block input x: channels on sublanes, pixels (lane-dense) on lanes.
    buf_ref[0:CIN, LEAD:LEAD + HW] = x_ref[...]

    # Horizontal border masks (depend only on the output pixel's w coordinate).
    # Built once per invocation, applied once per kernel column below.
    col = jax.lax.broadcasted_iota(jnp.int32, (1, HW), 1) % W
    mask_l = (col != 0).astype(jnp.float32)       # dx = -1 invalid at w == 0
    mask_r = (col != W - 1).astype(jnp.float32)   # dx = +1 invalid at w == W-1

    w_refs = (w1, w2, w3, w4, w5)
    b_refs = (b1, b2, b3, b4, b5)

    for k in range(5):
        cin = CIN + GROWTH * k            # dense-concat input width of conv k
        cout = w_refs[k].shape[1]

        def column(dx, _k=k, _cin=cin):
            # Sum of the three vertical taps of one kernel column:
            #   sum_dy  W[dy,dx] @ X_shift(dy,dx)   ->  (cout, HW), lane-dense.
            acc = None
            for dy in (-1, 0, 1):
                start = LEAD + dy * W + dx                    # static offset
                xs = buf_ref[0:_cin, start:start + HW]        # (cin, HW)
                tap = 3 * (dy + 1) + (dx + 1)
                wt = w_refs[_k][tap]                          # (cout, cin)
                t = jnp.dot(wt, xs, preferred_element_type=jnp.float32)
                acc = t if acc is None else acc + t
            return acc

        acc = column(0) + mask_l * column(-1) + mask_r * column(1)
        acc = acc + b_refs[k][...]                            # (cout, 1) bias

        if k < 4:
            acc = jnp.where(acc >= 0, acc, NEG_SLOPE * acc)   # LeakyReLU
            buf_ref[cin:cin + GROWTH, LEAD:LEAD + HW] = acc   # x_{k+1}
        else:
            out_ref[...] = acc                                # conv5: no lrelu


# ----------------------------------------------------------------------------
# Wrapper
# ----------------------------------------------------------------------------
def residual_dense_block_pallas(x_nchw, w_packed, b_packed):
    N, CIN, H, W = x_nchw.shape
    HW = H * W
    COUT = w_packed[4].shape[1]
    LEAD = 128
    TRAIL = 128
    assert LEAD >= W + 1 and TRAIL >= W + 1, "halo too small for this width"
    BUFLEN = LEAD + HW + TRAIL
    C_ROWS = ((CIN + 4 * GROWTH + 7) // 8) * 8     # sublane-padded channel rows

    x_flat = x_nchw.reshape(N, CIN, HW)            # pixels lane-dense

    kernel = functools.partial(_rdb_kernel, H=H, W=W, CIN=CIN,
                               LEAD=LEAD, TRAIL=TRAIL)

    def full_spec(a):
        return pl.BlockSpec(a.shape, lambda b: (0,) * a.ndim)

    in_specs = [pl.BlockSpec((None, CIN, HW), lambda b: (b, 0, 0))]
    in_specs += [full_spec(w) for w in w_packed]
    in_specs += [full_spec(bb) for bb in b_packed]
    out_spec = pl.BlockSpec((None, COUT, HW), lambda b: (b, 0, 0))

    y = pl.pallas_call(
        kernel,
        out_shape=jax.ShapeDtypeStruct((N, COUT, HW), jnp.float32),
        grid=(N,),
        in_specs=in_specs,
        out_specs=out_spec,
        scratch_shapes=[pltpu.VMEM((C_ROWS, BUFLEN), jnp.float32)],
        compiler_params=pltpu.CompilerParams(
            dimension_semantics=("parallel",)),    # batch is embarrassingly parallel
    )(x_flat, *w_packed, *b_packed)

    return y.reshape(N, COUT, H, W)


def pack_params(ws, bs):
    """ws[k]: OIHW (cout, cin_k, 3, 3) -> (9, cout, cin_k); bs[k] -> (cout, 1)."""
    w_packed, b_packed = [], []
    for k in range(5):
        w = np.asarray(ws[k], np.float32)
        cout, cin = w.shape[0], w.shape[1]
        wp = np.transpose(w, (2, 3, 0, 1)).reshape(9, cout, cin)  # [3*ky+kx, o, i]
        w_packed.append(jnp.asarray(wp))
        b_packed.append(jnp.asarray(np.asarray(bs[k], np.float32).reshape(cout, 1)))
    return w_packed, b_packed


# ----------------------------------------------------------------------------
# Pure-JAX reference (verification only)
# ----------------------------------------------------------------------------
def _conv3x3_ref(x, w, b):
    out = jax.lax.conv_general_dilated(
        x, w, window_strides=(1, 1), padding=((1, 1), (1, 1)),
        dimension_numbers=("NCHW", "OIHW", "NCHW"),
        precision=jax.lax.Precision.HIGHEST)
    return out + b[None, :, None, None]


def residual_dense_block_ref(x, ws, bs):
    lrelu = lambda v: jnp.where(v >= 0, v, NEG_SLOPE * v)
    x1 = lrelu(_conv3x3_ref(x, ws[0], bs[0]))
    x2 = lrelu(_conv3x3_ref(jnp.concatenate([x, x1], 1), ws[1], bs[1]))
    x3 = lrelu(_conv3x3_ref(jnp.concatenate([x, x1, x2], 1), ws[2], bs[2]))
    x4 = lrelu(_conv3x3_ref(jnp.concatenate([x, x1, x2, x3], 1), ws[3], bs[3]))
    return _conv3x3_ref(jnp.concatenate([x, x1, x2, x3, x4], 1), ws[4], bs[4])


# ----------------------------------------------------------------------------
if __name__ == "__main__":
    key = jax.random.PRNGKey(0)
    N, CIN, H, W = 2, 4, 16, 16
    COUT = 4

    key, kx = jax.random.split(key)
    x = jax.random.normal(kx, (N, CIN, H, W), jnp.float32)

    # Parameter init.  NOTE: the PyTorch __init__ zero-initialises conv5 via
    # mutil.initialize_weights([conv5], 0.0); small random weights are used
    # everywhere here so the kernel computes something non-trivial to verify.
    cins = [CIN + GROWTH * k for k in range(5)]
    couts = [GROWTH] * 4 + [COUT]
    ws, bs = [], []
    for k in range(5):
        key, k1, k2 = jax.random.split(key, 3)
        ws.append(0.1 * jax.random.normal(k1, (couts[k], cins[k], 3, 3), jnp.float32))
        bs.append(0.1 * jax.random.normal(k2, (couts[k],), jnp.float32))

    w_packed, b_packed = pack_params(ws, bs)

    y = residual_dense_block_pallas(x, w_packed, b_packed)
    jax.block_until_ready(y)

    # Verify against the pure-JAX reference (loose tolerance: MXU matmul
    # precision vs XLA HIGHEST-precision conv).
    y_ref = residual_dense_block_ref(x, ws, bs)
    np.testing.assert_allclose(np.asarray(y), np.asarray(y_ref),
                               rtol=2e-2, atol=2e-2)

    print("KERNEL_OK")
</pallas_src>

<mosaic_0001>
module attributes {stable_mosaic.version = 11 : i64} {
  func.func @_rdb_kernel(%arg0: i32, %arg1: memref<1x4x256xf32, #tpu.memory_space<vmem>>, %arg2: memref<9x4x4xf32, #tpu.memory_space<vmem>>, %arg3: memref<9x4x8xf32, #tpu.memory_space<vmem>>, %arg4: memref<9x4x12xf32, #tpu.memory_space<vmem>>, %arg5: memref<9x4x16xf32, #tpu.memory_space<vmem>>, %arg6: memref<9x4x20xf32, #tpu.memory_space<vmem>>, %arg7: memref<4x1xf32, #tpu.memory_space<vmem>>, %arg8: memref<4x1xf32, #tpu.memory_space<vmem>>, %arg9: memref<4x1xf32, #tpu.memory_space<vmem>>, %arg10: memref<4x1xf32, #tpu.memory_space<vmem>>, %arg11: memref<4x1xf32, #tpu.memory_space<vmem>>, %arg12: memref<1x4x256xf32, #tpu.memory_space<vmem>>, %arg13: memref<24x512xf32, #tpu.memory_space<vmem>>) attributes {dimension_semantics = [#tpu.dimension_semantics<parallel>], iteration_bounds = array<i64: 2>, scalar_prefetch = 0 : i64, scratch_operands = 1 : i64, tpu.core_type = #tpu.core_type<tc>, window_params = [{transform_indices = @transform_0, window_bounds = array<i64: 1, 4, 256>}, {pipeline_mode = #tpu.pipeline_mode<synchronous>, transform_indices = @transform_1, window_bounds = array<i64: 9, 4, 4>}, {pipeline_mode = #tpu.pipeline_mode<synchronous>, transform_indices = @transform_2, window_bounds = array<i64: 9, 4, 8>}, {pipeline_mode = #tpu.pipeline_mode<synchronous>, transform_indices = @transform_3, window_bounds = array<i64: 9, 4, 12>}, {pipeline_mode = #tpu.pipeline_mode<synchronous>, transform_indices = @transform_4, window_bounds = array<i64: 9, 4, 16>}, {pipeline_mode = #tpu.pipeline_mode<synchronous>, transform_indices = @transform_5, window_bounds = array<i64: 9, 4, 20>}, {pipeline_mode = #tpu.pipeline_mode<synchronous>, transform_indices = @transform_6, window_bounds = array<i64: 4, 1>}, {pipeline_mode = #tpu.pipeline_mode<synchronous>, transform_indices = @transform_7, window_bounds = array<i64: 4, 1>}, {pipeline_mode = #tpu.pipeline_mode<synchronous>, transform_indices = @transform_8, window_bounds = array<i64: 4, 1>}, {pipeline_mode = #tpu.pipeline_mode<synchronous>, transform_indices = @transform_9, window_bounds = array<i64: 4, 1>}, {pipeline_mode = #tpu.pipeline_mode<synchronous>, transform_indices = @transform_10, window_bounds = array<i64: 4, 1>}, {transform_indices = @transform_11, window_bounds = array<i64: 1, 4, 256>}]} {
    %cst = arith.constant 0.000000e+00 : f32
    %0 = vector.broadcast %cst : f32 to vector<24x128xf32>
    %c0 = arith.constant 0 : index
    %c0_0 = arith.constant 0 : index
    %1 = vector.load %arg13[%c0, %c0_0] : memref<24x512xf32, #tpu.memory_space<vmem>>, vector<24x128xf32>
    tpu.vector_store %arg13[%c0, %c0_0], %0 {strides = array<i32>} : memref<24x512xf32, #tpu.memory_space<vmem>>, vector<24x128xf32>,
    %cst_1 = arith.constant 0.000000e+00 : f32
    %2 = vector.broadcast %cst_1 : f32 to vector<24x128xf32>
    %c0_2 = arith.constant 0 : index
    %c384 = arith.constant 384 : index
    %3 = vector.load %arg13[%c0_2, %c384] : memref<24x512xf32, #tpu.memory_space<vmem>>, vector<24x128xf32>
    tpu.vector_store %arg13[%c0_2, %c384], %2 {strides = array<i32>} : memref<24x512xf32, #tpu.memory_space<vmem>>, vector<24x128xf32>,
    %c0_3 = arith.constant 0 : index
    %c0_4 = arith.constant 0 : index
    %c0_5 = arith.constant 0 : index
    %4 = vector.load %arg1[%c0_3, %c0_4, %c0_5] : memref<1x4x256xf32, #tpu.memory_space<vmem>>, vector<1x4x256xf32>
    %5 = vector.shape_cast %4 : vector<1x4x256xf32> to vector<4x256xf32>
    %c0_6 = arith.constant 0 : index
    %c128 = arith.constant 128 : index
    %6 = vector.load %arg13[%c0_6, %c128] : memref<24x512xf32, #tpu.memory_space<vmem>>, vector<4x256xf32>
    tpu.vector_store %arg13[%c0_6, %c128], %5 {strides = array<i32>} : memref<24x512xf32, #tpu.memory_space<vmem>>, vector<4x256xf32>,
    %7 = tpu.iota {dimensions = array<i32: 1>} : vector<1x256xi32>
    %c16_i32 = arith.constant 16 : i32
    %c0_i32 = arith.constant 0 : i32
    %8 = arith.cmpi eq, %c16_i32, %c0_i32 : i32
    %c1_i32 = arith.constant 1 : i32
    %9 = arith.select %8, %c1_i32, %c16_i32 : i32
    %10 = vector.broadcast %9 : i32 to vector<1x256xi32>
    %11 = arith.remsi %7, %10 : vector<1x256xi32>
    %c0_i32_7 = arith.constant 0 : i32
    %12 = vector.broadcast %c0_i32_7 : i32 to vector<1x256xi32>
    %13 = arith.cmpi ne, %11, %12 : vector<1x256xi32>
    %c0_i32_8 = arith.constant 0 : i32
    %14 = vector.broadcast %c0_i32_8 : i32 to vector<1x256xi32>
    %15 = arith.cmpi slt, %11, %14 : vector<1x256xi32>
    %c0_i32_9 = arith.constant 0 : i32
    %16 = arith.cmpi slt, %9, %c0_i32_9 : i32
    %17 = vector.broadcast %16 : i1 to vector<1x256xi1>
    %18 = vector.broadcast %17 : vector<1x256xi1> to vector<1x256xi1>
    %19 = arith.xori %15, %18 : vector<1x256xi1>
    %20 = arith.andi %19, %13 : vector<1x256xi1>
    %21 = vector.broadcast %9 : i32 to vector<1x256xi32>
    %22 = arith.addi %11, %21 : vector<1x256xi32>
    %23 = arith.select %20, %22, %11 : vector<1x256xi1>, vector<1x256xi32>
    %c0_i32_10 = arith.constant 0 : i32
    %24 = vector.broadcast %c0_i32_10 : i32 to vector<1x256xi32>
    %25 = arith.cmpi ne, %23, %24 : vector<1x256xi32>
    %26 = arith.extui %25 : vector<1x256xi1> to vector<1x256xi32>
    %27 = arith.sitofp %26 : vector<1x256xi32> to vector<1x256xf32>
    %c15_i32 = arith.constant 15 : i32
    %28 = vector.broadcast %c15_i32 : i32 to vector<1x256xi32>
    %29 = arith.cmpi ne, %23, %28 : vector<1x256xi32>
    %30 = arith.extui %29 : vector<1x256xi1> to vector<1x256xi32>
    %31 = arith.sitofp %30 : vector<1x256xi32> to vector<1x256xf32>
    %c0_11 = arith.constant 0 : index
    %c112 = arith.constant 112 : index
    %32 = vector.load %arg13[%c0_11, %c112] : memref<24x512xf32, #tpu.memory_space<vmem>>, vector<4x256xf32>
    %c1 = arith.constant 1 : index
    %c0_12 = arith.constant 0 : index
    %c0_13 = arith.constant 0 : index
    %33 = vector.load %arg2[%c1, %c0_12, %c0_13] : memref<9x4x4xf32, #tpu.memory_space<vmem>>, vector<1x4x4xf32>
    %34 = vector.shape_cast %33 : vector<1x4x4xf32> to vector<4x4xf32>
    %cst_14 = arith.constant dense<0.000000e+00> : vector<4x256xf32>
    %35 = tpu.matmul %34, %32, %cst_14 {dimension_numbers = #tpu.dot_dimension_numbers<[1], [0], [0], [1], [0, 0, 1, 1], [], []>} : vector<4x4xf32>, vector<4x256xf32>, vector<4x256xf32> -> vector<4x256xf32>
    %c0_15 = arith.constant 0 : index
    %c128_16 = arith.constant 128 : index
    %36 = vector.load %arg13[%c0_15, %c128_16] : memref<24x512xf32, #tpu.memory_space<vmem>>, vector<4x256xf32>
    %c4 = arith.constant 4 : index
    %c0_17 = arith.constant 0 : index
    %c0_18 = arith.constant 0 : index
    %37 = vector.load %arg2[%c4, %c0_17, %c0_18] : memref<9x4x4xf32, #tpu.memory_space<vmem>>, vector<1x4x4xf32>
    %38 = vector.shape_cast %37 : vector<1x4x4xf32> to vector<4x4xf32>
    %cst_19 = arith.constant dense<0.000000e+00> : vector<4x256xf32>
    %39 = tpu.matmul %38, %36, %cst_19 {dimension_numbers = #tpu.dot_dimension_numbers<[1], [0], [0], [1], [0, 0, 1, 1], [], []>} : vector<4x4xf32>, vector<4x256xf32>, vector<4x256xf32> -> vector<4x256xf32>
    %40 = arith.addf %35, %39 : vector<4x256xf32>
    %c0_20 = arith.constant 0 : index
    %c144 = arith.constant 144 : index
    %41 = vector.load %arg13[%c0_20, %c144] : memref<24x512xf32, #tpu.memory_space<vmem>>, vector<4x256xf32>
    %c7 = arith.constant 7 : index
    %c0_21 = arith.constant 0 : index
    %c0_22 = arith.constant 0 : index
    %42 = vector.load %arg2[%c7, %c0_21, %c0_22] : memref<9x4x4xf32, #tpu.memory_space<vmem>>, vector<1x4x4xf32>
    %43 = vector.shape_cast %42 : vector<1x4x4xf32> to vector<4x4xf32>
    %cst_23 = arith.constant dense<0.000000e+00> : vector<4x256xf32>
    %44 = tpu.matmul %43, %41, %cst_23 {dimension_numbers = #tpu.dot_dimension_numbers<[1], [0], [0], [1], [0, 0, 1, 1], [], []>} : vector<4x4xf32>, vector<4x256xf32>, vector<4x256xf32> -> vector<4x256xf32>
    %45 = arith.addf %40, %44 : vector<4x256xf32>
    %c0_24 = arith.constant 0 : index
    %c111 = arith.constant 111 : index
    %46 = vector.load %arg13[%c0_24, %c111] : memref<24x512xf32, #tpu.memory_space<vmem>>, vector<4x256xf32>
    %c0_25 = arith.constant 0 : index
    %c0_26 = arith.constant 0 : index
    %c0_27 = arith.constant 0 : index
    %47 = vector.load %arg2[%c0_25, %c0_26, %c0_27] : memref<9x4x4xf32, #tpu.memory_space<vmem>>, vector<1x4x4xf32>
    %48 = vector.shape_cast %47 : vector<1x4x4xf32> to vector<4x4xf32>
    %cst_28 = arith.constant dense<0.000000e+00> : vector<4x256xf32>
    %49 = tpu.matmul %48, %46, %cst_28 {dimension_numbers = #tpu.dot_dimension_numbers<[1], [0], [0], [1], [0, 0, 1, 1], [], []>} : vector<4x4xf32>, vector<4x256xf32>, vector<4x256xf32> -> vector<4x256xf32>
    %c0_29 = arith.constant 0 : index
    %c127 = arith.constant 127 : index
    %50 = vector.load %arg13[%c0_29, %c127] : memref<24x512xf32, #tpu.memory_space<vmem>>, vector<4x256xf32>
    %c3 = arith.constant 3 : index
    %c0_30 = arith.constant 0 : index
    %c0_31 = arith.constant 0 : index
    %51 = vector.load %arg2[%c3, %c0_30, %c0_31] : memref<9x4x4xf32, #tpu.memory_space<vmem>>, vector<1x4x4xf32>
    %52 = vector.shape_cast %51 : vector<1x4x4xf32> to vector<4x4xf32>
    %cst_32 = arith.constant dense<0.000000e+00> : vector<4x256xf32>
    %53 = tpu.matmul %52, %50, %cst_32 {dimension_numbers = #tpu.dot_dimension_numbers<[1], [0], [0], [1], [0, 0, 1, 1], [], []>} : vector<4x4xf32>, vector<4x256xf32>, vector<4x256xf32> -> vector<4x256xf32>
    %54 = arith.addf %49, %53 : vector<4x256xf32>
    %c0_33 = arith.constant 0 : index
    %c143 = arith.constant 143 : index
    %55 = vector.load %arg13[%c0_33, %c143] : memref<24x512xf32, #tpu.memory_space<vmem>>, vector<4x256xf32>
    %c6 = arith.constant 6 : index
    %c0_34 = arith.constant 0 : index
    %c0_35 = arith.constant 0 : index
    %56 = vector.load %arg2[%c6, %c0_34, %c0_35] : memref<9x4x4xf32, #tpu.memory_space<vmem>>, vector<1x4x4xf32>
    %57 = vector.shape_cast %56 : vector<1x4x4xf32> to vector<4x4xf32>
    %cst_36 = arith.constant dense<0.000000e+00> : vector<4x256xf32>
    %58 = tpu.matmul %57, %55, %cst_36 {dimension_numbers = #tpu.dot_dimension_numbers<[1], [0], [0], [1], [0, 0, 1, 1], [], []>} : vector<4x4xf32>, vector<4x256xf32>, vector<4x256xf32> -> vector<4x256xf32>
    %59 = arith.addf %54, %58 : vector<4x256xf32>
    %60 = vector.broadcast %27 : vector<1x256xf32> to vector<4x256xf32>
    %61 = arith.mulf %60, %59 : vector<4x256xf32>
    %62 = arith.addf %45, %61 : vector<4x256xf32>
    %c0_37 = arith.constant 0 : index
    %c113 = arith.constant 113 : index
    %63 = vector.load %arg13[%c0_37, %c113] : memref<24x512xf32, #tpu.memory_space<vmem>>, vector<4x256xf32>
    %c2 = arith.constant 2 : index
    %c0_38 = arith.constant 0 : index
    %c0_39 = arith.constant 0 : index
    %64 = vector.load %arg2[%c2, %c0_38, %c0_39] : memref<9x4x4xf32, #tpu.memory_space<vmem>>, vector<1x4x4xf32>
    %65 = vector.shape_cast %64 : vector<1x4x4xf32> to vector<4x4xf32>
    %cst_40 = arith.constant dense<0.000000e+00> : vector<4x256xf32>
    %66 = tpu.matmul %65, %63, %cst_40 {dimension_numbers = #tpu.dot_dimension_numbers<[1], [0], [0], [1], [0, 0, 1, 1], [], []>} : vector<4x4xf32>, vector<4x256xf32>, vector<4x256xf32> -> vector<4x256xf32>
    %c0_41 = arith.constant 0 : index
    %c129 = arith.constant 129 : index
    %67 = vector.load %arg13[%c0_41, %c129] : memref<24x512xf32, #tpu.memory_space<vmem>>, vector<4x256xf32>
    %c5 = arith.constant 5 : index
    %c0_42 = arith.constant 0 : index
    %c0_43 = arith.constant 0 : index
    %68 = vector.load %arg2[%c5, %c0_42, %c0_43] : memref<9x4x4xf32, #tpu.memory_space<vmem>>, vector<1x4x4xf32>
    %69 = vector.shape_cast %68 : vector<1x4x4xf32> to vector<4x4xf32>
    %cst_44 = arith.constant dense<0.000000e+00> : vector<4x256xf32>
    %70 = tpu.matmul %69, %67, %cst_44 {dimension_numbers = #tpu.dot_dimension_numbers<[1], [0], [0], [1], [0, 0, 1, 1], [], []>} : vector<4x4xf32>, vector<4x256xf32>, vector<4x256xf32> -> vector<4x256xf32>
    %71 = arith.addf %66, %70 : vector<4x256xf32>
    %c0_45 = arith.constant 0 : index
    %c145 = arith.constant 145 : index
    %72 = vector.load %arg13[%c0_45, %c145] : memref<24x512xf32, #tpu.memory_space<vmem>>, vector<4x256xf32>
    %c8 = arith.constant 8 : index
    %c0_46 = arith.constant 0 : index
    %c0_47 = arith.constant 0 : index
    %73 = vector.load %arg2[%c8, %c0_46, %c0_47] : memref<9x4x4xf32, #tpu.memory_space<vmem>>, vector<1x4x4xf32>
    %74 = vector.shape_cast %73 : vector<1x4x4xf32> to vector<4x4xf32>
    %cst_48 = arith.constant dense<0.000000e+00> : vector<4x256xf32>
    %75 = tpu.matmul %74, %72, %cst_48 {dimension_numbers = #tpu.dot_dimension_numbers<[1], [0], [0], [1], [0, 0, 1, 1], [], []>} : vector<4x4xf32>, vector<4x256xf32>, vector<4x256xf32> -> vector<4x256xf32>
    %76 = arith.addf %71, %75 : vector<4x256xf32>
    %77 = vector.broadcast %31 : vector<1x256xf32> to vector<4x256xf32>
    %78 = arith.mulf %77, %76 : vector<4x256xf32>
    %79 = arith.addf %62, %78 : vector<4x256xf32>
    %c0_49 = arith.constant 0 : index
    %c0_50 = arith.constant 0 : index
    %80 = vector.load %arg7[%c0_49, %c0_50] : memref<4x1xf32, #tpu.memory_space<vmem>>, vector<4x1xf32>
    %81 = vector.broadcast %80 : vector<4x1xf32> to vector<4x256xf32>
    %82 = arith.addf %79, %81 : vector<4x256xf32>
    %cst_51 = arith.constant 0.000000e+00 : f32
    %83 = vector.broadcast %cst_51 : f32 to vector<4x256xf32>
    %84 = arith.cmpf oge, %82, %83 : vector<4x256xf32>
    %cst_52 = arith.constant 0.00999999977 : f32
    %85 = vector.broadcast %cst_52 : f32 to vector<4x256xf32>
    %86 = arith.mulf %85, %82 : vector<4x256xf32>
    %87 = arith.select %84, %82, %86 : vector<4x256xi1>, vector<4x256xf32>
    %c4_53 = arith.constant 4 : index
    %c128_54 = arith.constant 128 : index
    %88 = vector.load %arg13[%c4_53, %c128_54] : memref<24x512xf32, #tpu.memory_space<vmem>>, vector<4x256xf32>
    tpu.vector_store %arg13[%c4_53, %c128_54], %87 {strides = array<i32>} : memref<24x512xf32, #tpu.memory_space<vmem>>, vector<4x256xf32>,
    %c0_55 = arith.constant 0 : index
    %c112_56 = arith.constant 112 : index
    %89 = vector.load %arg13[%c0_55, %c112_56] : memref<24x512xf32, #tpu.memory_space<vmem>>, vector<8x256xf32>
    %c1_57 = arith.constant 1 : index
    %c0_58 = arith.constant 0 : index
    %c0_59 = arith.constant 0 : index
    %90 = vector.load %arg3[%c1_57, %c0_58, %c0_59] : memref<9x4x8xf32, #tpu.memory_space<vmem>>, vector<1x4x8xf32>
    %91 = vector.shape_cast %90 : vector<1x4x8xf32> to vector<4x8xf32>
    %cst_60 = arith.constant dense<0.000000e+00> : vector<4x256xf32>
    %92 = tpu.matmul %91, %89, %cst_60 {dimension_numbers = #tpu.dot_dimension_numbers<[1], [0], [0], [1], [0, 0, 1, 1], [], []>} : vector<4x8xf32>, vector<8x256xf32>, vector<4x256xf32> -> vector<4x256xf32>
    %c0_61 = arith.constant 0 : index
    %c128_62 = arith.constant 128 : index
    %93 = vector.load %arg13[%c0_61, %c128_62] : memref<24x512xf32, #tpu.memory_space<vmem>>, vector<8x256xf32>
    %c4_63 = arith.constant 4 : index
    %c0_64 = arith.constant 0 : index
    %c0_65 = arith.constant 0 : index
    %94 = vector.load %arg3[%c4_63, %c0_64, %c0_65] : memref<9x4x8xf32, #tpu.memory_space<vmem>>, vector<1x4x8xf32>
    %95 = vector.shape_cast %94 : vector<1x4x8xf32> to vector<4x8xf32>
    %cst_66 = arith.constant dense<0.000000e+00> : vector<4x256xf32>
    %96 = tpu.matmul %95, %93, %cst_66 {dimension_numbers = #tpu.dot_dimension_numbers<[1], [0], [0], [1], [0, 0, 1, 1], [], []>} : vector<4x8xf32>, vector<8x256xf32>, vector<4x256xf32> -> vector<4x256xf32>
    %97 = arith.addf %92, %96 : vector<4x256xf32>
    %c0_67 = arith.constant 0 : index
    %c144_68 = arith.constant 144 : index
    %98 = vector.load %arg13[%c0_67, %c144_68] : memref<24x512xf32, #tpu.memory_space<vmem>>, vector<8x256xf32>
    %c7_69 = arith.constant 7 : index
    %c0_70 = arith.constant 0 : index
    %c0_71 = arith.constant 0 : index
    %99 = vector.load %arg3[%c7_69, %c0_70, %c0_71] : memref<9x4x8xf32, #tpu.memory_space<vmem>>, vector<1x4x8xf32>
    %100 = vector.shape_cast %99 : vector<1x4x8xf32> to vector<4x8xf32>
    %cst_72 = arith.constant dense<0.000000e+00> : vector<4x256xf32>
    %101 = tpu.matmul %100, %98, %cst_72 {dimension_numbers = #tpu.dot_dimension_numbers<[1], [0], [0], [1], [0, 0, 1, 1], [], []>} : vector<4x8xf32>, vector<8x256xf32>, vector<4x256xf32> -> vector<4x256xf32>
    %102 = arith.addf %97, %101 : vector<4x256xf32>
    %c0_73 = arith.constant 0 : index
    %c111_74 = arith.constant 111 : index
    %103 = vector.load %arg13[%c0_73, %c111_74] : memref<24x512xf32, #tpu.memory_space<vmem>>, vector<8x256xf32>
    %c0_75 = arith.constant 0 : index
    %c0_76 = arith.constant 0 : index
    %c0_77 = arith.constant 0 : index
    %104 = vector.load %arg3[%c0_75, %c0_76, %c0_77] : memref<9x4x8xf32, #tpu.memory_space<vmem>>, vector<1x4x8xf32>
    %105 = vector.shape_cast %104 : vector<1x4x8xf32> to vector<4x8xf32>
    %cst_78 = arith.constant dense<0.000000e+00> : vector<4x256xf32>
    %106 = tpu.matmul %105, %103, %cst_78 {dimension_numbers = #tpu.dot_dimension_numbers<[1], [0], [0], [1], [0, 0, 1, 1], [], []>} : vector<4x8xf32>, vector<8x256xf32>, vector<4x256xf32> -> vector<4x256xf32>
    %c0_79 = arith.constant 0 : index
    %c127_80 = arith.constant 127 : index
    %107 = vector.load %arg13[%c0_79, %c127_80] : memref<24x512xf32, #tpu.memory_space<vmem>>, vector<8x256xf32>
    %c3_81 = arith.constant 3 : index
    %c0_82 = arith.constant 0 : index
    %c0_83 = arith.constant 0 : index
    %108 = vector.load %arg3[%c3_81, %c0_82, %c0_83] : memref<9x4x8xf32, #tpu.memory_space<vmem>>, vector<1x4x8xf32>
    %109 = vector.shape_cast %108 : vector<1x4x8xf32> to vector<4x8xf32>
    %cst_84 = arith.constant dense<0.000000e+00> : vector<4x256xf32>
    %110 = tpu.matmul %109, %107, %cst_84 {dimension_numbers = #tpu.dot_dimension_numbers<[1], [0], [0], [1], [0, 0, 1, 1], [], []>} : vector<4x8xf32>, vector<8x256xf32>, vector<4x256xf32> -> vector<4x256xf32>
    %111 = arith.addf %106, %110 : vector<4x256xf32>
    %c0_85 = arith.constant 0 : index
    %c143_86 = arith.constant 143 : index
    %112 = vector.load %arg13[%c0_85, %c143_86] : memref<24x512xf32, #tpu.memory_space<vmem>>, vector<8x256xf32>
    %c6_87 = arith.constant 6 : index
    %c0_88 = arith.constant 0 : index
    %c0_89 = arith.constant 0 : index
    %113 = vector.load %arg3[%c6_87, %c0_88, %c0_89] : memref<9x4x8xf32, #tpu.memory_space<vmem>>, vector<1x4x8xf32>
    %114 = vector.shape_cast %113 : vector<1x4x8xf32> to vector<4x8xf32>
    %cst_90 = arith.constant dense<0.000000e+00> : vector<4x256xf32>
    %115 = tpu.matmul %114, %112, %cst_90 {dimension_numbers = #tpu.dot_dimension_numbers<[1], [0], [0], [1], [0, 0, 1, 1], [], []>} : vector<4x8xf32>, vector<8x256xf32>, vector<4x256xf32> -> vector<4x256xf32>
    %116 = arith.addf %111, %115 : vector<4x256xf32>
    %117 = vector.broadcast %27 : vector<1x256xf32> to vector<4x256xf32>
    %118 = arith.mulf %117, %116 : vector<4x256xf32>
    %119 = arith.addf %102, %118 : vector<4x256xf32>
    %c0_91 = arith.constant 0 : index
    %c113_92 = arith.constant 113 : index
    %120 = vector.load %arg13[%c0_91, %c113_92] : memref<24x512xf32, #tpu.memory_space<vmem>>, vector<8x256xf32>
    %c2_93 = arith.constant 2 : index
    %c0_94 = arith.constant 0 : index
    %c0_95 = arith.constant 0 : index
    %121 = vector.load %arg3[%c2_93, %c0_94, %c0_95] : memref<9x4x8xf32, #tpu.memory_space<vmem>>, vector<1x4x8xf32>
    %122 = vector.shape_cast %121 : vector<1x4x8xf32> to vector<4x8xf32>
    %cst_96 = arith.constant dense<0.000000e+00> : vector<4x256xf32>
    %123 = tpu.matmul %122, %120, %cst_96 {dimension_numbers = #tpu.dot_dimension_numbers<[1], [0], [0], [1], [0, 0, 1, 1], [], []>} : vector<4x8xf32>, vector<8x256xf32>, vector<4x256xf32> -> vector<4x256xf32>
    %c0_97 = arith.constant 0 : index
    %c129_98 = arith.constant 129 : index
    %124 = vector.load %arg13[%c0_97, %c129_98] : memref<24x512xf32, #tpu.memory_space<vmem>>, vector<8x256xf32>
    %c5_99 = arith.constant 5 : index
    %c0_100 = arith.constant 0 : index
    %c0_101 = arith.constant 0 : index
    %125 = vector.load %arg3[%c5_99, %c0_100, %c0_101] : memref<9x4x8xf32, #tpu.memory_space<vmem>>, vector<1x4x8xf32>
    %126 = vector.shape_cast %125 : vector<1x4x8xf32> to vector<4x8xf32>
    %cst_102 = arith.constant dense<0.000000e+00> : vector<4x256xf32>
    %127 = tpu.matmul %126, %124, %cst_102 {dimension_numbers = #tpu.dot_dimension_numbers<[1], [0], [0], [1], [0, 0, 1, 1], [], []>} : vector<4x8xf32>, vector<8x256xf32>, vector<4x256xf32> -> vector<4x256xf32>
    %128 = arith.addf %123, %127 : vector<4x256xf32>
    %c0_103 = arith.constant 0 : index
    %c145_104 = arith.constant 145 : index
    %129 = vector.load %arg13[%c0_103, %c145_104] : memref<24x512xf32, #tpu.memory_space<vmem>>, vector<8x256xf32>
    %c8_105 = arith.constant 8 : index
    %c0_106 = arith.constant 0 : index
    %c0_107 = arith.constant 0 : index
    %130 = vector.load %arg3[%c8_105, %c0_106, %c0_107] : memref<9x4x8xf32, #tpu.memory_space<vmem>>, vector<1x4x8xf32>
    %131 = vector.shape_cast %130 : vector<1x4x8xf32> to vector<4x8xf32>
    %cst_108 = arith.constant dense<0.000000e+00> : vector<4x256xf32>
    %132 = tpu.matmul %131, %129, %cst_108 {dimension_numbers = #tpu.dot_dimension_numbers<[1], [0], [0], [1], [0, 0, 1, 1], [], []>} : vector<4x8xf32>, vector<8x256xf32>, vector<4x256xf32> -> vector<4x256xf32>
    %133 = arith.addf %128, %132 : vector<4x256xf32>
    %134 = vector.broadcast %31 : vector<1x256xf32> to vector<4x256xf32>
    %135 = arith.mulf %134, %133 : vector<4x256xf32>
    %136 = arith.addf %119, %135 : vector<4x256xf32>
    %c0_109 = arith.constant 0 : index
    %c0_110 = arith.constant 0 : index
    %137 = vector.load %arg8[%c0_109, %c0_110] : memref<4x1xf32, #tpu.memory_space<vmem>>, vector<4x1xf32>
    %138 = vector.broadcast %137 : vector<4x1xf32> to vector<4x256xf32>
    %139 = arith.addf %136, %138 : vector<4x256xf32>
    %cst_111 = arith.constant 0.000000e+00 : f32
    %140 = vector.broadcast %cst_111 : f32 to vector<4x256xf32>
    %141 = arith.cmpf oge, %139, %140 : vector<4x256xf32>
    %cst_112 = arith.constant 0.00999999977 : f32
    %142 = vector.broadcast %cst_112 : f32 to vector<4x256xf32>
    %143 = arith.mulf %142, %139 : vector<4x256xf32>
    %144 = arith.select %141, %139, %143 : vector<4x256xi1>, vector<4x256xf32>
    %c8_113 = arith.constant 8 : index
    %c128_114 = arith.constant 128 : index
    %145 = vector.load %arg13[%c8_113, %c128_114] : memref<24x512xf32, #tpu.memory_space<vmem>>, vector<4x256xf32>
    tpu.vector_store %arg13[%c8_113, %c128_114], %144 {strides = array<i32>} : memref<24x512xf32, #tpu.memory_space<vmem>>, vector<4x256xf32>,
    %c0_115 = arith.constant 0 : index
    %c112_116 = arith.constant 112 : index
    %146 = vector.load %arg13[%c0_115, %c112_116] : memref<24x512xf32, #tpu.memory_space<vmem>>, vector<12x256xf32>
    %c1_117 = arith.constant 1 : index
    %c0_118 = arith.constant 0 : index
    %c0_119 = arith.constant 0 : index
    %147 = vector.load %arg4[%c1_117, %c0_118, %c0_119] : memref<9x4x12xf32, #tpu.memory_space<vmem>>, vector<1x4x12xf32>
    %148 = vector.shape_cast %147 : vector<1x4x12xf32> to vector<4x12xf32>
    %cst_120 = arith.constant dense<0.000000e+00> : vector<4x256xf32>
    %149 = tpu.matmul %148, %146, %cst_120 {dimension_numbers = #tpu.dot_dimension_numbers<[1], [0], [0], [1], [0, 0, 1, 1], [], []>} : vector<4x12xf32>, vector<12x256xf32>, vector<4x256xf32> -> vector<4x256xf32>
    %c0_121 = arith.constant 0 : index
    %c128_122 = arith.constant 128 : index
    %150 = vector.load %arg13[%c0_121, %c128_122] : memref<24x512xf32, #tpu.memory_space<vmem>>, vector<12x256xf32>
    %c4_123 = arith.constant 4 : index
    %c0_124 = arith.constant 0 : index
    %c0_125 = arith.constant 0 : index
    %151 = vector.load %arg4[%c4_123, %c0_124, %c0_125] : memref<9x4x12xf32, #tpu.memory_space<vmem>>, vector<1x4x12xf32>
    %152 = vector.shape_cast %151 : vector<1x4x12xf32> to vector<4x12xf32>
    %cst_126 = arith.constant dense<0.000000e+00> : vector<4x256xf32>
    %153 = tpu.matmul %152, %150, %cst_126 {dimension_numbers = #tpu.dot_dimension_numbers<[1], [0], [0], [1], [0, 0, 1, 1], [], []>} : vector<4x12xf32>, vector<12x256xf32>, vector<4x256xf32> -> vector<4x256xf32>
    %154 = arith.addf %149, %153 : vector<4x256xf32>
    %c0_127 = arith.constant 0 : index
    %c144_128 = arith.constant 144 : index
    %155 = vector.load %arg13[%c0_127, %c144_128] : memref<24x512xf32, #tpu.memory_space<vmem>>, vector<12x256xf32>
    %c7_129 = arith.constant 7 : index
    %c0_130 = arith.constant 0 : index
    %c0_131 = arith.constant 0 : index
    %156 = vector.load %arg4[%c7_129, %c0_130, %c0_131] : memref<9x4x12xf32, #tpu.memory_space<vmem>>, vector<1x4x12xf32>
    %157 = vector.shape_cast %156 : vector<1x4x12xf32> to vector<4x12xf32>
    %cst_132 = arith.constant dense<0.000000e+00> : vector<4x256xf32>
    %158 = tpu.matmul %157, %155, %cst_132 {dimension_numbers = #tpu.dot_dimension_numbers<[1], [0], [0], [1], [0, 0, 1, 1], [], []>} : vector<4x12xf32>, vector<12x256xf32>, vector<4x256xf32> -> vector<4x256xf32>
    %159 = arith.addf %154, %158 : vector<4x256xf32>
    %c0_133 = arith.constant 0 : index
    %c111_134 = arith.constant 111 : index
    %160 = vector.load %arg13[%c0_133, %c111_134] : memref<24x512xf32, #tpu.memory_space<vmem>>, vector<12x256xf32>
    %c0_135 = arith.constant 0 : index
    %c0_136 = arith.constant 0 : index
    %c0_137 = arith.constant 0 : index
    %161 = vector.load %arg4[%c0_135, %c0_136, %c0_137] : memref<9x4x12xf32, #tpu.memory_space<vmem>>, vector<1x4x12xf32>
    %162 = vector.shape_cast %161 : vector<1x4x12xf32> to vector<4x12xf32>
    %cst_138 = arith.constant dense<0.000000e+00> : vector<4x256xf32>
    %163 = tpu.matmul %162, %160, %cst_138 {dimension_numbers = #tpu.dot_dimension_numbers<[1], [0], [0], [1], [0, 0, 1, 1], [], []>} : vector<4x12xf32>, vector<12x256xf32>, vector<4x256xf32> -> vector<4x256xf32>
    %c0_139 = arith.constant 0 : index
    %c127_140 = arith.constant 127 : index
    %164 = vector.load %arg13[%c0_139, %c127_140] : memref<24x512xf32, #tpu.memory_space<vmem>>, vector<12x256xf32>
    %c3_141 = arith.constant 3 : index
    %c0_142 = arith.constant 0 : index
    %c0_143 = arith.constant 0 : index
    %165 = vector.load %arg4[%c3_141, %c0_142, %c0_143] : memref<9x4x12xf32, #tpu.memory_space<vmem>>, vector<1x4x12xf32>
    %166 = vector.shape_cast %165 : vector<1x4x12xf32> to vector<4x12xf32>
    %cst_144 = arith.constant dense<0.000000e+00> : vector<4x256xf32>
    %167 = tpu.matmul %166, %164, %cst_144 {dimension_numbers = #tpu.dot_dimension_numbers<[1], [0], [0], [1], [0, 0, 1, 1], [], []>} : vector<4x12xf32>, vector<12x256xf32>, vector<4x256xf32> -> vector<4x256xf32>
    %168 = arith.addf %163, %167 : vector<4x256xf32>
    %c0_145 = arith.constant 0 : index
    %c143_146 = arith.constant 143 : index
    %169 = vector.load %arg13[%c0_145, %c143_146] : memref<24x512xf32, #tpu.memory_space<vmem>>, vector<12x256xf32>
    %c6_147 = arith.constant 6 : index
    %c0_148 = arith.constant 0 : index
    %c0_149 = arith.constant 0 : index
    %170 = vector.load %arg4[%c6_147, %c0_148, %c0_149] : memref<9x4x12xf32, #tpu.memory_space<vmem>>, vector<1x4x12xf32>
    %171 = vector.shape_cast %170 : vector<1x4x12xf32> to vector<4x12xf32>
    %cst_150 = arith.constant dense<0.000000e+00> : vector<4x256xf32>
    %172 = tpu.matmul %171, %169, %cst_150 {dimension_numbers = #tpu.dot_dimension_numbers<[1], [0], [0], [1], [0, 0, 1, 1], [], []>} : vector<4x12xf32>, vector<12x256xf32>, vector<4x256xf32> -> vector<4x256xf32>
    %173 = arith.addf %168, %172 : vector<4x256xf32>
    %174 = vector.broadcast %27 : vector<1x256xf32> to vector<4x256xf32>
    %175 = arith.mulf %174, %173 : vector<4x256xf32>
    %176 = arith.addf %159, %175 : vector<4x256xf32>
    %c0_151 = arith.constant 0 : index
    %c113_152 = arith.constant 113 : index
    %177 = vector.load %arg13[%c0_151, %c113_152] : memref<24x512xf32, #tpu.memory_space<vmem>>, vector<12x256xf32>
    %c2_153 = arith.constant 2 : index
    %c0_154 = arith.constant 0 : index
    %c0_155 = arith.constant 0 : index
    %178 = vector.load %arg4[%c2_153, %c0_154, %c0_155] : memref<9x4x12xf32, #tpu.memory_space<vmem>>, vector<1x4x12xf32>
    %179 = vector.shape_cast %178 : vector<1x4x12xf32> to vector<4x12xf32>
    %cst_156 = arith.constant dense<0.000000e+00> : vector<4x256xf32>
    %180 = tpu.matmul %179, %177, %cst_156 {dimension_numbers = #tpu.dot_dimension_numbers<[1], [0], [0], [1], [0, 0, 1, 1], [], []>} : vector<4x12xf32>, vector<12x256xf32>, vector<4x256xf32> -> vector<4x256xf32>
    %c0_157 = arith.constant 0 : index
    %c129_158 = arith.constant 129 : index
    %181 = vector.load %arg13[%c0_157, %c129_158] : memref<24x512xf32, #tpu.memory_space<vmem>>, vector<12x256xf32>
    %c5_159 = arith.constant 5 : index
    %c0_160 = arith.constant 0 : index
    %c0_161 = arith.constant 0 : index
    %182 = vector.load %arg4[%c5_159, %c0_160, %c0_161] : memref<9x4x12xf32, #tpu.memory_space<vmem>>, vector<1x4x12xf32>
    %183 = vector.shape_cast %182 : vector<1x4x12xf32> to vector<4x12xf32>
    %cst_162 = arith.constant dense<0.000000e+00> : vector<4x256xf32>
    %184 = tpu.matmul %183, %181, %cst_162 {dimension_numbers = #tpu.dot_dimension_numbers<[1], [0], [0], [1], [0, 0, 1, 1], [], []>} : vector<4x12xf32>, vector<12x256xf32>, vector<4x256xf32> -> vector<4x256xf32>
    %185 = arith.addf %180, %184 : vector<4x256xf32>
    %c0_163 = arith.constant 0 : index
    %c145_164 = arith.constant 145 : index
    %186 = vector.load %arg13[%c0_163, %c145_164] : memref<24x512xf32, #tpu.memory_space<vmem>>, vector<12x256xf32>
    %c8_165 = arith.constant 8 : index
    %c0_166 = arith.constant 0 : index
    %c0_167 = arith.constant 0 : index
    %187 = vector.load %arg4[%c8_165, %c0_166, %c0_167] : memref<9x4x12xf32, #tpu.memory_space<vmem>>, vector<1x4x12xf32>
    %188 = vector.shape_cast %187 : vector<1x4x12xf32> to vector<4x12xf32>
    %cst_168 = arith.constant dense<0.000000e+00> : vector<4x256xf32>
    %189 = tpu.matmul %188, %186, %cst_168 {dimension_numbers = #tpu.dot_dimension_numbers<[1], [0], [0], [1], [0, 0, 1, 1], [], []>} : vector<4x12xf32>, vector<12x256xf32>, vector<4x256xf32> -> vector<4x256xf32>
    %190 = arith.addf %185, %189 : vector<4x256xf32>
    %191 = vector.broadcast %31 : vector<1x256xf32> to vector<4x256xf32>
    %192 = arith.mulf %191, %190 : vector<4x256xf32>
    %193 = arith.addf %176, %192 : vector<4x256xf32>
    %c0_169 = arith.constant 0 : index
    %c0_170 = arith.constant 0 : index
    %194 = vector.load %arg9[%c0_169, %c0_170] : memref<4x1xf32, #tpu.memory_space<vmem>>, vector<4x1xf32>
    %195 = vector.broadcast %194 : vector<4x1xf32> to vector<4x256xf32>
    %196 = arith.addf %193, %195 : vector<4x256xf32>
    %cst_171 = arith.constant 0.000000e+00 : f32
    %197 = vector.broadcast %cst_171 : f32 to vector<4x256xf32>
    %198 = arith.cmpf oge, %196, %197 : vector<4x256xf32>
    %cst_172 = arith.constant 0.00999999977 : f32
    %199 = vector.broadcast %cst_172 : f32 to vector<4x256xf32>
    %200 = arith.mulf %199, %196 : vector<4x256xf32>
    %201 = arith.select %198, %196, %200 : vector<4x256xi1>, vector<4x256xf32>
    %c12 = arith.constant 12 : index
    %c128_173 = arith.constant 128 : index
    %202 = vector.load %arg13[%c12, %c128_173] : memref<24x512xf32, #tpu.memory_space<vmem>>, vector<4x256xf32>
    tpu.vector_store %arg13[%c12, %c128_173], %201 {strides = array<i32>} : memref<24x512xf32, #tpu.memory_space<vmem>>, vector<4x256xf32>,
    %c0_174 = arith.constant 0 : index
    %c112_175 = arith.constant 112 : index
    %203 = vector.load %arg13[%c0_174, %c112_175] : memref<24x512xf32, #tpu.memory_space<vmem>>, vector<16x256xf32>
    %c1_176 = arith.constant 1 : index
    %c0_177 = arith.constant 0 : index
    %c0_178 = arith.constant 0 : index
    %204 = vector.load %arg5[%c1_176, %c0_177, %c0_178] : memref<9x4x16xf32, #tpu.memory_space<vmem>>, vector<1x4x16xf32>
    %205 = vector.shape_cast %204 : vector<1x4x16xf32> to vector<4x16xf32>
    %cst_179 = arith.constant dense<0.000000e+00> : vector<4x256xf32>
    %206 = tpu.matmul %205, %203, %cst_179 {dimension_numbers = #tpu.dot_dimension_numbers<[1], [0], [0], [1], [0, 0, 1, 1], [], []>} : vector<4x16xf32>, vector<16x256xf32>, vector<4x256xf32> -> vector<4x256xf32>
    %c0_180 = arith.constant 0 : index
    %c128_181 = arith.constant 128 : index
    %207 = vector.load %arg13[%c0_180, %c128_181] : memref<24x512xf32, #tpu.memory_space<vmem>>, vector<16x256xf32>
    %c4_182 = arith.constant 4 : index
    %c0_183 = arith.constant 0 : index
    %c0_184 = arith.constant 0 : index
    %208 = vector.load %arg5[%c4_182, %c0_183, %c0_184] : memref<9x4x16xf32, #tpu.memory_space<vmem>>, vector<1x4x16xf32>
    %209 = vector.shape_cast %208 : vector<1x4x16xf32> to vector<4x16xf32>
    %cst_185 = arith.constant dense<0.000000e+00> : vector<4x256xf32>
    %210 = tpu.matmul %209, %207, %cst_185 {dimension_numbers = #tpu.dot_dimension_numbers<[1], [0], [0], [1], [0, 0, 1, 1], [], []>} : vector<4x16xf32>, vector<16x256xf32>, vector<4x256xf32> -> vector<4x256xf32>
    %211 = arith.addf %206, %210 : vector<4x256xf32>
    %c0_186 = arith.constant 0 : index
    %c144_187 = arith.constant 144 : index
    %212 = vector.load %arg13[%c0_186, %c144_187] : memref<24x512xf32, #tpu.memory_space<vmem>>, vector<16x256xf32>
    %c7_188 = arith.constant 7 : index
    %c0_189 = arith.constant 0 : index
    %c0_190 = arith.constant 0 : index
    %213 = vector.load %arg5[%c7_188, %c0_189, %c0_190] : memref<9x4x16xf32, #tpu.memory_space<vmem>>, vector<1x4x16xf32>
    %214 = vector.shape_cast %213 : vector<1x4x16xf32> to vector<4x16xf32>
    %cst_191 = arith.constant dense<0.000000e+00> : vector<4x256xf32>
    %215 = tpu.matmul %214, %212, %cst_191 {dimension_numbers = #tpu.dot_dimension_numbers<[1], [0], [0], [1], [0, 0, 1, 1], [], []>} : vector<4x16xf32>, vector<16x256xf32>, vector<4x256xf32> -> vector<4x256xf32>
    %216 = arith.addf %211, %215 : vector<4x256xf32>
    %c0_192 = arith.constant 0 : index
    %c111_193 = arith.constant 111 : index
    %217 = vector.load %arg13[%c0_192, %c111_193] : memref<24x512xf32, #tpu.memory_space<vmem>>, vector<16x256xf32>
    %c0_194 = arith.constant 0 : index
    %c0_195 = arith.constant 0 : index
    %c0_196 = arith.constant 0 : index
    %218 = vector.load %arg5[%c0_194, %c0_195, %c0_196] : memref<9x4x16xf32, #tpu.memory_space<vmem>>, vector<1x4x16xf32>
    %219 = vector.shape_cast %218 : vector<1x4x16xf32> to vector<4x16xf32>
    %cst_197 = arith.constant dense<0.000000e+00> : vector<4x256xf32>
    %220 = tpu.matmul %219, %217, %cst_197 {dimension_numbers = #tpu.dot_dimension_numbers<[1], [0], [0], [1], [0, 0, 1, 1], [], []>} : vector<4x16xf32>, vector<16x256xf32>, vector<4x256xf32> -> vector<4x256xf32>
    %c0_198 = arith.constant 0 : index
    %c127_199 = arith.constant 127 : index
    %221 = vector.load %arg13[%c0_198, %c127_199] : memref<24x512xf32, #tpu.memory_space<vmem>>, vector<16x256xf32>
    %c3_200 = arith.constant 3 : index
    %c0_201 = arith.constant 0 : index
    %c0_202 = arith.constant 0 : index
    %222 = vector.load %arg5[%c3_200, %c0_201, %c0_202] : memref<9x4x16xf32, #tpu.memory_space<vmem>>, vector<1x4x16xf32>
    %223 = vector.shape_cast %222 : vector<1x4x16xf32> to vector<4x16xf32>
    %cst_203 = arith.constant dense<0.000000e+00> : vector<4x256xf32>
    %224 = tpu.matmul %223, %221, %cst_203 {dimension_numbers = #tpu.dot_dimension_numbers<[1], [0], [0], [1], [0, 0, 1, 1], [], []>} : vector<4x16xf32>, vector<16x256xf32>, vector<4x256xf32> -> vector<4x256xf32>
    %225 = arith.addf %220, %224 : vector<4x256xf32>
    %c0_204 = arith.constant 0 : index
    %c143_205 = arith.constant 143 : index
    %226 = vector.load %arg13[%c0_204, %c143_205] : memref<24x512xf32, #tpu.memory_space<vmem>>, vector<16x256xf32>
    %c6_206 = arith.constant 6 : index
    %c0_207 = arith.constant 0 : index
    %c0_208 = arith.constant 0 : index
    %227 = vector.load %arg5[%c6_206, %c0_207, %c0_208] : memref<9x4x16xf32, #tpu.memory_space<vmem>>, vector<1x4x16xf32>
    %228 = vector.shape_cast %227 : vector<1x4x16xf32> to vector<4x16xf32>
    %cst_209 = arith.constant dense<0.000000e+00> : vector<4x256xf32>
    %229 = tpu.matmul %228, %226, %cst_209 {dimension_numbers = #tpu.dot_dimension_numbers<[1], [0], [0], [1], [0, 0, 1, 1], [], []>} : vector<4x16xf32>, vector<16x256xf32>, vector<4x256xf32> -> vector<4x256xf32>
    %230 = arith.addf %225, %229 : vector<4x256xf32>
    %231 = vector.broadcast %27 : vector<1x256xf32> to vector<4x256xf32>
    %232 = arith.mulf %231, %230 : vector<4x256xf32>
    %233 = arith.addf %216, %232 : vector<4x256xf32>
    %c0_210 = arith.constant 0 : index
    %c113_211 = arith.constant 113 : index
    %234 = vector.load %arg13[%c0_210, %c113_211] : memref<24x512xf32, #tpu.memory_space<vmem>>, vector<16x256xf32>
    %c2_212 = arith.constant 2 : index
    %c0_213 = arith.constant 0 : index
    %c0_214 = arith.constant 0 : index
    %235 = vector.load %arg5[%c2_212, %c0_213, %c0_214] : memref<9x4x16xf32, #tpu.memory_space<vmem>>, vector<1x4x16xf32>
    %236 = vector.shape_cast %235 : vector<1x4x16xf32> to vector<4x16xf32>
    %cst_215 = arith.constant dense<0.000000e+00> : vector<4x256xf32>
    %237 = tpu.matmul %236, %234, %cst_215 {dimension_numbers = #tpu.dot_dimension_numbers<[1], [0], [0], [1], [0, 0, 1, 1], [], []>} : vector<4x16xf32>, vector<16x256xf32>, vector<4x256xf32> -> vector<4x256xf32>
    %c0_216 = arith.constant 0 : index
    %c129_217 = arith.constant 129 : index
    %238 = vector.load %arg13[%c0_216, %c129_217] : memref<24x512xf32, #tpu.memory_space<vmem>>, vector<16x256xf32>
    %c5_218 = arith.constant 5 : index
    %c0_219 = arith.constant 0 : index
    %c0_220 = arith.constant 0 : index
    %239 = vector.load %arg5[%c5_218, %c0_219, %c0_220] : memref<9x4x16xf32, #tpu.memory_space<vmem>>, vector<1x4x16xf32>
    %240 = vector.shape_cast %239 : vector<1x4x16xf32> to vector<4x16xf32>
    %cst_221 = arith.constant dense<0.000000e+00> : vector<4x256xf32>
    %241 = tpu.matmul %240, %238, %cst_221 {dimension_numbers = #tpu.dot_dimension_numbers<[1], [0], [0], [1], [0, 0, 1, 1], [], []>} : vector<4x16xf32>, vector<16x256xf32>, vector<4x256xf32> -> vector<4x256xf32>
    %242 = arith.addf %237, %241 : vector<4x256xf32>
    %c0_222 = arith.constant 0 : index
    %c145_223 = arith.constant 145 : index
    %243 = vector.load %arg13[%c0_222, %c145_223] : memref<24x512xf32, #tpu.memory_space<vmem>>, vector<16x256xf32>
    %c8_224 = arith.constant 8 : index
    %c0_225 = arith.constant 0 : index
    %c0_226 = arith.constant 0 : index
    %244 = vector.load %arg5[%c8_224, %c0_225, %c0_226] : memref<9x4x16xf32, #tpu.memory_space<vmem>>, vector<1x4x16xf32>
    %245 = vector.shape_cast %244 : vector<1x4x16xf32> to vector<4x16xf32>
    %cst_227 = arith.constant dense<0.000000e+00> : vector<4x256xf32>
    %246 = tpu.matmul %245, %243, %cst_227 {dimension_numbers = #tpu.dot_dimension_numbers<[1], [0], [0], [1], [0, 0, 1, 1], [], []>} : vector<4x16xf32>, vector<16x256xf32>, vector<4x256xf32> -> vector<4x256xf32>
    %247 = arith.addf %242, %246 : vector<4x256xf32>
    %248 = vector.broadcast %31 : vector<1x256xf32> to vector<4x256xf32>
    %249 = arith.mulf %248, %247 : vector<4x256xf32>
    %250 = arith.addf %233, %249 : vector<4x256xf32>
    %c0_228 = arith.constant 0 : index
    %c0_229 = arith.constant 0 : index
    %251 = vector.load %arg10[%c0_228, %c0_229] : memref<4x1xf32, #tpu.memory_space<vmem>>, vector<4x1xf32>
    %252 = vector.broadcast %251 : vector<4x1xf32> to vector<4x256xf32>
    %253 = arith.addf %250, %252 : vector<4x256xf32>
    %cst_230 = arith.constant 0.000000e+00 : f32
    %254 = vector.broadcast %cst_230 : f32 to vector<4x256xf32>
    %255 = arith.cmpf oge, %253, %254 : vector<4x256xf32>
    %cst_231 = arith.constant 0.00999999977 : f32
    %256 = vector.broadcast %cst_231 : f32 to vector<4x256xf32>
    %257 = arith.mulf %256, %253 : vector<4x256xf32>
    %258 = arith.select %255, %253, %257 : vector<4x256xi1>, vector<4x256xf32>
    %c16 = arith.constant 16 : index
    %c128_232 = arith.constant 128 : index
    %259 = vector.load %arg13[%c16, %c128_232] : memref<24x512xf32, #tpu.memory_space<vmem>>, vector<4x256xf32>
    tpu.vector_store %arg13[%c16, %c128_232], %258 {strides = array<i32>} : memref<24x512xf32, #tpu.memory_space<vmem>>, vector<4x256xf32>,
    %c0_233 = arith.constant 0 : index
    %c112_234 = arith.constant 112 : index
    %260 = vector.load %arg13[%c0_233, %c112_234] : memref<24x512xf32, #tpu.memory_space<vmem>>, vector<20x256xf32>
    %c1_235 = arith.constant 1 : index
    %c0_236 = arith.constant 0 : index
    %c0_237 = arith.constant 0 : index
    %261 = vector.load %arg6[%c1_235, %c0_236, %c0_237] : memref<9x4x20xf32, #tpu.memory_space<vmem>>, vector<1x4x20xf32>
    %262 = vector.shape_cast %261 : vector<1x4x20xf32> to vector<4x20xf32>
    %cst_238 = arith.constant dense<0.000000e+00> : vector<4x256xf32>
    %263 = tpu.matmul %262, %260, %cst_238 {dimension_numbers = #tpu.dot_dimension_numbers<[1], [0], [0], [1], [0, 0, 1, 1], [], []>} : vector<4x20xf32>, vector<20x256xf32>, vector<4x256xf32> -> vector<4x256xf32>
    %c0_239 = arith.constant 0 : index
    %c128_240 = arith.constant 128 : index
    %264 = vector.load %arg13[%c0_239, %c128_240] : memref<24x512xf32, #tpu.memory_space<vmem>>, vector<20x256xf32>
    %c4_241 = arith.constant 4 : index
    %c0_242 = arith.constant 0 : index
    %c0_243 = arith.constant 0 : index
    %265 = vector.load %arg6[%c4_241, %c0_242, %c0_243] : memref<9x4x20xf32, #tpu.memory_space<vmem>>, vector<1x4x20xf32>
    %266 = vector.shape_cast %265 : vector<1x4x20xf32> to vector<4x20xf32>
    %cst_244 = arith.constant dense<0.000000e+00> : vector<4x256xf32>
    %267 = tpu.matmul %266, %264, %cst_244 {dimension_numbers = #tpu.dot_dimension_numbers<[1], [0], [0], [1], [0, 0, 1, 1], [], []>} : vector<4x20xf32>, vector<20x256xf32>, vector<4x256xf32> -> vector<4x256xf32>
    %268 = arith.addf %263, %267 : vector<4x256xf32>
    %c0_245 = arith.constant 0 : index
    %c144_246 = arith.constant 144 : index
    %269 = vector.load %arg13[%c0_245, %c144_246] : memref<24x512xf32, #tpu.memory_space<vmem>>, vector<20x256xf32>
    %c7_247 = arith.constant 7 : index
    %c0_248 = arith.constant 0 : index
    %c0_249 = arith.constant 0 : index
    %270 = vector.load %arg6[%c7_247, %c0_248, %c0_249] : memref<9x4x20xf32, #tpu.memory_space<vmem>>, vector<1x4x20xf32>
    %271 = vector.shape_cast %270 : vector<1x4x20xf32> to vector<4x20xf32>
    %cst_250 = arith.constant dense<0.000000e+00> : vector<4x256xf32>
    %272 = tpu.matmul %271, %269, %cst_250 {dimension_numbers = #tpu.dot_dimension_numbers<[1], [0], [0], [1], [0, 0, 1, 1], [], []>} : vector<4x20xf32>, vector<20x256xf32>, vector<4x256xf32> -> vector<4x256xf32>
    %273 = arith.addf %268, %272 : vector<4x256xf32>
    %c0_251 = arith.constant 0 : index
    %c111_252 = arith.constant 111 : index
    %274 = vector.load %arg13[%c0_251, %c111_252] : memref<24x512xf32, #tpu.memory_space<vmem>>, vector<20x256xf32>
    %c0_253 = arith.constant 0 : index
    %c0_254 = arith.constant 0 : index
    %c0_255 = arith.constant 0 : index
    %275 = vector.load %arg6[%c0_253, %c0_254, %c0_255] : memref<9x4x20xf32, #tpu.memory_space<vmem>>, vector<1x4x20xf32>
    %276 = vector.shape_cast %275 : vector<1x4x20xf32> to vector<4x20xf32>
    %cst_256 = arith.constant dense<0.000000e+00> : vector<4x256xf32>
    %277 = tpu.matmul %276, %274, %cst_256 {dimension_numbers = #tpu.dot_dimension_numbers<[1], [0], [0], [1], [0, 0, 1, 1], [], []>} : vector<4x20xf32>, vector<20x256xf32>, vector<4x256xf32> -> vector<4x256xf32>
    %c0_257 = arith.constant 0 : index
    %c127_258 = arith.constant 127 : index
    %278 = vector.load %arg13[%c0_257, %c127_258] : memref<24x512xf32, #tpu.memory_space<vmem>>, vector<20x256xf32>
    %c3_259 = arith.constant 3 : index
    %c0_260 = arith.constant 0 : index
    %c0_261 = arith.constant 0 : index
    %279 = vector.load %arg6[%c3_259, %c0_260, %c0_261] : memref<9x4x20xf32, #tpu.memory_space<vmem>>, vector<1x4x20xf32>
    %280 = vector.shape_cast %279 : vector<1x4x20xf32> to vector<4x20xf32>
    %cst_262 = arith.constant dense<0.000000e+00> : vector<4x256xf32>
    %281 = tpu.matmul %280, %278, %cst_262 {dimension_numbers = #tpu.dot_dimension_numbers<[1], [0], [0], [1], [0, 0, 1, 1], [], []>} : vector<4x20xf32>, vector<20x256xf32>, vector<4x256xf32> -> vector<4x256xf32>
    %282 = arith.addf %277, %281 : vector<4x256xf32>
    %c0_263 = arith.constant 0 : index
    %c143_264 = arith.constant 143 : index
    %283 = vector.load %arg13[%c0_263, %c143_264] : memref<24x512xf32, #tpu.memory_space<vmem>>, vector<20x256xf32>
    %c6_265 = arith.constant 6 : index
    %c0_266 = arith.constant 0 : index
    %c0_267 = arith.constant 0 : index
    %284 = vector.load %arg6[%c6_265, %c0_266, %c0_267] : memref<9x4x20xf32, #tpu.memory_space<vmem>>, vector<1x4x20xf32>
    %285 = vector.shape_cast %284 : vector<1x4x20xf32> to vector<4x20xf32>
    %cst_268 = arith.constant dense<0.000000e+00> : vector<4x256xf32>
    %286 = tpu.matmul %285, %283, %cst_268 {dimension_numbers = #tpu.dot_dimension_numbers<[1], [0], [0], [1], [0, 0, 1, 1], [], []>} : vector<4x20xf32>, vector<20x256xf32>, vector<4x256xf32> -> vector<4x256xf32>
    %287 = arith.addf %282, %286 : vector<4x256xf32>
    %288 = vector.broadcast %27 : vector<1x256xf32> to vector<4x256xf32>
    %289 = arith.mulf %288, %287 : vector<4x256xf32>
    %290 = arith.addf %273, %289 : vector<4x256xf32>
    %c0_269 = arith.constant 0 : index
    %c113_270 = arith.constant 113 : index
    %291 = vector.load %arg13[%c0_269, %c113_270] : memref<24x512xf32, #tpu.memory_space<vmem>>, vector<20x256xf32>
    %c2_271 = arith.constant 2 : index
    %c0_272 = arith.constant 0 : index
    %c0_273 = arith.constant 0 : index
    %292 = vector.load %arg6[%c2_271, %c0_272, %c0_273] : memref<9x4x20xf32, #tpu.memory_space<vmem>>, vector<1x4x20xf32>
    %293 = vector.shape_cast %292 : vector<1x4x20xf32> to vector<4x20xf32>
    %cst_274 = arith.constant dense<0.000000e+00> : vector<4x256xf32>
    %294 = tpu.matmul %293, %291, %cst_274 {dimension_numbers = #tpu.dot_dimension_numbers<[1], [0], [0], [1], [0, 0, 1, 1], [], []>} : vector<4x20xf32>, vector<20x256xf32>, vector<4x256xf32> -> vector<4x256xf32>
    %c0_275 = arith.constant 0 : index
    %c129_276 = arith.constant 129 : index
    %295 = vector.load %arg13[%c0_275, %c129_276] : memref<24x512xf32, #tpu.memory_space<vmem>>, vector<20x256xf32>
    %c5_277 = arith.constant 5 : index
    %c0_278 = arith.constant 0 : index
    %c0_279 = arith.constant 0 : index
    %296 = vector.load %arg6[%c5_277, %c0_278, %c0_279] : memref<9x4x20xf32, #tpu.memory_space<vmem>>, vector<1x4x20xf32>
    %297 = vector.shape_cast %296 : vector<1x4x20xf32> to vector<4x20xf32>
    %cst_280 = arith.constant dense<0.000000e+00> : vector<4x256xf32>
    %298 = tpu.matmul %297, %295, %cst_280 {dimension_numbers = #tpu.dot_dimension_numbers<[1], [0], [0], [1], [0, 0, 1, 1], [], []>} : vector<4x20xf32>, vector<20x256xf32>, vector<4x256xf32> -> vector<4x256xf32>
    %299 = arith.addf %294, %298 : vector<4x256xf32>
    %c0_281 = arith.constant 0 : index
    %c145_282 = arith.constant 145 : index
    %300 = vector.load %arg13[%c0_281, %c145_282] : memref<24x512xf32, #tpu.memory_space<vmem>>, vector<20x256xf32>
    %c8_283 = arith.constant 8 : index
    %c0_284 = arith.constant 0 : index
    %c0_285 = arith.constant 0 : index
    %301 = vector.load %arg6[%c8_283, %c0_284, %c0_285] : memref<9x4x20xf32, #tpu.memory_space<vmem>>, vector<1x4x20xf32>
    %302 = vector.shape_cast %301 : vector<1x4x20xf32> to vector<4x20xf32>
    %cst_286 = arith.constant dense<0.000000e+00> : vector<4x256xf32>
    %303 = tpu.matmul %302, %300, %cst_286 {dimension_numbers = #tpu.dot_dimension_numbers<[1], [0], [0], [1], [0, 0, 1, 1], [], []>} : vector<4x20xf32>, vector<20x256xf32>, vector<4x256xf32> -> vector<4x256xf32>
    %304 = arith.addf %299, %303 : vector<4x256xf32>
    %305 = vector.broadcast %31 : vector<1x256xf32> to vector<4x256xf32>
    %306 = arith.mulf %305, %304 : vector<4x256xf32>
    %307 = arith.addf %290, %306 : vector<4x256xf32>
    %c0_287 = arith.constant 0 : index
    %c0_288 = arith.constant 0 : index
    %308 = vector.load %arg11[%c0_287, %c0_288] : memref<4x1xf32, #tpu.memory_space<vmem>>, vector<4x1xf32>
    %309 = vector.broadcast %308 : vector<4x1xf32> to vector<4x256xf32>
    %310 = arith.addf %307, %309 : vector<4x256xf32>
    %c0_289 = arith.constant 0 : index
    %c0_290 = arith.constant 0 : index
    %c0_291 = arith.constant 0 : index
    %311 = vector.load %arg12[%c0_289, %c0_290, %c0_291] : memref<1x4x256xf32, #tpu.memory_space<vmem>>, vector<1x4x256xf32>
    %312 = vector.shape_cast %311 : vector<1x4x256xf32> to vector<4x256xf32>
    %313 = vector.shape_cast %310 : vector<4x256xf32> to vector<1x4x256xf32>
    tpu.vector_store %arg12[%c0_289, %c0_290, %c0_291], %313 {strides = array<i32>} : memref<1x4x256xf32, #tpu.memory_space<vmem>>, vector<1x4x256xf32>,
    return
  }
  func.func @transform_0(%arg0: i32) -> (i32, i32, i32) {
    %c0_i32 = arith.constant 0 : i32
    %c0_i32_0 = arith.constant 0 : i32
    %c0_i32_1 = arith.constant 0 : i32
    return %arg0, %c0_i32, %c0_i32_0 : i32, i32, i32
  }
  func.func @transform_1(%arg0: i32) -> (i32, i32, i32) {
    %c0_i32 = arith.constant 0 : i32
    %c0_i32_0 = arith.constant 0 : i32
    %c0_i32_1 = arith.constant 0 : i32
    %c0_i32_2 = arith.constant 0 : i32
    return %c0_i32, %c0_i32_0, %c0_i32_1 : i32, i32, i32
  }
  func.func @transform_2(%arg0: i32) -> (i32, i32, i32) {
    %c0_i32 = arith.constant 0 : i32
    %c0_i32_0 = arith.constant 0 : i32
    %c0_i32_1 = arith.constant 0 : i32
    %c0_i32_2 = arith.constant 0 : i32
    return %c0_i32, %c0_i32_0, %c0_i32_1 : i32, i32, i32
  }
  func.func @transform_3(%arg0: i32) -> (i32, i32, i32) {
    %c0_i32 = arith.constant 0 : i32
    %c0_i32_0 = arith.constant 0 : i32
    %c0_i32_1 = arith.constant 0 : i32
    %c0_i32_2 = arith.constant 0 : i32
    return %c0_i32, %c0_i32_0, %c0_i32_1 : i32, i32, i32
  }
  func.func @transform_4(%arg0: i32) -> (i32, i32, i32) {
    %c0_i32 = arith.constant 0 : i32
    %c0_i32_0 = arith.constant 0 : i32
    %c0_i32_1 = arith.constant 0 : i32
    %c0_i32_2 = arith.constant 0 : i32
    return %c0_i32, %c0_i32_0, %c0_i32_1 : i32, i32, i32
  }
  func.func @transform_5(%arg0: i32) -> (i32, i32, i32) {
    %c0_i32 = arith.constant 0 : i32
    %c0_i32_0 = arith.constant 0 : i32
    %c0_i32_1 = arith.constant 0 : i32
    %c0_i32_2 = arith.constant 0 : i32
    return %c0_i32, %c0_i32_0, %c0_i32_1 : i32, i32, i32
  }
  func.func @transform_6(%arg0: i32) -> (i32, i32) {
    %c0_i32 = arith.constant 0 : i32
    %c0_i32_0 = arith.constant 0 : i32
    %c0_i32_1 = arith.constant 0 : i32
    return %c0_i32, %c0_i32_0 : i32, i32
  }
  func.func @transform_7(%arg0: i32) -> (i32, i32) {
    %c0_i32 = arith.constant 0 : i32
    %c0_i32_0 = arith.constant 0 : i32
    %c0_i32_1 = arith.constant 0 : i32
    return %c0_i32, %c0_i32_0 : i32, i32
  }
  func.func @transform_8(%arg0: i32) -> (i32, i32) {
    %c0_i32 = arith.constant 0 : i32
    %c0_i32_0 = arith.constant 0 : i32
    %c0_i32_1 = arith.constant 0 : i32
    return %c0_i32, %c0_i32_0 : i32, i32
  }
  func.func @transform_9(%arg0: i32) -> (i32, i32) {
    %c0_i32 = arith.constant 0 : i32
    %c0_i32_0 = arith.constant 0 : i32
    %c0_i32_1 = arith.constant 0 : i32
    return %c0_i32, %c0_i32_0 : i32, i32
  }
  func.func @transform_10(%arg0: i32) -> (i32, i32) {
    %c0_i32 = arith.constant 0 : i32
    %c0_i32_0 = arith.constant 0 : i32
    %c0_i32_1 = arith.constant 0 : i32
    return %c0_i32, %c0_i32_0 : i32, i32
  }
  func.func @transform_11(%arg0: i32) -> (i32, i32, i32) {
    %c0_i32 = arith.constant 0 : i32
    %c0_i32_0 = arith.constant 0 : i32
    %c0_i32_1 = arith.constant 0 : i32
    return %arg0, %c0_i32, %c0_i32_0 : i32, i32, i32
  }
}

</mosaic_0001>

<llo_original>
// kernel: tpu_custom_call.1
$region0: #{tpu_custom_call.1}
  #allocation0 [shape = 'u32[]', space=smem, size = 0x4, offset = 0x4, fixed_abs, tag = 'smem constant byte address 0x4 - core index']
  #allocation1 [shape = 'u32[72,128]{1,0:T(1,128)}', space=vmem, size = 0x9000, scoped, tag = 'internal scratch']
  #allocation2 [shape = 'f32[24,512]{1,0:T(8,128)}', space=vmem, size = 0xc000, scoped, tag = 'scratch operand']
  %s0 = inlined_call_operand.vmem [shape: f32[2,4,256], index: 0, kind: input, shape index: {}]
  %s1 = inlined_call_operand.vmem [shape: f32[9,4,4], index: 1, kind: input, shape index: {}]
  %s2 = inlined_call_operand.vmem [shape: f32[9,4,8], index: 2, kind: input, shape index: {}]
  %s3 = inlined_call_operand.vmem [shape: f32[9,4,12], index: 3, kind: input, shape index: {}]
  %s4 = inlined_call_operand.vmem [shape: f32[9,4,16], index: 4, kind: input, shape index: {}]
  %s5 = inlined_call_operand.hbm [shape: f32[9,4,20], index: 5, kind: input, shape index: {}]
  %s6 = inlined_call_operand.vmem [shape: f32[4,1], index: 6, kind: input, shape index: {}]
  %s7 = inlined_call_operand.vmem [shape: f32[4,1], index: 7, kind: input, shape index: {}]
  %s8 = inlined_call_operand.vmem [shape: f32[4,1], index: 8, kind: input, shape index: {}]
  %s9 = inlined_call_operand.vmem [shape: f32[4,1], index: 9, kind: input, shape index: {}]
  %s10 = inlined_call_operand.vmem [shape: f32[4,1], index: 10, kind: input, shape index: {}]
  %s11 = inlined_call_operand.hbm [shape: f32[2,4,256], index: 11, kind: output, shape index: {}]
  %s12 = sld [smem:[#allocation0]]
  $region81: #{tpu_custom_call.1} parent=0
    _
  %s14 = ssub.s32 1, %s12
  %s15 = scalar_select 0, %s14, %s12
  $region1: #{tpu_custom_call.1} parent=0
    #allocation3 [shape = 'u8[18432]{0}', space=vmem, size = 0x4800, scoped, tag = 'input window, operand 5, single buffered']
    #allocation4 [shape = 's32[2]{0}', space=sflag, size = 0x8, scoped, tag = 'scoped memory for tpu_custom_call.1']
    #allocation5 [shape = 's32[2]{0}', space=sflag, size = 0x8, scoped, tag = 'scoped memory for tpu_custom_call.1']
    #allocation6 [shape = 'u8[8192]{0}', space=vmem, size = 0x2000, scoped, tag = 'output window, operand 0']
    %16 = vsyncpa [#allocation4], 0
    %17 = vsyncpa [#allocation5], 0
    %s18 = scalar_lea.sflag [#allocation5], 1
    %19 = vsyncpa %s18, 0
    loop: start=0, step=1, limit=4
    $region2: #{tpu_custom_call.1} parent=1 // loop_pre_header
      _
    $region3: #{tpu_custom_call.1} parent=1 // loop_header
      %s21 = sphi 0, %s25
      %p22 = scmp.ge.s32.totalorder %s21, 4
      %s31 = sphi 0, %s33
      %s34 = sphi 0, %s31
      %s35 = sphi 0, %s34
      %s51 = sphi 0, %s35
      %s55 = sphi 0, %s55
      %s57 = sphi 0, %s55
      %s58 = sphi 0, %s57
      %s72 = sphi 0, %s58
      %s76 = sphi 0, %s76
      %s78 = sphi 0, %s76
      %s79 = sphi 0, %s78
      %s93 = sphi 0, %s79
      %s97 = sphi 0, %s97
      %s99 = sphi 0, %s97
      %s100 = sphi 0, %s99
      %s114 = sphi 0, %s100
      %s118 = sphi 0, %s118
      %s120 = sphi 0, %s118
      %s121 = sphi 0, %s120
      %s135 = sphi 0, %s121
      %s139 = sphi 0, %s139
      %s141 = sphi 0, %s139
      %s142 = sphi 0, %s141
      %s156 = sphi 0, %s142
      %s160 = sphi 0, %s160
      %s162 = sphi 0, %s160
      %s163 = sphi 0, %s162
      %s177 = sphi 0, %s163
      %s181 = sphi 0, %s181
      %s183 = sphi 0, %s181
      %s184 = sphi 0, %s183
      %s198 = sphi 0, %s184
      %s202 = sphi 0, %s202
      %s204 = sphi 0, %s202
      %s205 = sphi 0, %s204
      %s219 = sphi 0, %s205
      %s223 = sphi 0, %s223
      %s225 = sphi 0, %s223
      %s226 = sphi 0, %s225
      %s240 = sphi 0, %s226
      %s244 = sphi 0, %s244
      %s246 = sphi 0, %s244
      %s247 = sphi 0, %s246
      %s261 = sphi 0, %s247
      %s267 = sphi 0, %s269
      %s270 = sphi 0, %s267
      %s271 = sphi 0, %s270
      %s287 = sphi 0, %s271
    $region4: #{tpu_custom_call.1} parent=1 // loop_header_branch
      %24 = sbr.rel (%p22) target = $region8
    $region5: #{tpu_custom_call.1} parent=1 // loop_body
      %s26 = ssub.s32 %s21, 1
      %s27 = ssub.s32 %s21, 2
      %s28 = sadd.s32 %s21, 1
      %s29 = ssub.s32 %s21, %s28
      %p30 = scmp.eq.s32.totalorder %s29, 0
      %s32 = sadd.s32 %s31, 1
      %s33 = scalar_select %p30, %s31, %s32
      %p36 = pneg %p30
      %p37 = scmp.eq.s32.totalorder %s21, 1
      %p38 = por %p36, %p37
      %p39 = scmp.ne.s32.totalorder %s31, %s34
      %p40 = scmp.eq.s32.totalorder %s21, 0
      %p41 = por %p39, %p40
      %p42 = scmp.ne.s32.totalorder %s31, %s34
      %p43 = scmp.eq.s32.totalorder %s26, 1
      %p44 = por %p42, %p43
      %p45 = scmp.ne.s32.totalorder %s34, %s35
      %p46 = scmp.eq.s32.totalorder %s26, 0
      %p47 = por %p45, %p46
      %p48 = scmp.ne.s32.totalorder %s34, %s35
      %p49 = scmp.eq.s32.totalorder %s27, 1
      %p50 = por %p48, %p49
      %p52 = scmp.ne.s32.totalorder %s35, %s51
      %p53 = scmp.eq.s32.totalorder %s27, 0
      %p54 = por %p52, %p53
      %s56 = sadd.s32 %s55, 1
      %p59 = scmp.eq.s32.totalorder %s21, 1
      %p60 = scmp.ne.s32.totalorder %s55, %s57
      %p61 = scmp.eq.s32.totalorder %s21, 0
      %p62 = por %p60, %p61
      %p63 = scmp.ne.s32.totalorder %s55, %s57
      %p64 = scmp.eq.s32.totalorder %s26, 1
      %p65 = por %p63, %p64
      %p66 = scmp.ne.s32.totalorder %s57, %s58
      %p67 = scmp.eq.s32.totalorder %s26, 0
      %p68 = por %p66, %p67
      %p69 = scmp.ne.s32.totalorder %s57, %s58
      %p70 = scmp.eq.s32.totalorder %s27, 1
      %p71 = por %p69, %p70
      %p73 = scmp.ne.s32.totalorder %s58, %s72
      %p74 = scmp.eq.s32.totalorder %s27, 0
      %p75 = por %p73, %p74
      %s77 = sadd.s32 %s76, 1
      %p80 = scmp.eq.s32.totalorder %s21, 1
      %p81 = scmp.ne.s32.totalorder %s76, %s78
      %p82 = scmp.eq.s32.totalorder %s21, 0
      %p83 = por %p81, %p82
      %p84 = scmp.ne.s32.totalorder %s76, %s78
      %p85 = scmp.eq.s32.totalorder %s26, 1
      %p86 = por %p84, %p85
      %p87 = scmp.ne.s32.totalorder %s78, %s79
      %p88 = scmp.eq.s32.totalorder %s26, 0
      %p89 = por %p87, %p88
      %p90 = scmp.ne.s32.totalorder %s78, %s79
      %p91 = scmp.eq.s32.totalorder %s27, 1
      %p92 = por %p90, %p91
      %p94 = scmp.ne.s32.totalorder %s79, %s93
      %p95 = scmp.eq.s32.totalorder %s27, 0
      %p96 = por %p94, %p95
      %s98 = sadd.s32 %s97, 1
      %p101 = scmp.eq.s32.totalorder %s21, 1
      %p102 = scmp.ne.s32.totalorder %s97, %s99
      %p103 = scmp.eq.s32.totalorder %s21, 0
      %p104 = por %p102, %p103
      %p105 = scmp.ne.s32.totalorder %s97, %s99
      %p106 = scmp.eq.s32.totalorder %s26, 1
      %p107 = por %p105, %p106
      %p108 = scmp.ne.s32.totalorder %s99, %s100
      %p109 = scmp.eq.s32.totalorder %s26, 0
      %p110 = por %p108, %p109
      %p111 = scmp.ne.s32.totalorder %s99, %s100
      %p112 = scmp.eq.s32.totalorder %s27, 1
      %p113 = por %p111, %p112
      %p115 = scmp.ne.s32.totalorder %s100, %s114
      %p116 = scmp.eq.s32.totalorder %s27, 0
      %p117 = por %p115, %p116
      %s119 = sadd.s32 %s118, 1
      %p122 = scmp.eq.s32.totalorder %s21, 1
      %p123 = scmp.ne.s32.totalorder %s118, %s120
      %p124 = scmp.eq.s32.totalorder %s21, 0
      %p125 = por %p123, %p124
      %p126 = scmp.ne.s32.totalorder %s118, %s120
      %p127 = scmp.eq.s32.totalorder %s26, 1
      %p128 = por %p126, %p127
      %p129 = scmp.ne.s32.totalorder %s120, %s121
      %p130 = scmp.eq.s32.totalorder %s26, 0
      %p131 = por %p129, %p130
      %p132 = scmp.ne.s32.totalorder %s120, %s121
      %p133 = scmp.eq.s32.totalorder %s27, 1
      %p134 = por %p132, %p133
      %p136 = scmp.ne.s32.totalorder %s121, %s135
      %p137 = scmp.eq.s32.totalorder %s27, 0
      %p138 = por %p136, %p137
      %s140 = sadd.s32 %s139, 1
      %p143 = scmp.eq.s32.totalorder %s21, 1
      %p144 = scmp.ne.s32.totalorder %s139, %s141
      %p145 = scmp.eq.s32.totalorder %s21, 0
      %p146 = por %p144, %p145
      %p147 = scmp.ne.s32.totalorder %s139, %s141
      %p148 = scmp.eq.s32.totalorder %s26, 1
      %p149 = por %p147, %p148
      %p150 = scmp.ne.s32.totalorder %s141, %s142
      %p151 = scmp.eq.s32.totalorder %s26, 0
      %p152 = por %p150, %p151
      %p153 = scmp.ne.s32.totalorder %s141, %s142
      %p154 = scmp.eq.s32.totalorder %s27, 1
      %p155 = por %p153, %p154
      %p157 = scmp.ne.s32.totalorder %s142, %s156
      %p158 = scmp.eq.s32.totalorder %s27, 0
      %p159 = por %p157, %p158
      %s161 = sadd.s32 %s160, 1
      %p164 = scmp.eq.s32.totalorder %s21, 1
      %p165 = scmp.ne.s32.totalorder %s160, %s162
      %p166 = scmp.eq.s32.totalorder %s21, 0
      %p167 = por %p165, %p166
      %p168 = scmp.ne.s32.totalorder %s160, %s162
      %p169 = scmp.eq.s32.totalorder %s26, 1
      %p170 = por %p168, %p169
      %p171 = scmp.ne.s32.totalorder %s162, %s163
      %p172 = scmp.eq.s32.totalorder %s26, 0
      %p173 = por %p171, %p172
      %p174 = scmp.ne.s32.totalorder %s162, %s163
      %p175 = scmp.eq.s32.totalorder %s27, 1
      %p176 = por %p174, %p175
      %p178 = scmp.ne.s32.totalorder %s163, %s177
      %p179 = scmp.eq.s32.totalorder %s27, 0
      %p180 = por %p178, %p179
      %s182 = sadd.s32 %s181, 1
      %p185 = scmp.eq.s32.totalorder %s21, 1
      %p186 = scmp.ne.s32.totalorder %s181, %s183
      %p187 = scmp.eq.s32.totalorder %s21, 0
      %p188 = por %p186, %p187
      %p189 = scmp.ne.s32.totalorder %s181, %s183
      %p190 = scmp.eq.s32.totalorder %s26, 1
      %p191 = por %p189, %p190
      %p192 = scmp.ne.s32.totalorder %s183, %s184
      %p193 = scmp.eq.s32.totalorder %s26, 0
      %p194 = por %p192, %p193
      %p195 = scmp.ne.s32.totalorder %s183, %s184
      %p196 = scmp.eq.s32.totalorder %s27, 1
      %p197 = por %p195, %p196
      %p199 = scmp.ne.s32.totalorder %s184, %s198
      %p200 = scmp.eq.s32.totalorder %s27, 0
      %p201 = por %p199, %p200
      %s203 = sadd.s32 %s202, 1
      %p206 = scmp.eq.s32.totalorder %s21, 1
      %p207 = scmp.ne.s32.totalorder %s202, %s204
      %p208 = scmp.eq.s32.totalorder %s21, 0
      %p209 = por %p207, %p208
      %p210 = scmp.ne.s32.totalorder %s202, %s204
      %p211 = scmp.eq.s32.totalorder %s26, 1
      %p212 = por %p210, %p211
      %p213 = scmp.ne.s32.totalorder %s204, %s205
      %p214 = scmp.eq.s32.totalorder %s26, 0
      %p215 = por %p213, %p214
      %p216 = scmp.ne.s32.totalorder %s204, %s205
      %p217 = scmp.eq.s32.totalorder %s27, 1
      %p218 = por %p216, %p217
      %p220 = scmp.ne.s32.totalorder %s205, %s219
      %p221 = scmp.eq.s32.totalorder %s27, 0
      %p222 = por %p220, %p221
      %s224 = sadd.s32 %s223, 1
      %p227 = scmp.eq.s32.totalorder %s21, 1
      %p228 = scmp.ne.s32.totalorder %s223, %s225
      %p229 = scmp.eq.s32.totalorder %s21, 0
      %p230 = por %p228, %p229
      %p231 = scmp.ne.s32.totalorder %s223, %s225
      %p232 = scmp.eq.s32.totalorder %s26, 1
      %p233 = por %p231, %p232
      %p234 = scmp.ne.s32.totalorder %s225, %s226
      %p235 = scmp.eq.s32.totalorder %s26, 0
      %p236 = por %p234, %p235
      %p237 = scmp.ne.s32.totalorder %s225, %s226
      %p238 = scmp.eq.s32.totalorder %s27, 1
      %p239 = por %p237, %p238
      %p241 = scmp.ne.s32.totalorder %s226, %s240
      %p242 = scmp.eq.s32.totalorder %s27, 0
      %p243 = por %p241, %p242
      %s245 = sadd.s32 %s244, 1
      %p248 = scmp.eq.s32.totalorder %s21, 1
      %p249 = scmp.ne.s32.totalorder %s244, %s246
      %p250 = scmp.eq.s32.totalorder %s21, 0
      %p251 = por %p249, %p250
      %p252 = scmp.ne.s32.totalorder %s244, %s246
      %p253 = scmp.eq.s32.totalorder %s26, 1
      %p254 = por %p252, %p253
      %p255 = scmp.ne.s32.totalorder %s246, %s247
      %p256 = scmp.eq.s32.totalorder %s26, 0
      %p257 = por %p255, %p256
      %p258 = scmp.ne.s32.totalorder %s246, %s247
      %p259 = scmp.eq.s32.totalorder %s27, 1
      %p260 = por %p258, %p259
      %p262 = scmp.ne.s32.totalorder %s247, %s261
      %p263 = scmp.eq.s32.totalorder %s27, 0
      %p264 = por %p262, %p263
      %s265 = ssub.s32 %s21, %s28
      %p266 = scmp.eq.s32.totalorder %s265, 0
      %s268 = sadd.s32 %s267, 1
      %s269 = scalar_select %p266, %s267, %s268
      %p272 = pneg %p266
      %p273 = scmp.eq.s32.totalorder %s21, 1
      %p274 = por %p272, %p273
      %p275 = scmp.ne.s32.totalorder %s267, %s270
      %p276 = scmp.eq.s32.totalorder %s21, 0
      %p277 = por %p275, %p276
      %p278 = scmp.ne.s32.totalorder %s267, %s270
      %p279 = scmp.eq.s32.totalorder %s26, 1
      %p280 = por %p278, %p279
      %p281 = scmp.ne.s32.totalorder %s270, %s271
      %p282 = scmp.eq.s32.totalorder %s26, 0
      %p283 = por %p281, %p282
      %p284 = scmp.ne.s32.totalorder %s270, %s271
      %p285 = scmp.eq.s32.totalorder %s27, 1
      %p286 = por %p284, %p285
      %p288 = scmp.ne.s32.totalorder %s271, %s287
      %p289 = scmp.eq.s32.totalorder %s27, 0
      %p290 = por %p288, %p289
      %p291 = scmp.le.s32.totalorder 1, %s21
      %p292 = scmp.lt.s32.totalorder %s21, 3
      %p293 = pnand %p291, %p292
      %p294 = pneg %p293
      // Predicated region
      $region9: #{tpu_custom_call.1} parent=5 // pred_check
        _
      $region10: #{tpu_custom_call.1} parent=5 // pred_check_branch
        %296 = sbr.rel (%p293) target = $region12
      $region11: #{tpu_custom_call.1} parent=5 // pred_region
        %s297 = ssub.s32 %s21, 1
        // Predicated region
        $region13: #{tpu_custom_call.1} parent=11 // pred_check
          %p298 = pneg %p68
        $region14: #{tpu_custom_call.1} parent=11 // pred_check_branch
          %300 = sbr.rel (%p298) target = $region16
        $region15: #{tpu_custom_call.1} parent=11 // pred_region
          _
        $region16: #{tpu_custom_call.1} parent=11 // pred_fallthru
          _
        // Predicated region
        $region17: #{tpu_custom_call.1} parent=11 // pred_check
          %p301 = pneg %p89
        $region18: #{tpu_custom_call.1} parent=11 // pred_check_branch
          %303 = sbr.rel (%p301) target = $region20
        $region19: #{tpu_custom_call.1} parent=11 // pred_region
          _
        $region20: #{tpu_custom_call.1} parent=11 // pred_fallthru
          _
        // Predicated region
        $region21: #{tpu_custom_call.1} parent=11 // pred_check
          %p304 = pneg %p110
        $region22: #{tpu_custom_call.1} parent=11 // pred_check_branch
          %306 = sbr.rel (%p304) target = $region24
        $region23: #{tpu_custom_call.1} parent=11 // pred_region
          _
        $region24: #{tpu_custom_call.1} parent=11 // pred_fallthru
          _
        // Predicated region
        $region25: #{tpu_custom_call.1} parent=11 // pred_check
          %p307 = pneg %p131
        $region26: #{tpu_custom_call.1} parent=11 // pred_check_branch
          %309 = sbr.rel (%p307) target = $region28
        $region27: #{tpu_custom_call.1} parent=11 // pred_region
          _
        $region28: #{tpu_custom_call.1} parent=11 // pred_fallthru
          _
        // Predicated region
        $region29: #{tpu_custom_call.1} parent=11 // pred_check
          %p310 = pneg %p152
        $region30: #{tpu_custom_call.1} parent=11 // pred_check_branch
          %312 = sbr.rel (%p310) target = $region32
        $region31: #{tpu_custom_call.1} parent=11 // pred_region
          %314 = vsyncadd [#allocation4], 0
          %s315 = sshll.u32 %s5, 4
          %s316 = int_to_ptr.hbm [resolvable:$true] %s315
          %s317 = sshll.u32 [#allocation3], 4
          %s318 = int_to_ptr.vmem [resolvable:$true] %s317
          %323 = dma.hbm_to_vmem [thread:$0]  %s316, 576, %s318, [#allocation4], 64, 64, 4
        $region32: #{tpu_custom_call.1} parent=11 // pred_fallthru
          _
        // Predicated region
        $region33: #{tpu_custom_call.1} parent=11 // pred_check
          %p324 = pneg %p173
        $region34: #{tpu_custom_call.1} parent=11 // pred_check_branch
          %326 = sbr.rel (%p324) target = $region36
        $region35: #{tpu_custom_call.1} parent=11 // pred_region
          _
        $region36: #{tpu_custom_call.1} parent=11 // pred_fallthru
          _
        // Predicated region
        $region37: #{tpu_custom_call.1} parent=11 // pred_check
          %p327 = pneg %p194
        $region38: #{tpu_custom_call.1} parent=11 // pred_check_branch
          %329 = sbr.rel (%p327) target = $region40
        $region39: #{tpu_custom_call.1} parent=11 // pred_region
          _
        $region40: #{tpu_custom_call.1} parent=11 // pred_fallthru
          _
        // Predicated region
        $region41: #{tpu_custom_call.1} parent=11 // pred_check
          %p330 = pneg %p215
        $region42: #{tpu_custom_call.1} parent=11 // pred_check_branch
          %332 = sbr.rel (%p330) target = $region44
        $region43: #{tpu_custom_call.1} parent=11 // pred_region
          _
        $region44: #{tpu_custom_call.1} parent=11 // pred_fallthru
          _
        // Predicated region
        $region45: #{tpu_custom_call.1} parent=11 // pred_check
          %p333 = pneg %p236
        $region46: #{tpu_custom_call.1} parent=11 // pred_check_branch
          %335 = sbr.rel (%p333) target = $region48
        $region47: #{tpu_custom_call.1} parent=11 // pred_region
          _
        $region48: #{tpu_custom_call.1} parent=11 // pred_fallthru
          _
        // Predicated region
        $region49: #{tpu_custom_call.1} parent=11 // pred_check
          %p336 = pneg %p257
        $region50: #{tpu_custom_call.1} parent=11 // pred_check_branch
          %338 = sbr.rel (%p336) target = $region52
        $region51: #{tpu_custom_call.1} parent=11 // pred_region
          _
        $region52: #{tpu_custom_call.1} parent=11 // pred_fallthru
          _
      $region12: #{tpu_custom_call.1} parent=5 // pred_fallthru
        _
      %p339 = scmp.lt.s32.totalorder %s21, 2
      // Predicated region
      $region53: #{tpu_custom_call.1} parent=5 // pred_check
        %p340 = pneg %p339
      $region54: #{tpu_custom_call.1} parent=5 // pred_check_branch
        %342 = sbr.rel (%p340) target = $region56
      $region55: #{tpu_custom_call.1} parent=5 // pred_region
        // Predicated region
        $region57: #{tpu_custom_call.1} parent=55 // pred_check
          %p343 = pneg %p41
        $region58: #{tpu_custom_call.1} parent=55 // pred_check_branch
          %345 = sbr.rel (%p343) target = $region60
        $region59: #{tpu_custom_call.1} parent=55 // pred_region
          %p346 = scmp.lt.s32.totalorder %s21, 1
          %s347 = scalar_select %p346, %s21, 1
          %s348 = smul.addr %s347, 2
          %s349 = smul.addr %s348, 4
          %s350 = scalar_lea.vmem %s0, %s349
        $region60: #{tpu_custom_call.1} parent=55 // pred_fallthru
          _
      $region56: #{tpu_custom_call.1} parent=5 // pred_fallthru
        _
      %p351 = scmp.le.s32.totalorder 1, %s21
      %p352 = scmp.lt.s32.totalorder %s21, 3
      %p353 = pnand %p351, %p352
      %p354 = pneg %p353
      // Predicated region
      $region61: #{tpu_custom_call.1} parent=5 // pred_check
        _
      $region62: #{tpu_custom_call.1} parent=5 // pred_check_branch
        %356 = sbr.rel (%p353) target = $region64
      $region63: #{tpu_custom_call.1} parent=5 // pred_region
        %s357 = ssub.s32 %s21, 1
        // Predicated region
        $region65: #{tpu_custom_call.1} parent=63 // pred_check
          %p358 = pneg %p152
        $region66: #{tpu_custom_call.1} parent=63 // pred_check_branch
          %360 = sbr.rel (%p358) target = $region68
        $region67: #{tpu_custom_call.1} parent=63 // pred_region
          %362 = dma.done [#allocation4], 576
        $region68: #{tpu_custom_call.1} parent=63 // pred_fallthru
          _
        %p363 = scmp.lt.s32.totalorder %s26, 1
        %s364 = scalar_select %p363, %s26, 1
        %s365 = smul.addr %s364, 2
        %s366 = smul.addr %s365, 4
        %s367 = scalar_lea.vmem %s0, %s366
        %p368 = pneg %p47
        %p369 = pneg %p44
        %p370 = pneg %p68
        %p371 = pneg %p65
        %p372 = pneg %p89
        %p373 = pneg %p86
        %p374 = pneg %p110
        %p375 = pneg %p107
        %p376 = pneg %p131
        %p377 = pneg %p128
        %p378 = pneg %p152
        %p379 = pneg %p149
        %p380 = pneg %p173
        %p381 = pneg %p170
        %p382 = pneg %p194
        %p383 = pneg %p191
        %p384 = pneg %p215
        %p385 = pneg %p212
        %p386 = pneg %p236
        %p387 = pneg %p233
        %p388 = pneg %p257
        %p389 = pneg %p254
        %p390 = pneg %p283
        %p391 = pneg %p280
        %s392 = sand.u32 %s270, 1
        %s393 = scalar_lea.sflag [#allocation5], %s392
        %s394 = sand.u32 %s270, 1
        %s395 = smul.addr %s394, 8
        %s396 = scalar_lea.vmem [#allocation6], %s395
        %p397 = scmp.lt.s32.totalorder %s26, 1
        %s398 = scalar_select %p397, %s26, 1
        %s399 = smul.addr %s398, 2
        %s400 = smul.addr %s399, 4
        %s401 = scalar_lea.vmem %s0, %s400
        %402 = vst [vmem:[#allocation2] sm:$0xff] 0.0
        %403 = vst [vmem:[#allocation2 + $0x20] sm:$0xff] 0.0
        %404 = vst [vmem:[#allocation2 + $0x40] sm:$0xff] 0.0
        %405 = vst [vmem:[#allocation2 + $0x18] sm:$0xff] 0.0
        %406 = vst [vmem:[#allocation2 + $0x38] sm:$0xff] 0.0
        %407 = vst [vmem:[#allocation2 + $0x58] sm:$0xff] 0.0
        %v408 = vld [vmem:[%s401] sm:$0xff]
        %410 = vst [vmem:[#allocation1] ss:$2 sm:$0xff] %v408
        %v411 = vld.sshfl [vmem:[#allocation1] sm:$0xff pattern:$0x75316420]
        %v412 = vld.sshfl [vmem:[#allocation1 + $0x8] sm:$0xff pattern:$0x75316420]
        %415 = vst [vmem:[#allocation2 + $0x8] sm:$0xf] %v411
        %416 = vst [vmem:[#allocation2 + $0x10] sm:$0xf] %v412
        %v417 = vlaneseq
        %v418 = vand.u32 %v417, 127
        %v419 = vadd.s32 %v418, 128
        %vm420 = vcmp.lt.s32.totalorder %v418, 0
        %v421 = vsub.s32 0, %v418
        %v422 = vsel %vm420, %v421, %v418
        %v423 = vshrl.u32 %v422, 4
        %v424 = vand.u32 %v422, 15
        %v425 = vsub.s32 0, %v424
        %v426 = vsel %vm420, %v425, %v424
        %vm427 = vcmp.lt.s32.totalorder %v419, 0
        %v428 = vsub.s32 0, %v419
        %v429 = vsel %vm427, %v428, %v419
        %v430 = vshrl.u32 %v429, 4
        %v431 = vand.u32 %v429, 15
        %v432 = vsub.s32 0, %v431
        %v433 = vsel %vm427, %v432, %v431
        %vm434 = vcmp.ne.s32.totalorder %v426, 0
        %vm435 = vcmp.ne.s32.totalorder %v433, 0
        %vm436 = vcmp.lt.s32.totalorder %v426, 0
        %vm437 = vcmp.lt.s32.totalorder %v433, 0
        %vm438 = vmand %vm436, %vm434
        %vm439 = vmand %vm437, %vm435
        %v440 = vadd.s32 %v426, 16
        %v441 = vadd.s32 %v433, 16
        %v442 = vsel %vm438, %v440, %v426
        %v443 = vsel %vm439, %v441, %v433
        %vm444 = vcmp.ne.s32.totalorder %v442, 0
        %vm445 = vcmp.ne.s32.totalorder %v443, 0
        %v446 = vsel %vm444, 1, 0
        %v447 = vsel %vm445, 1, 0
        %v448 = vcvt.s32.f32 %v446
        %v449 = vcvt.s32.f32 %v447
        %vm450 = vcmp.ne.s32.totalorder %v442, 15
        %vm451 = vcmp.ne.s32.totalorder %v443, 15
        %v452 = vsel %vm450, 1, 0
        %v453 = vsel %vm451, 1, 0
        %v454 = vcvt.s32.f32 %v452
        %v455 = vcvt.s32.f32 %v453
        %v456 = vld [vmem:[#allocation2] sm:$0xf]
        %v457 = vld [vmem:[#allocation2 + $0x8] sm:$0xf]
        %v458 = vld [vmem:[#allocation2 + $0x10] sm:$0xf]
        %s459 = scalar_lea.vmem %s1, 4
        %v460 = vld [vmem:[%s459] sm:$0xf]
        %s461 = scalar_lea.vmem %s1, 16
        %v462 = vld [vmem:[%s461] sm:$0xf]
        %vm463 = vcmask 31744
        %v465 = vsel %vm463, %v462, 0
        %vm467 = vcmask 1043456
        %v469 = vsel %vm467, %v457, 0
        %v472 = vsel %vm467, %v458, 0
        %474 = vmatpush.msra.mxu0 0.0
        %475 = vmatpush.msra.mxu0 0.0
        %476 = vmatpush.msra.mxu0 0.0
        %477 = vmatpush.msra.mxu0 0.0
        %478 = vmatpush.msra.mxu0 0.0
        %479 = vmatpush.msra.mxu0 0.0
        %480 = vmatpush.msra.mxu0 0.0
        %481 = vmatpush.msra.mxu0 0.0
        %482 = vmatpush.msra.mxu0 0.0
        %483 = vmatpush.msra.mxu0 0.0
        %484 = vmatpush.msra.mxu0 0.0
        %485 = vmatpush.msra.mxu0 0.0
        %486 = vmatpush.msra.mxu0 0.0
        %487 = vmatpush.msra.mxu0 0.0
        %488 = vmatpush.msra.mxu0 0.0
        %489 = vmatpush.msra.mxu0 %v469
        %490 = vmatmul.f32.gmra.mxu0 %v465
        %v491 = vpop.f32.mrf.mxu0
        %v492 = vadd.f32 0.0, %v491
        %493 = vdwg.mxu0
        %494 = vmatpush.msra.mxu0 0.0
        %495 = vmatpush.msra.mxu0 0.0
        %496 = vmatpush.msra.mxu0 0.0
        %497 = vmatpush.msra.mxu0 0.0
        %498 = vmatpush.msra.mxu0 0.0
        %499 = vmatpush.msra.mxu0 0.0
        %500 = vmatpush.msra.mxu0 0.0
        %501 = vmatpush.msra.mxu0 0.0
        %502 = vmatpush.msra.mxu0 0.0
        %503 = vmatpush.msra.mxu0 0.0
        %504 = vmatpush.msra.mxu0 0.0
        %505 = vmatpush.msra.mxu0 0.0
        %506 = vmatpush.msra.mxu0 0.0
        %507 = vmatpush.msra.mxu0 0.0
        %508 = vmatpush.msra.mxu0 0.0
        %509 = vmatpush.msra.mxu0 %v472
        %510 = vmatmul.f32.gmra.mxu0 %v465
        %v511 = vpop.f32.mrf.mxu0
        %v512 = vadd.f32 0.0, %v511
        %513 = vdwg.mxu0
        %515 = vrot.lane.b32.xlu0 %v456, 16
        %v516 = vpop.permute.xlu0 %515
        %517 = vrot.lane.b32.xlu0 %v457, 16
        %v518 = vpop.permute.xlu0 %517
        %519 = vrot.lane.b32.xlu0 %v458, 16
        %v520 = vpop.permute.xlu0 %519
        %vm521 = vcmask 130048
        %v522 = vsel %vm521, %v516, %v518
        %v523 = vsel %vm521, %v518, %v520
        %v525 = vsel %vm463, %v460, 0
        %v527 = vsel %vm467, %v522, 0
        %v529 = vsel %vm467, %v523, 0
        %531 = vmatpush.msra.mxu0 0.0
        %532 = vmatpush.msra.mxu0 0.0
        %533 = vmatpush.msra.mxu0 0.0
        %534 = vmatpush.msra.mxu0 0.0
        %535 = vmatpush.msra.mxu0 0.0
        %536 = vmatpush.msra.mxu0 0.0
        %537 = vmatpush.msra.mxu0 0.0
        %538 = vmatpush.msra.mxu0 0.0
        %539 = vmatpush.msra.mxu0 0.0
        %540 = vmatpush.msra.mxu0 0.0
        %541 = vmatpush.msra.mxu0 0.0
        %542 = vmatpush.msra.mxu0 0.0
        %543 = vmatpush.msra.mxu0 0.0
        %544 = vmatpush.msra.mxu0 0.0
        %545 = vmatpush.msra.mxu0 0.0
        %546 = vmatpush.msra.mxu0 %v527
        %547 = vmatmul.f32.gmra.mxu0 %v525
        %v548 = vpop.f32.mrf.mxu0
        %v549 = vadd.f32 %v492, %v548
        %550 = vdwg.mxu0
        %551 = vmatpush.msra.mxu0 0.0
        %552 = vmatpush.msra.mxu0 0.0
        %553 = vmatpush.msra.mxu0 0.0
        %554 = vmatpush.msra.mxu0 0.0
        %555 = vmatpush.msra.mxu0 0.0
        %556 = vmatpush.msra.mxu0 0.0
        %557 = vmatpush.msra.mxu0 0.0
        %558 = vmatpush.msra.mxu0 0.0
        %559 = vmatpush.msra.mxu0 0.0
        %560 = vmatpush.msra.mxu0 0.0
        %561 = vmatpush.msra.mxu0 0.0
        %562 = vmatpush.msra.mxu0 0.0
        %563 = vmatpush.msra.mxu0 0.0
        %564 = vmatpush.msra.mxu0 0.0
        %565 = vmatpush.msra.mxu0 0.0
        %566 = vmatpush.msra.mxu0 %v529
        %567 = vmatmul.f32.gmra.mxu0 %v525
        %v568 = vpop.f32.mrf.mxu0
        %v569 = vadd.f32 %v512, %v568
        %570 = vdwg.mxu0
        %v571 = vld [vmem:[#allocation2 + $0x8] sm:$0xf]
        %v572 = vld [vmem:[#allocation2 + $0x10] sm:$0xf]
        %v573 = vld [vmem:[#allocation2 + $0x18] sm:$0xf]
        %s574 = scalar_lea.vmem %s1, 28
        %v575 = vld [vmem:[%s574] sm:$0xf]
        %579 = vrot.lane.b32.xlu0 %v571, 112
        %v580 = vpop.permute.xlu0 %579
        %581 = vrot.lane.b32.xlu0 %v572, 112
        %v582 = vpop.permute.xlu0 %581
        %583 = vrot.lane.b32.xlu0 %v573, 112
        %v584 = vpop.permute.xlu0 %583
        %vm585 = vcmask 916480
        %v586 = vsel %vm585, %v580, %v582
        %v587 = vsel %vm585, %v582, %v584
        %v589 = vsel %vm463, %v575, 0
        %v591 = vsel %vm467, %v586, 0
        %v593 = vsel %vm467, %v587, 0
        %595 = vmatpush.msra.mxu0 0.0
        %596 = vmatpush.msra.mxu0 0.0
        %597 = vmatpush.msra.mxu0 0.0
        %598 = vmatpush.msra.mxu0 0.0
        %599 = vmatpush.msra.mxu0 0.0
        %600 = vmatpush.msra.mxu0 0.0
        %601 = vmatpush.msra.mxu0 0.0
        %602 = vmatpush.msra.mxu0 0.0
        %603 = vmatpush.msra.mxu0 0.0
        %604 = vmatpush.msra.mxu0 0.0
        %605 = vmatpush.msra.mxu0 0.0
        %606 = vmatpush.msra.mxu0 0.0
        %607 = vmatpush.msra.mxu0 0.0
        %608 = vmatpush.msra.mxu0 0.0
        %609 = vmatpush.msra.mxu0 0.0
        %610 = vmatpush.msra.mxu0 %v591
        %611 = vmatmul.f32.gmra.mxu0 %v589
        %v612 = vpop.f32.mrf.mxu0
        %v613 = vadd.f32 0.0, %v612
        %614 = vdwg.mxu0
        %615 = vmatpush.msra.mxu0 0.0
        %616 = vmatpush.msra.mxu0 0.0
        %617 = vmatpush.msra.mxu0 0.0
        %618 = vmatpush.msra.mxu0 0.0
        %619 = vmatpush.msra.mxu0 0.0
        %620 = vmatpush.msra.mxu0 0.0
        %621 = vmatpush.msra.mxu0 0.0
        %622 = vmatpush.msra.mxu0 0.0
        %623 = vmatpush.msra.mxu0 0.0
        %624 = vmatpush.msra.mxu0 0.0
        %625 = vmatpush.msra.mxu0 0.0
        %626 = vmatpush.msra.mxu0 0.0
        %627 = vmatpush.msra.mxu0 0.0
        %628 = vmatpush.msra.mxu0 0.0
        %629 = vmatpush.msra.mxu0 0.0
        %630 = vmatpush.msra.mxu0 %v593
        %631 = vmatmul.f32.gmra.mxu0 %v589
        %v632 = vpop.f32.mrf.mxu0
        %v633 = vadd.f32 0.0, %v632
        %634 = vdwg.mxu0
        %v635 = vadd.f32 %v549, %v613
        %v636 = vadd.f32 %v569, %v633
        %v637 = vld [vmem:[%s1] sm:$0xf]
        %s638 = scalar_lea.vmem %s1, 12
        %v639 = vld [vmem:[%s638] sm:$0xf]
        %640 = vrot.lane.b32.xlu0 %v456, 1
        %v641 = vpop.permute.xlu0 %640
        %642 = vrot.lane.b32.xlu0 %v457, 1
        %v643 = vpop.permute.xlu0 %642
        %644 = vrot.lane.b32.xlu0 %v458, 1
        %v645 = vpop.permute.xlu0 %644
        %vm646 = vcmask 7168
        %v647 = vsel %vm646, %v641, %v643
        %v648 = vsel %vm646, %v643, %v645
        %v650 = vsel %vm463, %v639, 0
        %v652 = vsel %vm467, %v647, 0
        %v654 = vsel %vm467, %v648, 0
        %656 = vmatpush.msra.mxu0 0.0
        %657 = vmatpush.msra.mxu0 0.0
        %658 = vmatpush.msra.mxu0 0.0
        %659 = vmatpush.msra.mxu0 0.0
        %660 = vmatpush.msra.mxu0 0.0
        %661 = vmatpush.msra.mxu0 0.0
        %662 = vmatpush.msra.mxu0 0.0
        %663 = vmatpush.msra.mxu0 0.0
        %664 = vmatpush.msra.mxu0 0.0
        %665 = vmatpush.msra.mxu0 0.0
        %666 = vmatpush.msra.mxu0 0.0
        %667 = vmatpush.msra.mxu0 0.0
        %668 = vmatpush.msra.mxu0 0.0
        %669 = vmatpush.msra.mxu0 0.0
        %670 = vmatpush.msra.mxu0 0.0
        %671 = vmatpush.msra.mxu0 %v652
        %672 = vmatmul.f32.gmra.mxu0 %v650
        %v673 = vpop.f32.mrf.mxu0
        %v674 = vadd.f32 0.0, %v673
        %675 = vdwg.mxu0
        %676 = vmatpush.msra.mxu0 0.0
        %677 = vmatpush.msra.mxu0 0.0
        %678 = vmatpush.msra.mxu0 0.0
        %679 = vmatpush.msra.mxu0 0.0
        %680 = vmatpush.msra.mxu0 0.0
        %681 = vmatpush.msra.mxu0 0.0
        %682 = vmatpush.msra.mxu0 0.0
        %683 = vmatpush.msra.mxu0 0.0
        %684 = vmatpush.msra.mxu0 0.0
        %685 = vmatpush.msra.mxu0 0.0
        %686 = vmatpush.msra.mxu0 0.0
        %687 = vmatpush.msra.mxu0 0.0
        %688 = vmatpush.msra.mxu0 0.0
        %689 = vmatpush.msra.mxu0 0.0
        %690 = vmatpush.msra.mxu0 0.0
        %691 = vmatpush.msra.mxu0 %v654
        %692 = vmatmul.f32.gmra.mxu0 %v650
        %v693 = vpop.f32.mrf.mxu0
        %v694 = vadd.f32 0.0, %v693
        %695 = vdwg.mxu0
        %696 = vrot.lane.b32.xlu0 %v456, 17
        %v697 = vpop.permute.xlu0 %696
        %698 = vrot.lane.b32.xlu0 %v457, 17
        %v699 = vpop.permute.xlu0 %698
        %700 = vrot.lane.b32.xlu0 %v458, 17
        %v701 = vpop.permute.xlu0 %700
        %vm702 = vcmask 138240
        %v703 = vsel %vm702, %v697, %v699
        %v704 = vsel %vm702, %v699, %v701
        %v706 = vsel %vm463, %v637, 0
        %v708 = vsel %vm467, %v703, 0
        %v710 = vsel %vm467, %v704, 0
        %712 = vmatpush.msra.mxu0 0.0
        %713 = vmatpush.msra.mxu0 0.0
        %714 = vmatpush.msra.mxu0 0.0
        %715 = vmatpush.msra.mxu0 0.0
        %716 = vmatpush.msra.mxu0 0.0
        %717 = vmatpush.msra.mxu0 0.0
        %718 = vmatpush.msra.mxu0 0.0
        %719 = vmatpush.msra.mxu0 0.0
        %720 = vmatpush.msra.mxu0 0.0
        %721 = vmatpush.msra.mxu0 0.0
        %722 = vmatpush.msra.mxu0 0.0
        %723 = vmatpush.msra.mxu0 0.0
        %724 = vmatpush.msra.mxu0 0.0
        %725 = vmatpush.msra.mxu0 0.0
        %726 = vmatpush.msra.mxu0 0.0
        %727 = vmatpush.msra.mxu0 %v708
        %728 = vmatmul.f32.gmra.mxu0 %v706
        %v729 = vpop.f32.mrf.mxu0
        %v730 = vadd.f32 %v674, %v729
        %731 = vdwg.mxu0
        %732 = vmatpush.msra.mxu0 0.0
        %733 = vmatpush.msra.mxu0 0.0
        %734 = vmatpush.msra.mxu0 0.0
        %735 = vmatpush.msra.mxu0 0.0
        %736 = vmatpush.msra.mxu0 0.0
        %737 = vmatpush.msra.mxu0 0.0
        %738 = vmatpush.msra.mxu0 0.0
        %739 = vmatpush.msra.mxu0 0.0
        %740 = vmatpush.msra.mxu0 0.0
        %741 = vmatpush.msra.mxu0 0.0
        %742 = vmatpush.msra.mxu0 0.0
        %743 = vmatpush.msra.mxu0 0.0
        %744 = vmatpush.msra.mxu0 0.0
        %745 = vmatpush.msra.mxu0 0.0
        %746 = vmatpush.msra.mxu0 0.0
        %747 = vmatpush.msra.mxu0 %v710
        %748 = vmatmul.f32.gmra.mxu0 %v706
        %v749 = vpop.f32.mrf.mxu0
        %v750 = vadd.f32 %v694, %v749
        %751 = vdwg.mxu0
        %s752 = scalar_lea.vmem %s1, 24
        %v753 = vld [vmem:[%s752] sm:$0xf]
        %754 = vrot.lane.b32.xlu0 %v571, 113
        %v755 = vpop.permute.xlu0 %754
        %756 = vrot.lane.b32.xlu0 %v572, 113
        %v757 = vpop.permute.xlu0 %756
        %758 = vrot.lane.b32.xlu0 %v573, 113
        %v759 = vpop.permute.xlu0 %758
        %vm760 = vcmask 924672
        %v761 = vsel %vm760, %v755, %v757
        %v762 = vsel %vm760, %v757, %v759
        %v764 = vsel %vm463, %v753, 0
        %v766 = vsel %vm467, %v761, 0
        %v768 = vsel %vm467, %v762, 0
        %770 = vmatpush.msra.mxu0 0.0
        %771 = vmatpush.msra.mxu0 0.0
        %772 = vmatpush.msra.mxu0 0.0
        %773 = vmatpush.msra.mxu0 0.0
        %774 = vmatpush.msra.mxu0 0.0
        %775 = vmatpush.msra.mxu0 0.0
        %776 = vmatpush.msra.mxu0 0.0
        %777 = vmatpush.msra.mxu0 0.0
        %778 = vmatpush.msra.mxu0 0.0
        %779 = vmatpush.msra.mxu0 0.0
        %780 = vmatpush.msra.mxu0 0.0
        %781 = vmatpush.msra.mxu0 0.0
        %782 = vmatpush.msra.mxu0 0.0
        %783 = vmatpush.msra.mxu0 0.0
        %784 = vmatpush.msra.mxu0 0.0
        %785 = vmatpush.msra.mxu0 %v766
        %786 = vmatmul.f32.gmra.mxu0 %v764
        %v787 = vpop.f32.mrf.mxu0
        %v788 = vadd.f32 0.0, %v787
        %789 = vdwg.mxu0
        %790 = vmatpush.msra.mxu0 0.0
        %791 = vmatpush.msra.mxu0 0.0
        %792 = vmatpush.msra.mxu0 0.0
        %793 = vmatpush.msra.mxu0 0.0
        %794 = vmatpush.msra.mxu0 0.0
        %795 = vmatpush.msra.mxu0 0.0
        %796 = vmatpush.msra.mxu0 0.0
        %797 = vmatpush.msra.mxu0 0.0
        %798 = vmatpush.msra.mxu0 0.0
        %799 = vmatpush.msra.mxu0 0.0
        %800 = vmatpush.msra.mxu0 0.0
        %801 = vmatpush.msra.mxu0 0.0
        %802 = vmatpush.msra.mxu0 0.0
        %803 = vmatpush.msra.mxu0 0.0
        %804 = vmatpush.msra.mxu0 0.0
        %805 = vmatpush.msra.mxu0 %v768
        %806 = vmatmul.f32.gmra.mxu0 %v764
        %v807 = vpop.f32.mrf.mxu0
        %v808 = vadd.f32 0.0, %v807
        %809 = vdwg.mxu0
        %v810 = vadd.f32 %v730, %v788
        %v811 = vadd.f32 %v750, %v808
        %v812 = vmul.f32 %v448, %v810
        %v813 = vmul.f32 %v449, %v811
        %v814 = vadd.f32 %v635, %v812
        %v815 = vadd.f32 %v636, %v813
        %s816 = scalar_lea.vmem %s1, 8
        %v817 = vld [vmem:[%s816] sm:$0xf]
        %s818 = scalar_lea.vmem %s1, 20
        %v819 = vld [vmem:[%s818] sm:$0xf]
        %820 = vrot.lane.b32.xlu0 %v571, 127
        %v821 = vpop.permute.xlu0 %820
        %822 = vrot.lane.b32.xlu0 %v572, 127
        %v823 = vpop.permute.xlu0 %822
        %824 = vrot.lane.b32.xlu0 %v573, 127
        %v825 = vpop.permute.xlu0 %824
        %vm826 = vcmask 1039360
        %v827 = vsel %vm826, %v821, %v823
        %v828 = vsel %vm826, %v823, %v825
        %v830 = vsel %vm463, %v819, 0
        %v832 = vsel %vm467, %v827, 0
        %v834 = vsel %vm467, %v828, 0
        %836 = vmatpush.msra.mxu0 0.0
        %837 = vmatpush.msra.mxu0 0.0
        %838 = vmatpush.msra.mxu0 0.0
        %839 = vmatpush.msra.mxu0 0.0
        %840 = vmatpush.msra.mxu0 0.0
        %841 = vmatpush.msra.mxu0 0.0
        %842 = vmatpush.msra.mxu0 0.0
        %843 = vmatpush.msra.mxu0 0.0
        %844 = vmatpush.msra.mxu0 0.0
        %845 = vmatpush.msra.mxu0 0.0
        %846 = vmatpush.msra.mxu0 0.0
        %847 = vmatpush.msra.mxu0 0.0
        %848 = vmatpush.msra.mxu0 0.0
        %849 = vmatpush.msra.mxu0 0.0
        %850 = vmatpush.msra.mxu0 0.0
        %851 = vmatpush.msra.mxu0 %v832
        %852 = vmatmul.f32.gmra.mxu0 %v830
        %v853 = vpop.f32.mrf.mxu0
        %v854 = vadd.f32 0.0, %v853
        %855 = vdwg.mxu0
        %856 = vmatpush.msra.mxu0 0.0
        %857 = vmatpush.msra.mxu0 0.0
        %858 = vmatpush.msra.mxu0 0.0
        %859 = vmatpush.msra.mxu0 0.0
        %860 = vmatpush.msra.mxu0 0.0
        %861 = vmatpush.msra.mxu0 0.0
        %862 = vmatpush.msra.mxu0 0.0
        %863 = vmatpush.msra.mxu0 0.0
        %864 = vmatpush.msra.mxu0 0.0
        %865 = vmatpush.msra.mxu0 0.0
        %866 = vmatpush.msra.mxu0 0.0
        %867 = vmatpush.msra.mxu0 0.0
        %868 = vmatpush.msra.mxu0 0.0
        %869 = vmatpush.msra.mxu0 0.0
        %870 = vmatpush.msra.mxu0 0.0
        %871 = vmatpush.msra.mxu0 %v834
        %872 = vmatmul.f32.gmra.mxu0 %v830
        %v873 = vpop.f32.mrf.mxu0
        %v874 = vadd.f32 0.0, %v873
        %875 = vdwg.mxu0
        %876 = vrot.lane.b32.xlu0 %v456, 15
        %v877 = vpop.permute.xlu0 %876
        %878 = vrot.lane.b32.xlu0 %v457, 15
        %v879 = vpop.permute.xlu0 %878
        %880 = vrot.lane.b32.xlu0 %v458, 15
        %v881 = vpop.permute.xlu0 %880
        %vm882 = vcmask 121856
        %v883 = vsel %vm882, %v877, %v879
        %v884 = vsel %vm882, %v879, %v881
        %v886 = vsel %vm463, %v817, 0
        %v888 = vsel %vm467, %v883, 0
        %v890 = vsel %vm467, %v884, 0
        %892 = vmatpush.msra.mxu0 0.0
        %893 = vmatpush.msra.mxu0 0.0
        %894 = vmatpush.msra.mxu0 0.0
        %895 = vmatpush.msra.mxu0 0.0
        %896 = vmatpush.msra.mxu0 0.0
        %897 = vmatpush.msra.mxu0 0.0
        %898 = vmatpush.msra.mxu0 0.0
        %899 = vmatpush.msra.mxu0 0.0
        %900 = vmatpush.msra.mxu0 0.0
        %901 = vmatpush.msra.mxu0 0.0
        %902 = vmatpush.msra.mxu0 0.0
        %903 = vmatpush.msra.mxu0 0.0
        %904 = vmatpush.msra.mxu0 0.0
        %905 = vmatpush.msra.mxu0 0.0
        %906 = vmatpush.msra.mxu0 0.0
        %907 = vmatpush.msra.mxu0 %v888
        %908 = vmatmul.f32.gmra.mxu0 %v886
        %v909 = vpop.f32.mrf.mxu0
        %v910 = vadd.f32 %v854, %v909
        %911 = vdwg.mxu0
        %912 = vmatpush.msra.mxu0 0.0
        %913 = vmatpush.msra.mxu0 0.0
        %914 = vmatpush.msra.mxu0 0.0
        %915 = vmatpush.msra.mxu0 0.0
        %916 = vmatpush.msra.mxu0 0.0
        %917 = vmatpush.msra.mxu0 0.0
        %918 = vmatpush.msra.mxu0 0.0
        %919 = vmatpush.msra.mxu0 0.0
        %920 = vmatpush.msra.mxu0 0.0
        %921 = vmatpush.msra.mxu0 0.0
        %922 = vmatpush.msra.mxu0 0.0
        %923 = vmatpush.msra.mxu0 0.0
        %924 = vmatpush.msra.mxu0 0.0
        %925 = vmatpush.msra.mxu0 0.0
        %926 = vmatpush.msra.mxu0 0.0
        %927 = vmatpush.msra.mxu0 %v890
        %928 = vmatmul.f32.gmra.mxu0 %v886
        %v929 = vpop.f32.mrf.mxu0
        %v930 = vadd.f32 %v874, %v929
        %931 = vdwg.mxu0
        %s932 = scalar_lea.vmem %s1, 32
        %v933 = vld [vmem:[%s932] sm:$0xf]
        %934 = vrot.lane.b32.xlu0 %v571, 111
        %v935 = vpop.permute.xlu0 %934
        %936 = vrot.lane.b32.xlu0 %v572, 111
        %v937 = vpop.permute.xlu0 %936
        %938 = vrot.lane.b32.xlu0 %v573, 111
        %v939 = vpop.permute.xlu0 %938
        %vm940 = vcmask 908288
        %v941 = vsel %vm940, %v935, %v937
        %v942 = vsel %vm940, %v937, %v939
        %v944 = vsel %vm463, %v933, 0
        %v946 = vsel %vm467, %v941, 0
        %v948 = vsel %vm467, %v942, 0
        %950 = vmatpush.msra.mxu0 0.0
        %951 = vmatpush.msra.mxu0 0.0
        %952 = vmatpush.msra.mxu0 0.0
        %953 = vmatpush.msra.mxu0 0.0
        %954 = vmatpush.msra.mxu0 0.0
        %955 = vmatpush.msra.mxu0 0.0
        %956 = vmatpush.msra.mxu0 0.0
        %957 = vmatpush.msra.mxu0 0.0
        %958 = vmatpush.msra.mxu0 0.0
        %959 = vmatpush.msra.mxu0 0.0
        %960 = vmatpush.msra.mxu0 0.0
        %961 = vmatpush.msra.mxu0 0.0
        %962 = vmatpush.msra.mxu0 0.0
        %963 = vmatpush.msra.mxu0 0.0
        %964 = vmatpush.msra.mxu0 0.0
        %965 = vmatpush.msra.mxu0 %v946
        %966 = vmatmul.f32.gmra.mxu0 %v944
        %v967 = vpop.f32.mrf.mxu0
        %v968 = vadd.f32 0.0, %v967
        %969 = vdwg.mxu0
        %970 = vmatpush.msra.mxu0 0.0
        %971 = vmatpush.msra.mxu0 0.0
        %972 = vmatpush.msra.mxu0 0.0
        %973 = vmatpush.msra.mxu0 0.0
        %974 = vmatpush.msra.mxu0 0.0
        %975 = vmatpush.msra.mxu0 0.0
        %976 = vmatpush.msra.mxu0 0.0
        %977 = vmatpush.msra.mxu0 0.0
        %978 = vmatpush.msra.mxu0 0.0
        %979 = vmatpush.msra.mxu0 0.0
        %980 = vmatpush.msra.mxu0 0.0
        %981 = vmatpush.msra.mxu0 0.0
        %982 = vmatpush.msra.mxu0 0.0
        %983 = vmatpush.msra.mxu0 0.0
        %984 = vmatpush.msra.mxu0 0.0
        %985 = vmatpush.msra.mxu0 %v948
        %986 = vmatmul.f32.gmra.mxu0 %v944
        %v987 = vpop.f32.mrf.mxu0
        %v988 = vadd.f32 0.0, %v987
        %989 = vdwg.mxu0
        %v990 = vadd.f32 %v910, %v968
        %v991 = vadd.f32 %v930, %v988
        %v992 = vmul.f32 %v454, %v990
        %v993 = vmul.f32 %v455, %v991
        %v994 = vadd.f32 %v814, %v992
        %v995 = vadd.f32 %v815, %v993
        %v996 = vld [vmem:[%s6] sm:$0xf]
        %998 = vset.pattern.permute.xlu0 0
        %999 = vperm.xlu0 %998, %v996
        %v1000 = vpop.permute.xlu0 %999
        %v1002 = vadd.f32 %v994, %v1000
        %v1003 = vadd.f32 %v995, %v1000
        %vm1004 = vcmp.ge.f32.partialorder %v1002, 0.0
        %vm1005 = vcmp.ge.f32.partialorder %v1003, 0.0
        %v1006 = vmul.f32 %v1002, 0.01
        %v1007 = vmul.f32 %v1003, 0.01
        %v1008 = vsel %vm1004, %v1002, %v1006
        %v1009 = vsel %vm1005, %v1003, %v1007
        %v1012 = vrot.slane %v1008, 4
        %v1013 = vrot.slane %v1009, 4
        %1016 = vst [vmem:[#allocation2 + $0x8] sm:$0xf0] %v1012
        %1017 = vst [vmem:[#allocation2 + $0x10] sm:$0xf0] %v1013
        %v1018 = vld [vmem:[#allocation2] sm:$0xff]
        %v1019 = vld [vmem:[#allocation2 + $0x8] sm:$0xff]
        %v1020 = vld [vmem:[#allocation2 + $0x10] sm:$0xff]
        %s1021 = scalar_lea.vmem %s2, 4
        %v1022 = vld [vmem:[%s1021] sm:$0xf]
        %s1023 = scalar_lea.vmem %s2, 16
        %v1024 = vld [vmem:[%s1023] sm:$0xf]
        %vm1025 = vcmask 64512
        %v1027 = vsel %vm1025, %v1024, 0
        %1029 = vmatpush.msra.mxu0 0.0
        %1030 = vmatpush.msra.mxu0 0.0
        %1031 = vmatpush.msra.mxu0 0.0
        %1032 = vmatpush.msra.mxu0 0.0
        %1033 = vmatpush.msra.mxu0 0.0
        %1034 = vmatpush.msra.mxu0 0.0
        %1035 = vmatpush.msra.mxu0 0.0
        %1036 = vmatpush.msra.mxu0 0.0
        %1037 = vmatpush.msra.mxu0 0.0
        %1038 = vmatpush.msra.mxu0 0.0
        %1039 = vmatpush.msra.mxu0 0.0
        %1040 = vmatpush.msra.mxu0 0.0
        %1041 = vmatpush.msra.mxu0 0.0
        %1042 = vmatpush.msra.mxu0 0.0
        %1043 = vmatpush.msra.mxu0 0.0
        %1044 = vmatpush.msra.mxu0 %v1019
        %1045 = vmatmul.f32.gmra.mxu0 %v1027
        %v1046 = vpop.f32.mrf.mxu0
        %v1047 = vadd.f32 0.0, %v1046
        %1048 = vdwg.mxu0
        %1049 = vmatpush.msra.mxu0 0.0
        %1050 = vmatpush.msra.mxu0 0.0
        %1051 = vmatpush.msra.mxu0 0.0
        %1052 = vmatpush.msra.mxu0 0.0
        %1053 = vmatpush.msra.mxu0 0.0
        %1054 = vmatpush.msra.mxu0 0.0
        %1055 = vmatpush.msra.mxu0 0.0
        %1056 = vmatpush.msra.mxu0 0.0
        %1057 = vmatpush.msra.mxu0 0.0
        %1058 = vmatpush.msra.mxu0 0.0
        %1059 = vmatpush.msra.mxu0 0.0
        %1060 = vmatpush.msra.mxu0 0.0
        %1061 = vmatpush.msra.mxu0 0.0
        %1062 = vmatpush.msra.mxu0 0.0
        %1063 = vmatpush.msra.mxu0 0.0
        %1064 = vmatpush.msra.mxu0 %v1020
        %1065 = vmatmul.f32.gmra.mxu0 %v1027
        %v1066 = vpop.f32.mrf.mxu0
        %v1067 = vadd.f32 0.0, %v1066
        %1068 = vdwg.mxu0
        %1072 = vrot.lane.b32.xlu0 %v1018, 16
        %v1073 = vpop.permute.xlu0 %1072
        %1074 = vrot.lane.b32.xlu0 %v1019, 16
        %v1075 = vpop.permute.xlu0 %1074
        %1076 = vrot.lane.b32.xlu0 %v1020, 16
        %v1077 = vpop.permute.xlu0 %1076
        %v1078 = vsel %vm521, %v1073, %v1075
        %v1079 = vsel %vm521, %v1075, %v1077
        %v1083 = vsel %vm1025, %v1022, 0
        %1085 = vmatpush.msra.mxu0 0.0
        %1086 = vmatpush.msra.mxu0 0.0
        %1087 = vmatpush.msra.mxu0 0.0
        %1088 = vmatpush.msra.mxu0 0.0
        %1089 = vmatpush.msra.mxu0 0.0
        %1090 = vmatpush.msra.mxu0 0.0
        %1091 = vmatpush.msra.mxu0 0.0
        %1092 = vmatpush.msra.mxu0 0.0
        %1093 = vmatpush.msra.mxu0 0.0
        %1094 = vmatpush.msra.mxu0 0.0
        %1095 = vmatpush.msra.mxu0 0.0
        %1096 = vmatpush.msra.mxu0 0.0
        %1097 = vmatpush.msra.mxu0 0.0
        %1098 = vmatpush.msra.mxu0 0.0
        %1099 = vmatpush.msra.mxu0 0.0
        %1100 = vmatpush.msra.mxu0 %v1078
        %1101 = vmatmul.f32.gmra.mxu0 %v1083
        %v1102 = vpop.f32.mrf.mxu0
        %v1103 = vadd.f32 %v1047, %v1102
        %1104 = vdwg.mxu0
        %1105 = vmatpush.msra.mxu0 0.0
        %1106 = vmatpush.msra.mxu0 0.0
        %1107 = vmatpush.msra.mxu0 0.0
        %1108 = vmatpush.msra.mxu0 0.0
        %1109 = vmatpush.msra.mxu0 0.0
        %1110 = vmatpush.msra.mxu0 0.0
        %1111 = vmatpush.msra.mxu0 0.0
        %1112 = vmatpush.msra.mxu0 0.0
        %1113 = vmatpush.msra.mxu0 0.0
        %1114 = vmatpush.msra.mxu0 0.0
        %1115 = vmatpush.msra.mxu0 0.0
        %1116 = vmatpush.msra.mxu0 0.0
        %1117 = vmatpush.msra.mxu0 0.0
        %1118 = vmatpush.msra.mxu0 0.0
        %1119 = vmatpush.msra.mxu0 0.0
        %1120 = vmatpush.msra.mxu0 %v1079
        %1121 = vmatmul.f32.gmra.mxu0 %v1083
        %v1122 = vpop.f32.mrf.mxu0
        %v1123 = vadd.f32 %v1067, %v1122
        %1124 = vdwg.mxu0
        %v1125 = vld [vmem:[#allocation2 + $0x8] sm:$0xff]
        %v1126 = vld [vmem:[#allocation2 + $0x10] sm:$0xff]
        %v1127 = vld [vmem:[#allocation2 + $0x18] sm:$0xff]
        %s1128 = scalar_lea.vmem %s2, 28
        %v1129 = vld [vmem:[%s1128] sm:$0xf]
        %1133 = vrot.lane.b32.xlu0 %v1125, 112
        %v1134 = vpop.permute.xlu0 %1133
        %1135 = vrot.lane.b32.xlu0 %v1126, 112
        %v1136 = vpop.permute.xlu0 %1135
        %1137 = vrot.lane.b32.xlu0 %v1127, 112
        %v1138 = vpop.permute.xlu0 %1137
        %v1139 = vsel %vm585, %v1134, %v1136
        %v1140 = vsel %vm585, %v1136, %v1138
        %v1144 = vsel %vm1025, %v1129, 0
        %1146 = vmatpush.msra.mxu0 0.0
        %1147 = vmatpush.msra.mxu0 0.0
        %1148 = vmatpush.msra.mxu0 0.0
        %1149 = vmatpush.msra.mxu0 0.0
        %1150 = vmatpush.msra.mxu0 0.0
        %1151 = vmatpush.msra.mxu0 0.0
        %1152 = vmatpush.msra.mxu0 0.0
        %1153 = vmatpush.msra.mxu0 0.0
        %1154 = vmatpush.msra.mxu0 0.0
        %1155 = vmatpush.msra.mxu0 0.0
        %1156 = vmatpush.msra.mxu0 0.0
        %1157 = vmatpush.msra.mxu0 0.0
        %1158 = vmatpush.msra.mxu0 0.0
        %1159 = vmatpush.msra.mxu0 0.0
        %1160 = vmatpush.msra.mxu0 0.0
        %1161 = vmatpush.msra.mxu0 %v1139
        %1162 = vmatmul.f32.gmra.mxu0 %v1144
        %v1163 = vpop.f32.mrf.mxu0
        %v1164 = vadd.f32 0.0, %v1163
        %1165 = vdwg.mxu0
        %1166 = vmatpush.msra.mxu0 0.0
        %1167 = vmatpush.msra.mxu0 0.0
        %1168 = vmatpush.msra.mxu0 0.0
        %1169 = vmatpush.msra.mxu0 0.0
        %1170 = vmatpush.msra.mxu0 0.0
        %1171 = vmatpush.msra.mxu0 0.0
        %1172 = vmatpush.msra.mxu0 0.0
        %1173 = vmatpush.msra.mxu0 0.0
        %1174 = vmatpush.msra.mxu0 0.0
        %1175 = vmatpush.msra.mxu0 0.0
        %1176 = vmatpush.msra.mxu0 0.0
        %1177 = vmatpush.msra.mxu0 0.0
        %1178 = vmatpush.msra.mxu0 0.0
        %1179 = vmatpush.msra.mxu0 0.0
        %1180 = vmatpush.msra.mxu0 0.0
        %1181 = vmatpush.msra.mxu0 %v1140
        %1182 = vmatmul.f32.gmra.mxu0 %v1144
        %v1183 = vpop.f32.mrf.mxu0
        %v1184 = vadd.f32 0.0, %v1183
        %1185 = vdwg.mxu0
        %v1186 = vadd.f32 %v1103, %v1164
        %v1187 = vadd.f32 %v1123, %v1184
        %v1188 = vld [vmem:[%s2] sm:$0xf]
        %s1189 = scalar_lea.vmem %s2, 12
        %v1190 = vld [vmem:[%s1189] sm:$0xf]
        %1191 = vrot.lane.b32.xlu0 %v1018, 1
        %v1192 = vpop.permute.xlu0 %1191
        %1193 = vrot.lane.b32.xlu0 %v1019, 1
        %v1194 = vpop.permute.xlu0 %1193
        %1195 = vrot.lane.b32.xlu0 %v1020, 1
        %v1196 = vpop.permute.xlu0 %1195
        %v1197 = vsel %vm646, %v1192, %v1194
        %v1198 = vsel %vm646, %v1194, %v1196
        %v1202 = vsel %vm1025, %v1190, 0
        %1204 = vmatpush.msra.mxu0 0.0
        %1205 = vmatpush.msra.mxu0 0.0
        %1206 = vmatpush.msra.mxu0 0.0
        %1207 = vmatpush.msra.mxu0 0.0
        %1208 = vmatpush.msra.mxu0 0.0
        %1209 = vmatpush.msra.mxu0 0.0
        %1210 = vmatpush.msra.mxu0 0.0
        %1211 = vmatpush.msra.mxu0 0.0
        %1212 = vmatpush.msra.mxu0 0.0
        %1213 = vmatpush.msra.mxu0 0.0
        %1214 = vmatpush.msra.mxu0 0.0
        %1215 = vmatpush.msra.mxu0 0.0
        %1216 = vmatpush.msra.mxu0 0.0
        %1217 = vmatpush.msra.mxu0 0.0
        %1218 = vmatpush.msra.mxu0 0.0
        %1219 = vmatpush.msra.mxu0 %v1197
        %1220 = vmatmul.f32.gmra.mxu0 %v1202
        %v1221 = vpop.f32.mrf.mxu0
        %v1222 = vadd.f32 0.0, %v1221
        %1223 = vdwg.mxu0
        %1224 = vmatpush.msra.mxu0 0.0
        %1225 = vmatpush.msra.mxu0 0.0
        %1226 = vmatpush.msra.mxu0 0.0
        %1227 = vmatpush.msra.mxu0 0.0
        %1228 = vmatpush.msra.mxu0 0.0
        %1229 = vmatpush.msra.mxu0 0.0
        %1230 = vmatpush.msra.mxu0 0.0
        %1231 = vmatpush.msra.mxu0 0.0
        %1232 = vmatpush.msra.mxu0 0.0
        %1233 = vmatpush.msra.mxu0 0.0
        %1234 = vmatpush.msra.mxu0 0.0
        %1235 = vmatpush.msra.mxu0 0.0
        %1236 = vmatpush.msra.mxu0 0.0
        %1237 = vmatpush.msra.mxu0 0.0
        %1238 = vmatpush.msra.mxu0 0.0
        %1239 = vmatpush.msra.mxu0 %v1198
        %1240 = vmatmul.f32.gmra.mxu0 %v1202
        %v1241 = vpop.f32.mrf.mxu0
        %v1242 = vadd.f32 0.0, %v1241
        %1243 = vdwg.mxu0
        %1244 = vrot.lane.b32.xlu0 %v1018, 17
        %v1245 = vpop.permute.xlu0 %1244
        %1246 = vrot.lane.b32.xlu0 %v1019, 17
        %v1247 = vpop.permute.xlu0 %1246
        %1248 = vrot.lane.b32.xlu0 %v1020, 17
        %v1249 = vpop.permute.xlu0 %1248
        %v1250 = vsel %vm702, %v1245, %v1247
        %v1251 = vsel %vm702, %v1247, %v1249
        %v1255 = vsel %vm1025, %v1188, 0
        %1257 = vmatpush.msra.mxu0 0.0
        %1258 = vmatpush.msra.mxu0 0.0
        %1259 = vmatpush.msra.mxu0 0.0
        %1260 = vmatpush.msra.mxu0 0.0
        %1261 = vmatpush.msra.mxu0 0.0
        %1262 = vmatpush.msra.mxu0 0.0
        %1263 = vmatpush.msra.mxu0 0.0
        %1264 = vmatpush.msra.mxu0 0.0
        %1265 = vmatpush.msra.mxu0 0.0
        %1266 = vmatpush.msra.mxu0 0.0
        %1267 = vmatpush.msra.mxu0 0.0
        %1268 = vmatpush.msra.mxu0 0.0
        %1269 = vmatpush.msra.mxu0 0.0
        %1270 = vmatpush.msra.mxu0 0.0
        %1271 = vmatpush.msra.mxu0 0.0
        %1272 = vmatpush.msra.mxu0 %v1250
        %1273 = vmatmul.f32.gmra.mxu0 %v1255
        %v1274 = vpop.f32.mrf.mxu0
        %v1275 = vadd.f32 %v1222, %v1274
        %1276 = vdwg.mxu0
        %1277 = vmatpush.msra.mxu0 0.0
        %1278 = vmatpush.msra.mxu0 0.0
        %1279 = vmatpush.msra.mxu0 0.0
        %1280 = vmatpush.msra.mxu0 0.0
        %1281 = vmatpush.msra.mxu0 0.0
        %1282 = vmatpush.msra.mxu0 0.0
        %1283 = vmatpush.msra.mxu0 0.0
        %1284 = vmatpush.msra.mxu0 0.0
        %1285 = vmatpush.msra.mxu0 0.0
        %1286 = vmatpush.msra.mxu0 0.0
        %1287 = vmatpush.msra.mxu0 0.0
        %1288 = vmatpush.msra.mxu0 0.0
        %1289 = vmatpush.msra.mxu0 0.0
        %1290 = vmatpush.msra.mxu0 0.0
        %1291 = vmatpush.msra.mxu0 0.0
        %1292 = vmatpush.msra.mxu0 %v1251
        %1293 = vmatmul.f32.gmra.mxu0 %v1255
        %v1294 = vpop.f32.mrf.mxu0
        %v1295 = vadd.f32 %v1242, %v1294
        %1296 = vdwg.mxu0
        %s1297 = scalar_lea.vmem %s2, 24
        %v1298 = vld [vmem:[%s1297] sm:$0xf]
        %1299 = vrot.lane.b32.xlu0 %v1125, 113
        %v1300 = vpop.permute.xlu0 %1299
        %1301 = vrot.lane.b32.xlu0 %v1126, 113
        %v1302 = vpop.permute.xlu0 %1301
        %1303 = vrot.lane.b32.xlu0 %v1127, 113
        %v1304 = vpop.permute.xlu0 %1303
        %v1305 = vsel %vm760, %v1300, %v1302
        %v1306 = vsel %vm760, %v1302, %v1304
        %v1310 = vsel %vm1025, %v1298, 0
        %1312 = vmatpush.msra.mxu0 0.0
        %1313 = vmatpush.msra.mxu0 0.0
        %1314 = vmatpush.msra.mxu0 0.0
        %1315 = vmatpush.msra.mxu0 0.0
        %1316 = vmatpush.msra.mxu0 0.0
        %1317 = vmatpush.msra.mxu0 0.0
        %1318 = vmatpush.msra.mxu0 0.0
        %1319 = vmatpush.msra.mxu0 0.0
        %1320 = vmatpush.msra.mxu0 0.0
        %1321 = vmatpush.msra.mxu0 0.0
        %1322 = vmatpush.msra.mxu0 0.0
        %1323 = vmatpush.msra.mxu0 0.0
        %1324 = vmatpush.msra.mxu0 0.0
        %1325 = vmatpush.msra.mxu0 0.0
        %1326 = vmatpush.msra.mxu0 0.0
        %1327 = vmatpush.msra.mxu0 %v1305
        %1328 = vmatmul.f32.gmra.mxu0 %v1310
        %v1329 = vpop.f32.mrf.mxu0
        %v1330 = vadd.f32 0.0, %v1329
        %1331 = vdwg.mxu0
        %1332 = vmatpush.msra.mxu0 0.0
        %1333 = vmatpush.msra.mxu0 0.0
        %1334 = vmatpush.msra.mxu0 0.0
        %1335 = vmatpush.msra.mxu0 0.0
        %1336 = vmatpush.msra.mxu0 0.0
        %1337 = vmatpush.msra.mxu0 0.0
        %1338 = vmatpush.msra.mxu0 0.0
        %1339 = vmatpush.msra.mxu0 0.0
        %1340 = vmatpush.msra.mxu0 0.0
        %1341 = vmatpush.msra.mxu0 0.0
        %1342 = vmatpush.msra.mxu0 0.0
        %1343 = vmatpush.msra.mxu0 0.0
        %1344 = vmatpush.msra.mxu0 0.0
        %1345 = vmatpush.msra.mxu0 0.0
        %1346 = vmatpush.msra.mxu0 0.0
        %1347 = vmatpush.msra.mxu0 %v1306
        %1348 = vmatmul.f32.gmra.mxu0 %v1310
        %v1349 = vpop.f32.mrf.mxu0
        %v1350 = vadd.f32 0.0, %v1349
        %1351 = vdwg.mxu0
        %v1352 = vadd.f32 %v1275, %v1330
        %v1353 = vadd.f32 %v1295, %v1350
        %v1354 = vmul.f32 %v448, %v1352
        %v1355 = vmul.f32 %v449, %v1353
        %v1356 = vadd.f32 %v1186, %v1354
        %v1357 = vadd.f32 %v1187, %v1355
        %s1358 = scalar_lea.vmem %s2, 8
        %v1359 = vld [vmem:[%s1358] sm:$0xf]
        %s1360 = scalar_lea.vmem %s2, 20
        %v1361 = vld [vmem:[%s1360] sm:$0xf]
        %1362 = vrot.lane.b32.xlu0 %v1125, 127
        %v1363 = vpop.permute.xlu0 %1362
        %1364 = vrot.lane.b32.xlu0 %v1126, 127
        %v1365 = vpop.permute.xlu0 %1364
        %1366 = vrot.lane.b32.xlu0 %v1127, 127
        %v1367 = vpop.permute.xlu0 %1366
        %v1368 = vsel %vm826, %v1363, %v1365
        %v1369 = vsel %vm826, %v1365, %v1367
        %v1373 = vsel %vm1025, %v1361, 0
        %1375 = vmatpush.msra.mxu0 0.0
        %1376 = vmatpush.msra.mxu0 0.0
        %1377 = vmatpush.msra.mxu0 0.0
        %1378 = vmatpush.msra.mxu0 0.0
        %1379 = vmatpush.msra.mxu0 0.0
        %1380 = vmatpush.msra.mxu0 0.0
        %1381 = vmatpush.msra.mxu0 0.0
        %1382 = vmatpush.msra.mxu0 0.0
        %1383 = vmatpush.msra.mxu0 0.0
        %1384 = vmatpush.msra.mxu0 0.0
        %1385 = vmatpush.msra.mxu0 0.0
        %1386 = vmatpush.msra.mxu0 0.0
        %1387 = vmatpush.msra.mxu0 0.0
        %1388 = vmatpush.msra.mxu0 0.0
        %1389 = vmatpush.msra.mxu0 0.0
        %1390 = vmatpush.msra.mxu0 %v1368
        %1391 = vmatmul.f32.gmra.mxu0 %v1373
        %v1392 = vpop.f32.mrf.mxu0
        %v1393 = vadd.f32 0.0, %v1392
        %1394 = vdwg.mxu0
        %1395 = vmatpush.msra.mxu0 0.0
        %1396 = vmatpush.msra.mxu0 0.0
        %1397 = vmatpush.msra.mxu0 0.0
        %1398 = vmatpush.msra.mxu0 0.0
        %1399 = vmatpush.msra.mxu0 0.0
        %1400 = vmatpush.msra.mxu0 0.0
        %1401 = vmatpush.msra.mxu0 0.0
        %1402 = vmatpush.msra.mxu0 0.0
        %1403 = vmatpush.msra.mxu0 0.0
        %1404 = vmatpush.msra.mxu0 0.0
        %1405 = vmatpush.msra.mxu0 0.0
        %1406 = vmatpush.msra.mxu0 0.0
        %1407 = vmatpush.msra.mxu0 0.0
        %1408 = vmatpush.msra.mxu0 0.0
        %1409 = vmatpush.msra.mxu0 0.0
        %1410 = vmatpush.msra.mxu0 %v1369
        %1411 = vmatmul.f32.gmra.mxu0 %v1373
        %v1412 = vpop.f32.mrf.mxu0
        %v1413 = vadd.f32 0.0, %v1412
        %1414 = vdwg.mxu0
        %1415 = vrot.lane.b32.xlu0 %v1018, 15
        %v1416 = vpop.permute.xlu0 %1415
        %1417 = vrot.lane.b32.xlu0 %v1019, 15
        %v1418 = vpop.permute.xlu0 %1417
        %1419 = vrot.lane.b32.xlu0 %v1020, 15
        %v1420 = vpop.permute.xlu0 %1419
        %v1421 = vsel %vm882, %v1416, %v1418
        %v1422 = vsel %vm882, %v1418, %v1420
        %v1426 = vsel %vm1025, %v1359, 0
        %1428 = vmatpush.msra.mxu0 0.0
        %1429 = vmatpush.msra.mxu0 0.0
        %1430 = vmatpush.msra.mxu0 0.0
        %1431 = vmatpush.msra.mxu0 0.0
        %1432 = vmatpush.msra.mxu0 0.0
        %1433 = vmatpush.msra.mxu0 0.0
        %1434 = vmatpush.msra.mxu0 0.0
        %1435 = vmatpush.msra.mxu0 0.0
        %1436 = vmatpush.msra.mxu0 0.0
        %1437 = vmatpush.msra.mxu0 0.0
        %1438 = vmatpush.msra.mxu0 0.0
        %1439 = vmatpush.msra.mxu0 0.0
        %1440 = vmatpush.msra.mxu0 0.0
        %1441 = vmatpush.msra.mxu0 0.0
        %1442 = vmatpush.msra.mxu0 0.0
        %1443 = vmatpush.msra.mxu0 %v1421
        %1444 = vmatmul.f32.gmra.mxu0 %v1426
        %v1445 = vpop.f32.mrf.mxu0
        %v1446 = vadd.f32 %v1393, %v1445
        %1447 = vdwg.mxu0
        %1448 = vmatpush.msra.mxu0 0.0
        %1449 = vmatpush.msra.mxu0 0.0
        %1450 = vmatpush.msra.mxu0 0.0
        %1451 = vmatpush.msra.mxu0 0.0
        %1452 = vmatpush.msra.mxu0 0.0
        %1453 = vmatpush.msra.mxu0 0.0
        %1454 = vmatpush.msra.mxu0 0.0
        %1455 = vmatpush.msra.mxu0 0.0
        %1456 = vmatpush.msra.mxu0 0.0
        %1457 = vmatpush.msra.mxu0 0.0
        %1458 = vmatpush.msra.mxu0 0.0
        %1459 = vmatpush.msra.mxu0 0.0
        %1460 = vmatpush.msra.mxu0 0.0
        %1461 = vmatpush.msra.mxu0 0.0
        %1462 = vmatpush.msra.mxu0 0.0
        %1463 = vmatpush.msra.mxu0 %v1422
        %1464 = vmatmul.f32.gmra.mxu0 %v1426
        %v1465 = vpop.f32.mrf.mxu0
        %v1466 = vadd.f32 %v1413, %v1465
        %1467 = vdwg.mxu0
        %s1468 = scalar_lea.vmem %s2, 32
        %v1469 = vld [vmem:[%s1468] sm:$0xf]
        %1470 = vrot.lane.b32.xlu0 %v1125, 111
        %v1471 = vpop.permute.xlu0 %1470
        %1472 = vrot.lane.b32.xlu0 %v1126, 111
        %v1473 = vpop.permute.xlu0 %1472
        %1474 = vrot.lane.b32.xlu0 %v1127, 111
        %v1475 = vpop.permute.xlu0 %1474
        %v1476 = vsel %vm940, %v1471, %v1473
        %v1477 = vsel %vm940, %v1473, %v1475
        %v1481 = vsel %vm1025, %v1469, 0
        %1483 = vmatpush.msra.mxu0 0.0
        %1484 = vmatpush.msra.mxu0 0.0
        %1485 = vmatpush.msra.mxu0 0.0
        %1486 = vmatpush.msra.mxu0 0.0
        %1487 = vmatpush.msra.mxu0 0.0
        %1488 = vmatpush.msra.mxu0 0.0
        %1489 = vmatpush.msra.mxu0 0.0
        %1490 = vmatpush.msra.mxu0 0.0
        %1491 = vmatpush.msra.mxu0 0.0
        %1492 = vmatpush.msra.mxu0 0.0
        %1493 = vmatpush.msra.mxu0 0.0
        %1494 = vmatpush.msra.mxu0 0.0
        %1495 = vmatpush.msra.mxu0 0.0
        %1496 = vmatpush.msra.mxu0 0.0
        %1497 = vmatpush.msra.mxu0 0.0
        %1498 = vmatpush.msra.mxu0 %v1476
        %1499 = vmatmul.f32.gmra.mxu0 %v1481
        %v1500 = vpop.f32.mrf.mxu0
        %v1501 = vadd.f32 0.0, %v1500
        %1502 = vdwg.mxu0
        %1503 = vmatpush.msra.mxu0 0.0
        %1504 = vmatpush.msra.mxu0 0.0
        %1505 = vmatpush.msra.mxu0 0.0
        %1506 = vmatpush.msra.mxu0 0.0
        %1507 = vmatpush.msra.mxu0 0.0
        %1508 = vmatpush.msra.mxu0 0.0
        %1509 = vmatpush.msra.mxu0 0.0
        %1510 = vmatpush.msra.mxu0 0.0
        %1511 = vmatpush.msra.mxu0 0.0
        %1512 = vmatpush.msra.mxu0 0.0
        %1513 = vmatpush.msra.mxu0 0.0
        %1514 = vmatpush.msra.mxu0 0.0
        %1515 = vmatpush.msra.mxu0 0.0
        %1516 = vmatpush.msra.mxu0 0.0
        %1517 = vmatpush.msra.mxu0 0.0
        %1518 = vmatpush.msra.mxu0 %v1477
        %1519 = vmatmul.f32.gmra.mxu0 %v1481
        %v1520 = vpop.f32.mrf.mxu0
        %v1521 = vadd.f32 0.0, %v1520
        %1522 = vdwg.mxu0
        %v1523 = vadd.f32 %v1446, %v1501
        %v1524 = vadd.f32 %v1466, %v1521
        %v1525 = vmul.f32 %v454, %v1523
        %v1526 = vmul.f32 %v455, %v1524
        %v1527 = vadd.f32 %v1356, %v1525
        %v1528 = vadd.f32 %v1357, %v1526
        %v1529 = vld [vmem:[%s7] sm:$0xf]
        %1531 = vset.pattern.permute.xlu0 0
        %1532 = vperm.xlu0 %1531, %v1529
        %v1533 = vpop.permute.xlu0 %1532
        %v1535 = vadd.f32 %v1527, %v1533
        %v1536 = vadd.f32 %v1528, %v1533
        %vm1537 = vcmp.ge.f32.partialorder %v1535, 0.0
        %vm1538 = vcmp.ge.f32.partialorder %v1536, 0.0
        %v1539 = vmul.f32 %v1535, 0.01
        %v1540 = vmul.f32 %v1536, 0.01
        %v1541 = vsel %vm1537, %v1535, %v1539
        %v1542 = vsel %vm1538, %v1536, %v1540
        %1543 = vst [vmem:[#allocation2 + $0x28] sm:$0xf] %v1541
        %1544 = vst [vmem:[#allocation2 + $0x30] sm:$0xf] %v1542
        %v1545 = vld [vmem:[#allocation2] sm:$0xff]
        %v1546 = vld [vmem:[#allocation2 + $0x8] sm:$0xff]
        %v1547 = vld [vmem:[#allocation2 + $0x10] sm:$0xff]
        %v1548 = vld [vmem:[#allocation2 + $0x20] sm:$0xf]
        %v1549 = vld [vmem:[#allocation2 + $0x28] sm:$0xf]
        %v1550 = vld [vmem:[#allocation2 + $0x30] sm:$0xf]
        %s1551 = scalar_lea.vmem %s3, 4
        %v1552 = vld [vmem:[%s1551] sm:$0xf]
        %s1553 = scalar_lea.vmem %s3, 16
        %v1554 = vld [vmem:[%s1553] sm:$0xf]
        %vm1555 = vcmask 97280
        %v1557 = vsel %vm1555, %v1554, 0
        %v1560 = vsel %vm467, %v1549, 0
        %v1563 = vsel %vm467, %v1550, 0
        %1565 = vmatpush.msra.mxu0 0.0
        %1566 = vmatpush.msra.mxu0 0.0
        %1567 = vmatpush.msra.mxu0 0.0
        %1568 = vmatpush.msra.mxu0 0.0
        %1569 = vmatpush.msra.mxu0 0.0
        %1570 = vmatpush.msra.mxu0 0.0
        %1571 = vmatpush.msra.mxu0 0.0
        %1572 = vmatpush.msra.mxu0 0.0
        %1573 = vmatpush.msra.mxu0 0.0
        %1574 = vmatpush.msra.mxu0 0.0
        %1575 = vmatpush.msra.mxu0 0.0
        %1576 = vmatpush.msra.mxu0 0.0
        %1577 = vmatpush.msra.mxu0 0.0
        %1578 = vmatpush.msra.mxu0 0.0
        %1579 = vmatpush.msra.mxu0 %v1560
        %1580 = vmatpush.msra.mxu0 %v1546
        %1581 = vmatmul.f32.gmra.mxu0 %v1557
        %v1582 = vpop.f32.mrf.mxu0
        %v1583 = vadd.f32 0.0, %v1582
        %1584 = vdwg.mxu0
        %1585 = vmatpush.msra.mxu0 0.0
        %1586 = vmatpush.msra.mxu0 0.0
        %1587 = vmatpush.msra.mxu0 0.0
        %1588 = vmatpush.msra.mxu0 0.0
        %1589 = vmatpush.msra.mxu0 0.0
        %1590 = vmatpush.msra.mxu0 0.0
        %1591 = vmatpush.msra.mxu0 0.0
        %1592 = vmatpush.msra.mxu0 0.0
        %1593 = vmatpush.msra.mxu0 0.0
        %1594 = vmatpush.msra.mxu0 0.0
        %1595 = vmatpush.msra.mxu0 0.0
        %1596 = vmatpush.msra.mxu0 0.0
        %1597 = vmatpush.msra.mxu0 0.0
        %1598 = vmatpush.msra.mxu0 0.0
        %1599 = vmatpush.msra.mxu0 %v1563
        %1600 = vmatpush.msra.mxu0 %v1547
        %1601 = vmatmul.f32.gmra.mxu0 %v1557
        %v1602 = vpop.f32.mrf.mxu0
        %v1603 = vadd.f32 0.0, %v1602
        %1604 = vdwg.mxu0
        %1609 = vrot.lane.b32.xlu0 %v1545, 16
        %v1610 = vpop.permute.xlu0 %1609
        %1611 = vrot.lane.b32.xlu0 %v1546, 16
        %v1612 = vpop.permute.xlu0 %1611
        %1613 = vrot.lane.b32.xlu0 %v1547, 16
        %v1614 = vpop.permute.xlu0 %1613
        %1615 = vrot.lane.b32.xlu0 %v1548, 16
        %v1616 = vpop.permute.xlu0 %1615
        %1617 = vrot.lane.b32.xlu0 %v1549, 16
        %v1618 = vpop.permute.xlu0 %1617
        %1619 = vrot.lane.b32.xlu0 %v1550, 16
        %v1620 = vpop.permute.xlu0 %1619
        %v1621 = vsel %vm521, %v1610, %v1612
        %v1622 = vsel %vm521, %v1612, %v1614
        %v1623 = vsel %vm521, %v1616, %v1618
        %v1624 = vsel %vm521, %v1618, %v1620
        %v1628 = vsel %vm1555, %v1552, 0
        %v1630 = vsel %vm467, %v1623, 0
        %v1632 = vsel %vm467, %v1624, 0
        %1634 = vmatpush.msra.mxu0 0.0
        %1635 = vmatpush.msra.mxu0 0.0
        %1636 = vmatpush.msra.mxu0 0.0
        %1637 = vmatpush.msra.mxu0 0.0
        %1638 = vmatpush.msra.mxu0 0.0
        %1639 = vmatpush.msra.mxu0 0.0
        %1640 = vmatpush.msra.mxu0 0.0
        %1641 = vmatpush.msra.mxu0 0.0
        %1642 = vmatpush.msra.mxu0 0.0
        %1643 = vmatpush.msra.mxu0 0.0
        %1644 = vmatpush.msra.mxu0 0.0
        %1645 = vmatpush.msra.mxu0 0.0
        %1646 = vmatpush.msra.mxu0 0.0
        %1647 = vmatpush.msra.mxu0 0.0
        %1648 = vmatpush.msra.mxu0 %v1630
        %1649 = vmatpush.msra.mxu0 %v1621
        %1650 = vmatmul.f32.gmra.mxu0 %v1628
        %v1651 = vpop.f32.mrf.mxu0
        %v1652 = vadd.f32 %v1583, %v1651
        %1653 = vdwg.mxu0
        %1654 = vmatpush.msra.mxu0 0.0
        %1655 = vmatpush.msra.mxu0 0.0
        %1656 = vmatpush.msra.mxu0 0.0
        %1657 = vmatpush.msra.mxu0 0.0
        %1658 = vmatpush.msra.mxu0 0.0
        %1659 = vmatpush.msra.mxu0 0.0
        %1660 = vmatpush.msra.mxu0 0.0
        %1661 = vmatpush.msra.mxu0 0.0
        %1662 = vmatpush.msra.mxu0 0.0
        %1663 = vmatpush.msra.mxu0 0.0
        %1664 = vmatpush.msra.mxu0 0.0
        %1665 = vmatpush.msra.mxu0 0.0
        %1666 = vmatpush.msra.mxu0 0.0
        %1667 = vmatpush.msra.mxu0 0.0
        %1668 = vmatpush.msra.mxu0 %v1632
        %1669 = vmatpush.msra.mxu0 %v1622
        %1670 = vmatmul.f32.gmra.mxu0 %v1628
        %v1671 = vpop.f32.mrf.mxu0
        %v1672 = vadd.f32 %v1603, %v1671
        %1673 = vdwg.mxu0
        %v1674 = vld [vmem:[#allocation2 + $0x8] sm:$0xff]
        %v1675 = vld [vmem:[#allocation2 + $0x10] sm:$0xff]
        %v1676 = vld [vmem:[#allocation2 + $0x18] sm:$0xff]
        %v1677 = vld [vmem:[#allocation2 + $0x28] sm:$0xf]
        %v1678 = vld [vmem:[#allocation2 + $0x30] sm:$0xf]
        %v1679 = vld [vmem:[#allocation2 + $0x38] sm:$0xf]
        %s1680 = scalar_lea.vmem %s3, 28
        %v1681 = vld [vmem:[%s1680] sm:$0xf]
        %1688 = vrot.lane.b32.xlu0 %v1674, 112
        %v1689 = vpop.permute.xlu0 %1688
        %1690 = vrot.lane.b32.xlu0 %v1675, 112
        %v1691 = vpop.permute.xlu0 %1690
        %1692 = vrot.lane.b32.xlu0 %v1676, 112
        %v1693 = vpop.permute.xlu0 %1692
        %1694 = vrot.lane.b32.xlu0 %v1677, 112
        %v1695 = vpop.permute.xlu0 %1694
        %1696 = vrot.lane.b32.xlu0 %v1678, 112
        %v1697 = vpop.permute.xlu0 %1696
        %1698 = vrot.lane.b32.xlu0 %v1679, 112
        %v1699 = vpop.permute.xlu0 %1698
        %v1700 = vsel %vm585, %v1689, %v1691
        %v1701 = vsel %vm585, %v1691, %v1693
        %v1702 = vsel %vm585, %v1695, %v1697
        %v1703 = vsel %vm585, %v1697, %v1699
        %v1707 = vsel %vm1555, %v1681, 0
        %v1709 = vsel %vm467, %v1702, 0
        %v1711 = vsel %vm467, %v1703, 0
        %1713 = vmatpush.msra.mxu0 0.0
        %1714 = vmatpush.msra.mxu0 0.0
        %1715 = vmatpush.msra.mxu0 0.0
        %1716 = vmatpush.msra.mxu0 0.0
        %1717 = vmatpush.msra.mxu0 0.0
        %1718 = vmatpush.msra.mxu0 0.0
        %1719 = vmatpush.msra.mxu0 0.0
        %1720 = vmatpush.msra.mxu0 0.0
        %1721 = vmatpush.msra.mxu0 0.0
        %1722 = vmatpush.msra.mxu0 0.0
        %1723 = vmatpush.msra.mxu0 0.0
        %1724 = vmatpush.msra.mxu0 0.0
        %1725 = vmatpush.msra.mxu0 0.0
        %1726 = vmatpush.msra.mxu0 0.0
        %1727 = vmatpush.msra.mxu0 %v1709
        %1728 = vmatpush.msra.mxu0 %v1700
        %1729 = vmatmul.f32.gmra.mxu0 %v1707
        %v1730 = vpop.f32.mrf.mxu0
        %v1731 = vadd.f32 0.0, %v1730
        %1732 = vdwg.mxu0
        %1733 = vmatpush.msra.mxu0 0.0
        %1734 = vmatpush.msra.mxu0 0.0
        %1735 = vmatpush.msra.mxu0 0.0
        %1736 = vmatpush.msra.mxu0 0.0
        %1737 = vmatpush.msra.mxu0 0.0
        %1738 = vmatpush.msra.mxu0 0.0
        %1739 = vmatpush.msra.mxu0 0.0
        %1740 = vmatpush.msra.mxu0 0.0
        %1741 = vmatpush.msra.mxu0 0.0
        %1742 = vmatpush.msra.mxu0 0.0
        %1743 = vmatpush.msra.mxu0 0.0
        %1744 = vmatpush.msra.mxu0 0.0
        %1745 = vmatpush.msra.mxu0 0.0
        %1746 = vmatpush.msra.mxu0 0.0
        %1747 = vmatpush.msra.mxu0 %v1711
        %1748 = vmatpush.msra.mxu0 %v1701
        %1749 = vmatmul.f32.gmra.mxu0 %v1707
        %v1750 = vpop.f32.mrf.mxu0
        %v1751 = vadd.f32 0.0, %v1750
        %1752 = vdwg.mxu0
        %v1753 = vadd.f32 %v1652, %v1731
        %v1754 = vadd.f32 %v1672, %v1751
        %v1755 = vld [vmem:[%s3] sm:$0xf]
        %s1756 = scalar_lea.vmem %s3, 12
        %v1757 = vld [vmem:[%s1756] sm:$0xf]
        %1758 = vrot.lane.b32.xlu0 %v1545, 1
        %v1759 = vpop.permute.xlu0 %1758
        %1760 = vrot.lane.b32.xlu0 %v1546, 1
        %v1761 = vpop.permute.xlu0 %1760
        %1762 = vrot.lane.b32.xlu0 %v1547, 1
        %v1763 = vpop.permute.xlu0 %1762
        %1764 = vrot.lane.b32.xlu0 %v1548, 1
        %v1765 = vpop.permute.xlu0 %1764
        %1766 = vrot.lane.b32.xlu0 %v1549, 1
        %v1767 = vpop.permute.xlu0 %1766
        %1768 = vrot.lane.b32.xlu0 %v1550, 1
        %v1769 = vpop.permute.xlu0 %1768
        %v1770 = vsel %vm646, %v1759, %v1761
        %v1771 = vsel %vm646, %v1761, %v1763
        %v1772 = vsel %vm646, %v1765, %v1767
        %v1773 = vsel %vm646, %v1767, %v1769
        %v1777 = vsel %vm1555, %v1757, 0
        %v1779 = vsel %vm467, %v1772, 0
        %v1781 = vsel %vm467, %v1773, 0
        %1783 = vmatpush.msra.mxu0 0.0
        %1784 = vmatpush.msra.mxu0 0.0
        %1785 = vmatpush.msra.mxu0 0.0
        %1786 = vmatpush.msra.mxu0 0.0
        %1787 = vmatpush.msra.mxu0 0.0
        %1788 = vmatpush.msra.mxu0 0.0
        %1789 = vmatpush.msra.mxu0 0.0
        %1790 = vmatpush.msra.mxu0 0.0
        %1791 = vmatpush.msra.mxu0 0.0
        %1792 = vmatpush.msra.mxu0 0.0
        %1793 = vmatpush.msra.mxu0 0.0
        %1794 = vmatpush.msra.mxu0 0.0
        %1795 = vmatpush.msra.mxu0 0.0
        %1796 = vmatpush.msra.mxu0 0.0
        %1797 = vmatpush.msra.mxu0 %v1779
        %1798 = vmatpush.msra.mxu0 %v1770
        %1799 = vmatmul.f32.gmra.mxu0 %v1777
        %v1800 = vpop.f32.mrf.mxu0
        %v1801 = vadd.f32 0.0, %v1800
        %1802 = vdwg.mxu0
        %1803 = vmatpush.msra.mxu0 0.0
        %1804 = vmatpush.msra.mxu0 0.0
        %1805 = vmatpush.msra.mxu0 0.0
        %1806 = vmatpush.msra.mxu0 0.0
        %1807 = vmatpush.msra.mxu0 0.0
        %1808 = vmatpush.msra.mxu0 0.0
        %1809 = vmatpush.msra.mxu0 0.0
        %1810 = vmatpush.msra.mxu0 0.0
        %1811 = vmatpush.msra.mxu0 0.0
        %1812 = vmatpush.msra.mxu0 0.0
        %1813 = vmatpush.msra.mxu0 0.0
        %1814 = vmatpush.msra.mxu0 0.0
        %1815 = vmatpush.msra.mxu0 0.0
        %1816 = vmatpush.msra.mxu0 0.0
        %1817 = vmatpush.msra.mxu0 %v1781
        %1818 = vmatpush.msra.mxu0 %v1771
        %1819 = vmatmul.f32.gmra.mxu0 %v1777
        %v1820 = vpop.f32.mrf.mxu0
        %v1821 = vadd.f32 0.0, %v1820
        %1822 = vdwg.mxu0
        %1823 = vrot.lane.b32.xlu0 %v1545, 17
        %v1824 = vpop.permute.xlu0 %1823
        %1825 = vrot.lane.b32.xlu0 %v1546, 17
        %v1826 = vpop.permute.xlu0 %1825
        %1827 = vrot.lane.b32.xlu0 %v1547, 17
        %v1828 = vpop.permute.xlu0 %1827
        %1829 = vrot.lane.b32.xlu0 %v1548, 17
        %v1830 = vpop.permute.xlu0 %1829
        %1831 = vrot.lane.b32.xlu0 %v1549, 17
        %v1832 = vpop.permute.xlu0 %1831
        %1833 = vrot.lane.b32.xlu0 %v1550, 17
        %v1834 = vpop.permute.xlu0 %1833
        %v1835 = vsel %vm702, %v1824, %v1826
        %v1836 = vsel %vm702, %v1826, %v1828
        %v1837 = vsel %vm702, %v1830, %v1832
        %v1838 = vsel %vm702, %v1832, %v1834
        %v1842 = vsel %vm1555, %v1755, 0
        %v1844 = vsel %vm467, %v1837, 0
        %v1846 = vsel %vm467, %v1838, 0
        %1848 = vmatpush.msra.mxu0 0.0
        %1849 = vmatpush.msra.mxu0 0.0
        %1850 = vmatpush.msra.mxu0 0.0
        %1851 = vmatpush.msra.mxu0 0.0
        %1852 = vmatpush.msra.mxu0 0.0
        %1853 = vmatpush.msra.mxu0 0.0
        %1854 = vmatpush.msra.mxu0 0.0
        %1855 = vmatpush.msra.mxu0 0.0
        %1856 = vmatpush.msra.mxu0 0.0
        %1857 = vmatpush.msra.mxu0 0.0
        %1858 = vmatpush.msra.mxu0 0.0
        %1859 = vmatpush.msra.mxu0 0.0
        %1860 = vmatpush.msra.mxu0 0.0
        %1861 = vmatpush.msra.mxu0 0.0
        %1862 = vmatpush.msra.mxu0 %v1844
        %1863 = vmatpush.msra.mxu0 %v1835
        %1864 = vmatmul.f32.gmra.mxu0 %v1842
        %v1865 = vpop.f32.mrf.mxu0
        %v1866 = vadd.f32 %v1801, %v1865
        %1867 = vdwg.mxu0
        %1868 = vmatpush.msra.mxu0 0.0
        %1869 = vmatpush.msra.mxu0 0.0
        %1870 = vmatpush.msra.mxu0 0.0
        %1871 = vmatpush.msra.mxu0 0.0
        %1872 = vmatpush.msra.mxu0 0.0
        %1873 = vmatpush.msra.mxu0 0.0
        %1874 = vmatpush.msra.mxu0 0.0
        %1875 = vmatpush.msra.mxu0 0.0
        %1876 = vmatpush.msra.mxu0 0.0
        %1877 = vmatpush.msra.mxu0 0.0
        %1878 = vmatpush.msra.mxu0 0.0
        %1879 = vmatpush.msra.mxu0 0.0
        %1880 = vmatpush.msra.mxu0 0.0
        %1881 = vmatpush.msra.mxu0 0.0
        %1882 = vmatpush.msra.mxu0 %v1846
        %1883 = vmatpush.msra.mxu0 %v1836
        %1884 = vmatmul.f32.gmra.mxu0 %v1842
        %v1885 = vpop.f32.mrf.mxu0
        %v1886 = vadd.f32 %v1821, %v1885
        %1887 = vdwg.mxu0
        %s1888 = scalar_lea.vmem %s3, 24
        %v1889 = vld [vmem:[%s1888] sm:$0xf]
        %1890 = vrot.lane.b32.xlu0 %v1674, 113
        %v1891 = vpop.permute.xlu0 %1890
        %1892 = vrot.lane.b32.xlu0 %v1675, 113
        %v1893 = vpop.permute.xlu0 %1892
        %1894 = vrot.lane.b32.xlu0 %v1676, 113
        %v1895 = vpop.permute.xlu0 %1894
        %1896 = vrot.lane.b32.xlu0 %v1677, 113
        %v1897 = vpop.permute.xlu0 %1896
        %1898 = vrot.lane.b32.xlu0 %v1678, 113
        %v1899 = vpop.permute.xlu0 %1898
        %1900 = vrot.lane.b32.xlu0 %v1679, 113
        %v1901 = vpop.permute.xlu0 %1900
        %v1902 = vsel %vm760, %v1891, %v1893
        %v1903 = vsel %vm760, %v1893, %v1895
        %v1904 = vsel %vm760, %v1897, %v1899
        %v1905 = vsel %vm760, %v1899, %v1901
        %v1909 = vsel %vm1555, %v1889, 0
        %v1911 = vsel %vm467, %v1904, 0
        %v1913 = vsel %vm467, %v1905, 0
        %1915 = vmatpush.msra.mxu0 0.0
        %1916 = vmatpush.msra.mxu0 0.0
        %1917 = vmatpush.msra.mxu0 0.0
        %1918 = vmatpush.msra.mxu0 0.0
        %1919 = vmatpush.msra.mxu0 0.0
        %1920 = vmatpush.msra.mxu0 0.0
        %1921 = vmatpush.msra.mxu0 0.0
        %1922 = vmatpush.msra.mxu0 0.0
        %1923 = vmatpush.msra.mxu0 0.0
        %1924 = vmatpush.msra.mxu0 0.0
        %1925 = vmatpush.msra.mxu0 0.0
        %1926 = vmatpush.msra.mxu0 0.0
        %1927 = vmatpush.msra.mxu0 0.0
        %1928 = vmatpush.msra.mxu0 0.0
        %1929 = vmatpush.msra.mxu0 %v1911
        %1930 = vmatpush.msra.mxu0 %v1902
        %1931 = vmatmul.f32.gmra.mxu0 %v1909
        %v1932 = vpop.f32.mrf.mxu0
        %v1933 = vadd.f32 0.0, %v1932
        %1934 = vdwg.mxu0
        %1935 = vmatpush.msra.mxu0 0.0
        %1936 = vmatpush.msra.mxu0 0.0
        %1937 = vmatpush.msra.mxu0 0.0
        %1938 = vmatpush.msra.mxu0 0.0
        %1939 = vmatpush.msra.mxu0 0.0
        %1940 = vmatpush.msra.mxu0 0.0
        %1941 = vmatpush.msra.mxu0 0.0
        %1942 = vmatpush.msra.mxu0 0.0
        %1943 = vmatpush.msra.mxu0 0.0
        %1944 = vmatpush.msra.mxu0 0.0
        %1945 = vmatpush.msra.mxu0 0.0
        %1946 = vmatpush.msra.mxu0 0.0
        %1947 = vmatpush.msra.mxu0 0.0
        %1948 = vmatpush.msra.mxu0 0.0
        %1949 = vmatpush.msra.mxu0 %v1913
        %1950 = vmatpush.msra.mxu0 %v1903
        %1951 = vmatmul.f32.gmra.mxu0 %v1909
        %v1952 = vpop.f32.mrf.mxu0
        %v1953 = vadd.f32 0.0, %v1952
        %1954 = vdwg.mxu0
        %v1955 = vadd.f32 %v1866, %v1933
        %v1956 = vadd.f32 %v1886, %v1953
        %v1957 = vmul.f32 %v448, %v1955
        %v1958 = vmul.f32 %v449, %v1956
        %v1959 = vadd.f32 %v1753, %v1957
        %v1960 = vadd.f32 %v1754, %v1958
        %s1961 = scalar_lea.vmem %s3, 8
        %v1962 = vld [vmem:[%s1961] sm:$0xf]
        %s1963 = scalar_lea.vmem %s3, 20
        %v1964 = vld [vmem:[%s1963] sm:$0xf]
        %1965 = vrot.lane.b32.xlu0 %v1674, 127
        %v1966 = vpop.permute.xlu0 %1965
        %1967 = vrot.lane.b32.xlu0 %v1675, 127
        %v1968 = vpop.permute.xlu0 %1967
        %1969 = vrot.lane.b32.xlu0 %v1676, 127
        %v1970 = vpop.permute.xlu0 %1969
        %1971 = vrot.lane.b32.xlu0 %v1677, 127
        %v1972 = vpop.permute.xlu0 %1971
        %1973 = vrot.lane.b32.xlu0 %v1678, 127
        %v1974 = vpop.permute.xlu0 %1973
        %1975 = vrot.lane.b32.xlu0 %v1679, 127
        %v1976 = vpop.permute.xlu0 %1975
        %v1977 = vsel %vm826, %v1966, %v1968
        %v1978 = vsel %vm826, %v1968, %v1970
        %v1979 = vsel %vm826, %v1972, %v1974
        %v1980 = vsel %vm826, %v1974, %v1976
        %v1984 = vsel %vm1555, %v1964, 0
        %v1986 = vsel %vm467, %v1979, 0
        %v1988 = vsel %vm467, %v1980, 0
        %1990 = vmatpush.msra.mxu0 0.0
        %1991 = vmatpush.msra.mxu0 0.0
        %1992 = vmatpush.msra.mxu0 0.0
        %1993 = vmatpush.msra.mxu0 0.0
        %1994 = vmatpush.msra.mxu0 0.0
        %1995 = vmatpush.msra.mxu0 0.0
        %1996 = vmatpush.msra.mxu0 0.0
        %1997 = vmatpush.msra.mxu0 0.0
        %1998 = vmatpush.msra.mxu0 0.0
        %1999 = vmatpush.msra.mxu0 0.0
        %2000 = vmatpush.msra.mxu0 0.0
        %2001 = vmatpush.msra.mxu0 0.0
        %2002 = vmatpush.msra.mxu0 0.0
        %2003 = vmatpush.msra.mxu0 0.0
        %2004 = vmatpush.msra.mxu0 %v1986
        %2005 = vmatpush.msra.mxu0 %v1977
        %2006 = vmatmul.f32.gmra.mxu0 %v1984
        %v2007 = vpop.f32.mrf.mxu0
        %v2008 = vadd.f32 0.0, %v2007
        %2009 = vdwg.mxu0
        %2010 = vmatpush.msra.mxu0 0.0
        %2011 = vmatpush.msra.mxu0 0.0
        %2012 = vmatpush.msra.mxu0 0.0
        %2013 = vmatpush.msra.mxu0 0.0
        %2014 = vmatpush.msra.mxu0 0.0
        %2015 = vmatpush.msra.mxu0 0.0
        %2016 = vmatpush.msra.mxu0 0.0
        %2017 = vmatpush.msra.mxu0 0.0
        %2018 = vmatpush.msra.mxu0 0.0
        %2019 = vmatpush.msra.mxu0 0.0
        %2020 = vmatpush.msra.mxu0 0.0
        %2021 = vmatpush.msra.mxu0 0.0
        %2022 = vmatpush.msra.mxu0 0.0
        %2023 = vmatpush.msra.mxu0 0.0
        %2024 = vmatpush.msra.mxu0 %v1988
        %2025 = vmatpush.msra.mxu0 %v1978
        %2026 = vmatmul.f32.gmra.mxu0 %v1984
        %v2027 = vpop.f32.mrf.mxu0
        %v2028 = vadd.f32 0.0, %v2027
        %2029 = vdwg.mxu0
        %2030 = vrot.lane.b32.xlu0 %v1545, 15
        %v2031 = vpop.permute.xlu0 %2030
        %2032 = vrot.lane.b32.xlu0 %v1546, 15
        %v2033 = vpop.permute.xlu0 %2032
        %2034 = vrot.lane.b32.xlu0 %v1547, 15
        %v2035 = vpop.permute.xlu0 %2034
        %2036 = vrot.lane.b32.xlu0 %v1548, 15
        %v2037 = vpop.permute.xlu0 %2036
        %2038 = vrot.lane.b32.xlu0 %v1549, 15
        %v2039 = vpop.permute.xlu0 %2038
        %2040 = vrot.lane.b32.xlu0 %v1550, 15
        %v2041 = vpop.permute.xlu0 %2040
        %v2042 = vsel %vm882, %v2031, %v2033
        %v2043 = vsel %vm882, %v2033, %v2035
        %v2044 = vsel %vm882, %v2037, %v2039
        %v2045 = vsel %vm882, %v2039, %v2041
        %v2049 = vsel %vm1555, %v1962, 0
        %v2051 = vsel %vm467, %v2044, 0
        %v2053 = vsel %vm467, %v2045, 0
        %2055 = vmatpush.msra.mxu0 0.0
        %2056 = vmatpush.msra.mxu0 0.0
        %2057 = vmatpush.msra.mxu0 0.0
        %2058 = vmatpush.msra.mxu0 0.0
        %2059 = vmatpush.msra.mxu0 0.0
        %2060 = vmatpush.msra.mxu0 0.0
        %2061 = vmatpush.msra.mxu0 0.0
        %2062 = vmatpush.msra.mxu0 0.0
        %2063 = vmatpush.msra.mxu0 0.0
        %2064 = vmatpush.msra.mxu0 0.0
        %2065 = vmatpush.msra.mxu0 0.0
        %2066 = vmatpush.msra.mxu0 0.0
        %2067 = vmatpush.msra.mxu0 0.0
        %2068 = vmatpush.msra.mxu0 0.0
        %2069 = vmatpush.msra.mxu0 %v2051
        %2070 = vmatpush.msra.mxu0 %v2042
        %2071 = vmatmul.f32.gmra.mxu0 %v2049
        %v2072 = vpop.f32.mrf.mxu0
        %v2073 = vadd.f32 %v2008, %v2072
        %2074 = vdwg.mxu0
        %2075 = vmatpush.msra.mxu0 0.0
        %2076 = vmatpush.msra.mxu0 0.0
        %2077 = vmatpush.msra.mxu0 0.0
        %2078 = vmatpush.msra.mxu0 0.0
        %2079 = vmatpush.msra.mxu0 0.0
        %2080 = vmatpush.msra.mxu0 0.0
        %2081 = vmatpush.msra.mxu0 0.0
        %2082 = vmatpush.msra.mxu0 0.0
        %2083 = vmatpush.msra.mxu0 0.0
        %2084 = vmatpush.msra.mxu0 0.0
        %2085 = vmatpush.msra.mxu0 0.0
        %2086 = vmatpush.msra.mxu0 0.0
        %2087 = vmatpush.msra.mxu0 0.0
        %2088 = vmatpush.msra.mxu0 0.0
        %2089 = vmatpush.msra.mxu0 %v2053
        %2090 = vmatpush.msra.mxu0 %v2043
        %2091 = vmatmul.f32.gmra.mxu0 %v2049
        %v2092 = vpop.f32.mrf.mxu0
        %v2093 = vadd.f32 %v2028, %v2092
        %2094 = vdwg.mxu0
        %s2095 = scalar_lea.vmem %s3, 32
        %v2096 = vld [vmem:[%s2095] sm:$0xf]
        %2097 = vrot.lane.b32.xlu0 %v1674, 111
        %v2098 = vpop.permute.xlu0 %2097
        %2099 = vrot.lane.b32.xlu0 %v1675, 111
        %v2100 = vpop.permute.xlu0 %2099
        %2101 = vrot.lane.b32.xlu0 %v1676, 111
        %v2102 = vpop.permute.xlu0 %2101
        %2103 = vrot.lane.b32.xlu0 %v1677, 111
        %v2104 = vpop.permute.xlu0 %2103
        %2105 = vrot.lane.b32.xlu0 %v1678, 111
        %v2106 = vpop.permute.xlu0 %2105
        %2107 = vrot.lane.b32.xlu0 %v1679, 111
        %v2108 = vpop.permute.xlu0 %2107
        %v2109 = vsel %vm940, %v2098, %v2100
        %v2110 = vsel %vm940, %v2100, %v2102
        %v2111 = vsel %vm940, %v2104, %v2106
        %v2112 = vsel %vm940, %v2106, %v2108
        %v2116 = vsel %vm1555, %v2096, 0
        %v2118 = vsel %vm467, %v2111, 0
        %v2120 = vsel %vm467, %v2112, 0
        %2122 = vmatpush.msra.mxu0 0.0
        %2123 = vmatpush.msra.mxu0 0.0
        %2124 = vmatpush.msra.mxu0 0.0
        %2125 = vmatpush.msra.mxu0 0.0
        %2126 = vmatpush.msra.mxu0 0.0
        %2127 = vmatpush.msra.mxu0 0.0
        %2128 = vmatpush.msra.mxu0 0.0
        %2129 = vmatpush.msra.mxu0 0.0
        %2130 = vmatpush.msra.mxu0 0.0
        %2131 = vmatpush.msra.mxu0 0.0
        %2132 = vmatpush.msra.mxu0 0.0
        %2133 = vmatpush.msra.mxu0 0.0
        %2134 = vmatpush.msra.mxu0 0.0
        %2135 = vmatpush.msra.mxu0 0.0
        %2136 = vmatpush.msra.mxu0 %v2118
        %2137 = vmatpush.msra.mxu0 %v2109
        %2138 = vmatmul.f32.gmra.mxu0 %v2116
        %v2139 = vpop.f32.mrf.mxu0
        %v2140 = vadd.f32 0.0, %v2139
        %2141 = vdwg.mxu0
        %2142 = vmatpush.msra.mxu0 0.0
        %2143 = vmatpush.msra.mxu0 0.0
        %2144 = vmatpush.msra.mxu0 0.0
        %2145 = vmatpush.msra.mxu0 0.0
        %2146 = vmatpush.msra.mxu0 0.0
        %2147 = vmatpush.msra.mxu0 0.0
        %2148 = vmatpush.msra.mxu0 0.0
        %2149 = vmatpush.msra.mxu0 0.0
        %2150 = vmatpush.msra.mxu0 0.0
        %2151 = vmatpush.msra.mxu0 0.0
        %2152 = vmatpush.msra.mxu0 0.0
        %2153 = vmatpush.msra.mxu0 0.0
        %2154 = vmatpush.msra.mxu0 0.0
        %2155 = vmatpush.msra.mxu0 0.0
        %2156 = vmatpush.msra.mxu0 %v2120
        %2157 = vmatpush.msra.mxu0 %v2110
        %2158 = vmatmul.f32.gmra.mxu0 %v2116
        %v2159 = vpop.f32.mrf.mxu0
        %v2160 = vadd.f32 0.0, %v2159
        %2161 = vdwg.mxu0
        %v2162 = vadd.f32 %v2073, %v2140
        %v2163 = vadd.f32 %v2093, %v2160
        %v2164 = vmul.f32 %v454, %v2162
        %v2165 = vmul.f32 %v455, %v2163
        %v2166 = vadd.f32 %v1959, %v2164
        %v2167 = vadd.f32 %v1960, %v2165
        %v2168 = vld [vmem:[%s8] sm:$0xf]
        %2170 = vset.pattern.permute.xlu0 0
        %2171 = vperm.xlu0 %2170, %v2168
        %v2172 = vpop.permute.xlu0 %2171
        %v2174 = vadd.f32 %v2166, %v2172
        %v2175 = vadd.f32 %v2167, %v2172
        %vm2176 = vcmp.ge.f32.partialorder %v2174, 0.0
        %vm2177 = vcmp.ge.f32.partialorder %v2175, 0.0
        %v2178 = vmul.f32 %v2174, 0.01
        %v2179 = vmul.f32 %v2175, 0.01
        %v2180 = vsel %vm2176, %v2174, %v2178
        %v2181 = vsel %vm2177, %v2175, %v2179
        %v2184 = vrot.slane %v2180, 4
        %v2185 = vrot.slane %v2181, 4
        %2188 = vst [vmem:[#allocation2 + $0x28] sm:$0xf0] %v2184
        %2189 = vst [vmem:[#allocation2 + $0x30] sm:$0xf0] %v2185
        %v2190 = vld [vmem:[#allocation2] sm:$0xff]
        %v2191 = vld [vmem:[#allocation2 + $0x8] sm:$0xff]
        %v2192 = vld [vmem:[#allocation2 + $0x10] sm:$0xff]
        %v2193 = vld [vmem:[#allocation2 + $0x20] sm:$0xff]
        %v2194 = vld [vmem:[#allocation2 + $0x28] sm:$0xff]
        %v2195 = vld [vmem:[#allocation2 + $0x30] sm:$0xff]
        %s2196 = scalar_lea.vmem %s4, 4
        %v2197 = vld [vmem:[%s2196] sm:$0xf]
        %s2198 = scalar_lea.vmem %s4, 16
        %v2199 = vld [vmem:[%s2198] sm:$0xf]
        %v2201 = vsel %vm521, %v2199, 0
        %2203 = vmatpush.msra.mxu0 0.0
        %2204 = vmatpush.msra.mxu0 0.0
        %2205 = vmatpush.msra.mxu0 0.0
        %2206 = vmatpush.msra.mxu0 0.0
        %2207 = vmatpush.msra.mxu0 0.0
        %2208 = vmatpush.msra.mxu0 0.0
        %2209 = vmatpush.msra.mxu0 0.0
        %2210 = vmatpush.msra.mxu0 0.0
        %2211 = vmatpush.msra.mxu0 0.0
        %2212 = vmatpush.msra.mxu0 0.0
        %2213 = vmatpush.msra.mxu0 0.0
        %2214 = vmatpush.msra.mxu0 0.0
        %2215 = vmatpush.msra.mxu0 0.0
        %2216 = vmatpush.msra.mxu0 0.0
        %2217 = vmatpush.msra.mxu0 %v2194
        %2218 = vmatpush.msra.mxu0 %v2191
        %2219 = vmatmul.f32.gmra.mxu0 %v2201
        %v2220 = vpop.f32.mrf.mxu0
        %v2221 = vadd.f32 0.0, %v2220
        %2222 = vdwg.mxu0
        %2223 = vmatpush.msra.mxu0 0.0
        %2224 = vmatpush.msra.mxu0 0.0
        %2225 = vmatpush.msra.mxu0 0.0
        %2226 = vmatpush.msra.mxu0 0.0
        %2227 = vmatpush.msra.mxu0 0.0
        %2228 = vmatpush.msra.mxu0 0.0
        %2229 = vmatpush.msra.mxu0 0.0
        %2230 = vmatpush.msra.mxu0 0.0
        %2231 = vmatpush.msra.mxu0 0.0
        %2232 = vmatpush.msra.mxu0 0.0
        %2233 = vmatpush.msra.mxu0 0.0
        %2234 = vmatpush.msra.mxu0 0.0
        %2235 = vmatpush.msra.mxu0 0.0
        %2236 = vmatpush.msra.mxu0 0.0
        %2237 = vmatpush.msra.mxu0 %v2195
        %2238 = vmatpush.msra.mxu0 %v2192
        %2239 = vmatmul.f32.gmra.mxu0 %v2201
        %v2240 = vpop.f32.mrf.mxu0
        %v2241 = vadd.f32 0.0, %v2240
        %2242 = vdwg.mxu0
        %2249 = vrot.lane.b32.xlu0 %v2190, 16
        %v2250 = vpop.permute.xlu0 %2249
        %2251 = vrot.lane.b32.xlu0 %v2191, 16
        %v2252 = vpop.permute.xlu0 %2251
        %2253 = vrot.lane.b32.xlu0 %v2192, 16
        %v2254 = vpop.permute.xlu0 %2253
        %2255 = vrot.lane.b32.xlu0 %v2193, 16
        %v2256 = vpop.permute.xlu0 %2255
        %2257 = vrot.lane.b32.xlu0 %v2194, 16
        %v2258 = vpop.permute.xlu0 %2257
        %2259 = vrot.lane.b32.xlu0 %v2195, 16
        %v2260 = vpop.permute.xlu0 %2259
        %v2261 = vsel %vm521, %v2250, %v2252
        %v2262 = vsel %vm521, %v2252, %v2254
        %v2263 = vsel %vm521, %v2256, %v2258
        %v2264 = vsel %vm521, %v2258, %v2260
        %v2270 = vsel %vm521, %v2197, 0
        %2272 = vmatpush.msra.mxu0 0.0
        %2273 = vmatpush.msra.mxu0 0.0
        %2274 = vmatpush.msra.mxu0 0.0
        %2275 = vmatpush.msra.mxu0 0.0
        %2276 = vmatpush.msra.mxu0 0.0
        %2277 = vmatpush.msra.mxu0 0.0
        %2278 = vmatpush.msra.mxu0 0.0
        %2279 = vmatpush.msra.mxu0 0.0
        %2280 = vmatpush.msra.mxu0 0.0
        %2281 = vmatpush.msra.mxu0 0.0
        %2282 = vmatpush.msra.mxu0 0.0
        %2283 = vmatpush.msra.mxu0 0.0
        %2284 = vmatpush.msra.mxu0 0.0
        %2285 = vmatpush.msra.mxu0 0.0
        %2286 = vmatpush.msra.mxu0 %v2263
        %2287 = vmatpush.msra.mxu0 %v2261
        %2288 = vmatmul.f32.gmra.mxu0 %v2270
        %v2289 = vpop.f32.mrf.mxu0
        %v2290 = vadd.f32 %v2221, %v2289
        %2291 = vdwg.mxu0
        %2292 = vmatpush.msra.mxu0 0.0
        %2293 = vmatpush.msra.mxu0 0.0
        %2294 = vmatpush.msra.mxu0 0.0
        %2295 = vmatpush.msra.mxu0 0.0
        %2296 = vmatpush.msra.mxu0 0.0
        %2297 = vmatpush.msra.mxu0 0.0
        %2298 = vmatpush.msra.mxu0 0.0
        %2299 = vmatpush.msra.mxu0 0.0
        %2300 = vmatpush.msra.mxu0 0.0
        %2301 = vmatpush.msra.mxu0 0.0
        %2302 = vmatpush.msra.mxu0 0.0
        %2303 = vmatpush.msra.mxu0 0.0
        %2304 = vmatpush.msra.mxu0 0.0
        %2305 = vmatpush.msra.mxu0 0.0
        %2306 = vmatpush.msra.mxu0 %v2264
        %2307 = vmatpush.msra.mxu0 %v2262
        %2308 = vmatmul.f32.gmra.mxu0 %v2270
        %v2309 = vpop.f32.mrf.mxu0
        %v2310 = vadd.f32 %v2241, %v2309
        %2311 = vdwg.mxu0
        %v2312 = vld [vmem:[#allocation2 + $0x8] sm:$0xff]
        %v2313 = vld [vmem:[#allocation2 + $0x10] sm:$0xff]
        %v2314 = vld [vmem:[#allocation2 + $0x18] sm:$0xff]
        %v2315 = vld [vmem:[#allocation2 + $0x28] sm:$0xff]
        %v2316 = vld [vmem:[#allocation2 + $0x30] sm:$0xff]
        %v2317 = vld [vmem:[#allocation2 + $0x38] sm:$0xff]
        %s2318 = scalar_lea.vmem %s4, 28
        %v2319 = vld [vmem:[%s2318] sm:$0xf]
        %2326 = vrot.lane.b32.xlu0 %v2312, 112
        %v2327 = vpop.permute.xlu0 %2326
        %2328 = vrot.lane.b32.xlu0 %v2313, 112
        %v2329 = vpop.permute.xlu0 %2328
        %2330 = vrot.lane.b32.xlu0 %v2314, 112
        %v2331 = vpop.permute.xlu0 %2330
        %2332 = vrot.lane.b32.xlu0 %v2315, 112
        %v2333 = vpop.permute.xlu0 %2332
        %2334 = vrot.lane.b32.xlu0 %v2316, 112
        %v2335 = vpop.permute.xlu0 %2334
        %2336 = vrot.lane.b32.xlu0 %v2317, 112
        %v2337 = vpop.permute.xlu0 %2336
        %v2338 = vsel %vm585, %v2327, %v2329
        %v2339 = vsel %vm585, %v2329, %v2331
        %v2340 = vsel %vm585, %v2333, %v2335
        %v2341 = vsel %vm585, %v2335, %v2337
        %v2347 = vsel %vm521, %v2319, 0
        %2349 = vmatpush.msra.mxu0 0.0
        %2350 = vmatpush.msra.mxu0 0.0
        %2351 = vmatpush.msra.mxu0 0.0
        %2352 = vmatpush.msra.mxu0 0.0
        %2353 = vmatpush.msra.mxu0 0.0
        %2354 = vmatpush.msra.mxu0 0.0
        %2355 = vmatpush.msra.mxu0 0.0
        %2356 = vmatpush.msra.mxu0 0.0
        %2357 = vmatpush.msra.mxu0 0.0
        %2358 = vmatpush.msra.mxu0 0.0
        %2359 = vmatpush.msra.mxu0 0.0
        %2360 = vmatpush.msra.mxu0 0.0
        %2361 = vmatpush.msra.mxu0 0.0
        %2362 = vmatpush.msra.mxu0 0.0
        %2363 = vmatpush.msra.mxu0 %v2340
        %2364 = vmatpush.msra.mxu0 %v2338
        %2365 = vmatmul.f32.gmra.mxu0 %v2347
        %v2366 = vpop.f32.mrf.mxu0
        %v2367 = vadd.f32 0.0, %v2366
        %2368 = vdwg.mxu0
        %2369 = vmatpush.msra.mxu0 0.0
        %2370 = vmatpush.msra.mxu0 0.0
        %2371 = vmatpush.msra.mxu0 0.0
        %2372 = vmatpush.msra.mxu0 0.0
        %2373 = vmatpush.msra.mxu0 0.0
        %2374 = vmatpush.msra.mxu0 0.0
        %2375 = vmatpush.msra.mxu0 0.0
        %2376 = vmatpush.msra.mxu0 0.0
        %2377 = vmatpush.msra.mxu0 0.0
        %2378 = vmatpush.msra.mxu0 0.0
        %2379 = vmatpush.msra.mxu0 0.0
        %2380 = vmatpush.msra.mxu0 0.0
        %2381 = vmatpush.msra.mxu0 0.0
        %2382 = vmatpush.msra.mxu0 0.0
        %2383 = vmatpush.msra.mxu0 %v2341
        %2384 = vmatpush.msra.mxu0 %v2339
        %2385 = vmatmul.f32.gmra.mxu0 %v2347
        %v2386 = vpop.f32.mrf.mxu0
        %v2387 = vadd.f32 0.0, %v2386
        %2388 = vdwg.mxu0
        %v2389 = vadd.f32 %v2290, %v2367
        %v2390 = vadd.f32 %v2310, %v2387
        %v2391 = vld [vmem:[%s4] sm:$0xf]
        %s2392 = scalar_lea.vmem %s4, 12
        %v2393 = vld [vmem:[%s2392] sm:$0xf]
        %2394 = vrot.lane.b32.xlu0 %v2190, 1
        %v2395 = vpop.permute.xlu0 %2394
        %2396 = vrot.lane.b32.xlu0 %v2191, 1
        %v2397 = vpop.permute.xlu0 %2396
        %2398 = vrot.lane.b32.xlu0 %v2192, 1
        %v2399 = vpop.permute.xlu0 %2398
        %2400 = vrot.lane.b32.xlu0 %v2193, 1
        %v2401 = vpop.permute.xlu0 %2400
        %2402 = vrot.lane.b32.xlu0 %v2194, 1
        %v2403 = vpop.permute.xlu0 %2402
        %2404 = vrot.lane.b32.xlu0 %v2195, 1
        %v2405 = vpop.permute.xlu0 %2404
        %v2406 = vsel %vm646, %v2395, %v2397
        %v2407 = vsel %vm646, %v2397, %v2399
        %v2408 = vsel %vm646, %v2401, %v2403
        %v2409 = vsel %vm646, %v2403, %v2405
        %v2415 = vsel %vm521, %v2393, 0
        %2417 = vmatpush.msra.mxu0 0.0
        %2418 = vmatpush.msra.mxu0 0.0
        %2419 = vmatpush.msra.mxu0 0.0
        %2420 = vmatpush.msra.mxu0 0.0
        %2421 = vmatpush.msra.mxu0 0.0
        %2422 = vmatpush.msra.mxu0 0.0
        %2423 = vmatpush.msra.mxu0 0.0
        %2424 = vmatpush.msra.mxu0 0.0
        %2425 = vmatpush.msra.mxu0 0.0
        %2426 = vmatpush.msra.mxu0 0.0
        %2427 = vmatpush.msra.mxu0 0.0
        %2428 = vmatpush.msra.mxu0 0.0
        %2429 = vmatpush.msra.mxu0 0.0
        %2430 = vmatpush.msra.mxu0 0.0
        %2431 = vmatpush.msra.mxu0 %v2408
        %2432 = vmatpush.msra.mxu0 %v2406
        %2433 = vmatmul.f32.gmra.mxu0 %v2415
        %v2434 = vpop.f32.mrf.mxu0
        %v2435 = vadd.f32 0.0, %v2434
        %2436 = vdwg.mxu0
        %2437 = vmatpush.msra.mxu0 0.0
        %2438 = vmatpush.msra.mxu0 0.0
        %2439 = vmatpush.msra.mxu0 0.0
        %2440 = vmatpush.msra.mxu0 0.0
        %2441 = vmatpush.msra.mxu0 0.0
        %2442 = vmatpush.msra.mxu0 0.0
        %2443 = vmatpush.msra.mxu0 0.0
        %2444 = vmatpush.msra.mxu0 0.0
        %2445 = vmatpush.msra.mxu0 0.0
        %2446 = vmatpush.msra.mxu0 0.0
        %2447 = vmatpush.msra.mxu0 0.0
        %2448 = vmatpush.msra.mxu0 0.0
        %2449 = vmatpush.msra.mxu0 0.0
        %2450 = vmatpush.msra.mxu0 0.0
        %2451 = vmatpush.msra.mxu0 %v2409
        %2452 = vmatpush.msra.mxu0 %v2407
        %2453 = vmatmul.f32.gmra.mxu0 %v2415
        %v2454 = vpop.f32.mrf.mxu0
        %v2455 = vadd.f32 0.0, %v2454
        %2456 = vdwg.mxu0
        %2457 = vrot.lane.b32.xlu0 %v2190, 17
        %v2458 = vpop.permute.xlu0 %2457
        %2459 = vrot.lane.b32.xlu0 %v2191, 17
        %v2460 = vpop.permute.xlu0 %2459
        %2461 = vrot.lane.b32.xlu0 %v2192, 17
        %v2462 = vpop.permute.xlu0 %2461
        %2463 = vrot.lane.b32.xlu0 %v2193, 17
        %v2464 = vpop.permute.xlu0 %2463
        %2465 = vrot.lane.b32.xlu0 %v2194, 17
        %v2466 = vpop.permute.xlu0 %2465
        %2467 = vrot.lane.b32.xlu0 %v2195, 17
        %v2468 = vpop.permute.xlu0 %2467
        %v2469 = vsel %vm702, %v2458, %v2460
        %v2470 = vsel %vm702, %v2460, %v2462
        %v2471 = vsel %vm702, %v2464, %v2466
        %v2472 = vsel %vm702, %v2466, %v2468
        %v2478 = vsel %vm521, %v2391, 0
        %2480 = vmatpush.msra.mxu0 0.0
        %2481 = vmatpush.msra.mxu0 0.0
        %2482 = vmatpush.msra.mxu0 0.0
        %2483 = vmatpush.msra.mxu0 0.0
        %2484 = vmatpush.msra.mxu0 0.0
        %2485 = vmatpush.msra.mxu0 0.0
        %2486 = vmatpush.msra.mxu0 0.0
        %2487 = vmatpush.msra.mxu0 0.0
        %2488 = vmatpush.msra.mxu0 0.0
        %2489 = vmatpush.msra.mxu0 0.0
        %2490 = vmatpush.msra.mxu0 0.0
        %2491 = vmatpush.msra.mxu0 0.0
        %2492 = vmatpush.msra.mxu0 0.0
        %2493 = vmatpush.msra.mxu0 0.0
        %2494 = vmatpush.msra.mxu0 %v2471
        %2495 = vmatpush.msra.mxu0 %v2469
        %2496 = vmatmul.f32.gmra.mxu0 %v2478
        %v2497 = vpop.f32.mrf.mxu0
        %v2498 = vadd.f32 %v2435, %v2497
        %2499 = vdwg.mxu0
        %2500 = vmatpush.msra.mxu0 0.0
        %2501 = vmatpush.msra.mxu0 0.0
        %2502 = vmatpush.msra.mxu0 0.0
        %2503 = vmatpush.msra.mxu0 0.0
        %2504 = vmatpush.msra.mxu0 0.0
        %2505 = vmatpush.msra.mxu0 0.0
        %2506 = vmatpush.msra.mxu0 0.0
        %2507 = vmatpush.msra.mxu0 0.0
        %2508 = vmatpush.msra.mxu0 0.0
        %2509 = vmatpush.msra.mxu0 0.0
        %2510 = vmatpush.msra.mxu0 0.0
        %2511 = vmatpush.msra.mxu0 0.0
        %2512 = vmatpush.msra.mxu0 0.0
        %2513 = vmatpush.msra.mxu0 0.0
        %2514 = vmatpush.msra.mxu0 %v2472
        %2515 = vmatpush.msra.mxu0 %v2470
        %2516 = vmatmul.f32.gmra.mxu0 %v2478
        %v2517 = vpop.f32.mrf.mxu0
        %v2518 = vadd.f32 %v2455, %v2517
        %2519 = vdwg.mxu0
        %s2520 = scalar_lea.vmem %s4, 24
        %v2521 = vld [vmem:[%s2520] sm:$0xf]
        %2522 = vrot.lane.b32.xlu0 %v2312, 113
        %v2523 = vpop.permute.xlu0 %2522
        %2524 = vrot.lane.b32.xlu0 %v2313, 113
        %v2525 = vpop.permute.xlu0 %2524
        %2526 = vrot.lane.b32.xlu0 %v2314, 113
        %v2527 = vpop.permute.xlu0 %2526
        %2528 = vrot.lane.b32.xlu0 %v2315, 113
        %v2529 = vpop.permute.xlu0 %2528
        %2530 = vrot.lane.b32.xlu0 %v2316, 113
        %v2531 = vpop.permute.xlu0 %2530
        %2532 = vrot.lane.b32.xlu0 %v2317, 113
        %v2533 = vpop.permute.xlu0 %2532
        %v2534 = vsel %vm760, %v2523, %v2525
        %v2535 = vsel %vm760, %v2525, %v2527
        %v2536 = vsel %vm760, %v2529, %v2531
        %v2537 = vsel %vm760, %v2531, %v2533
        %v2543 = vsel %vm521, %v2521, 0
        %2545 = vmatpush.msra.mxu0 0.0
        %2546 = vmatpush.msra.mxu0 0.0
        %2547 = vmatpush.msra.mxu0 0.0
        %2548 = vmatpush.msra.mxu0 0.0
        %2549 = vmatpush.msra.mxu0 0.0
        %2550 = vmatpush.msra.mxu0 0.0
        %2551 = vmatpush.msra.mxu0 0.0
        %2552 = vmatpush.msra.mxu0 0.0
        %2553 = vmatpush.msra.mxu0 0.0
        %2554 = vmatpush.msra.mxu0 0.0
        %2555 = vmatpush.msra.mxu0 0.0
        %2556 = vmatpush.msra.mxu0 0.0
        %2557 = vmatpush.msra.mxu0 0.0
        %2558 = vmatpush.msra.mxu0 0.0
        %2559 = vmatpush.msra.mxu0 %v2536
        %2560 = vmatpush.msra.mxu0 %v2534
        %2561 = vmatmul.f32.gmra.mxu0 %v2543
        %v2562 = vpop.f32.mrf.mxu0
        %v2563 = vadd.f32 0.0, %v2562
        %2564 = vdwg.mxu0
        %2565 = vmatpush.msra.mxu0 0.0
        %2566 = vmatpush.msra.mxu0 0.0
        %2567 = vmatpush.msra.mxu0 0.0
        %2568 = vmatpush.msra.mxu0 0.0
        %2569 = vmatpush.msra.mxu0 0.0
        %2570 = vmatpush.msra.mxu0 0.0
        %2571 = vmatpush.msra.mxu0 0.0
        %2572 = vmatpush.msra.mxu0 0.0
        %2573 = vmatpush.msra.mxu0 0.0
        %2574 = vmatpush.msra.mxu0 0.0
        %2575 = vmatpush.msra.mxu0 0.0
        %2576 = vmatpush.msra.mxu0 0.0
        %2577 = vmatpush.msra.mxu0 0.0
        %2578 = vmatpush.msra.mxu0 0.0
        %2579 = vmatpush.msra.mxu0 %v2537
        %2580 = vmatpush.msra.mxu0 %v2535
        %2581 = vmatmul.f32.gmra.mxu0 %v2543
        %v2582 = vpop.f32.mrf.mxu0
        %v2583 = vadd.f32 0.0, %v2582
        %2584 = vdwg.mxu0
        %v2585 = vadd.f32 %v2498, %v2563
        %v2586 = vadd.f32 %v2518, %v2583
        %v2587 = vmul.f32 %v448, %v2585
        %v2588 = vmul.f32 %v449, %v2586
        %v2589 = vadd.f32 %v2389, %v2587
        %v2590 = vadd.f32 %v2390, %v2588
        %s2591 = scalar_lea.vmem %s4, 8
        %v2592 = vld [vmem:[%s2591] sm:$0xf]
        %s2593 = scalar_lea.vmem %s4, 20
        %v2594 = vld [vmem:[%s2593] sm:$0xf]
        %2595 = vrot.lane.b32.xlu0 %v2312, 127
        %v2596 = vpop.permute.xlu0 %2595
        %2597 = vrot.lane.b32.xlu0 %v2313, 127
        %v2598 = vpop.permute.xlu0 %2597
        %2599 = vrot.lane.b32.xlu0 %v2314, 127
        %v2600 = vpop.permute.xlu0 %2599
        %2601 = vrot.lane.b32.xlu0 %v2315, 127
        %v2602 = vpop.permute.xlu0 %2601
        %2603 = vrot.lane.b32.xlu0 %v2316, 127
        %v2604 = vpop.permute.xlu0 %2603
        %2605 = vrot.lane.b32.xlu0 %v2317, 127
        %v2606 = vpop.permute.xlu0 %2605
        %v2607 = vsel %vm826, %v2596, %v2598
        %v2608 = vsel %vm826, %v2598, %v2600
        %v2609 = vsel %vm826, %v2602, %v2604
        %v2610 = vsel %vm826, %v2604, %v2606
        %v2616 = vsel %vm521, %v2594, 0
        %2618 = vmatpush.msra.mxu0 0.0
        %2619 = vmatpush.msra.mxu0 0.0
        %2620 = vmatpush.msra.mxu0 0.0
        %2621 = vmatpush.msra.mxu0 0.0
        %2622 = vmatpush.msra.mxu0 0.0
        %2623 = vmatpush.msra.mxu0 0.0
        %2624 = vmatpush.msra.mxu0 0.0
        %2625 = vmatpush.msra.mxu0 0.0
        %2626 = vmatpush.msra.mxu0 0.0
        %2627 = vmatpush.msra.mxu0 0.0
        %2628 = vmatpush.msra.mxu0 0.0
        %2629 = vmatpush.msra.mxu0 0.0
        %2630 = vmatpush.msra.mxu0 0.0
        %2631 = vmatpush.msra.mxu0 0.0
        %2632 = vmatpush.msra.mxu0 %v2609
        %2633 = vmatpush.msra.mxu0 %v2607
        %2634 = vmatmul.f32.gmra.mxu0 %v2616
        %v2635 = vpop.f32.mrf.mxu0
        %v2636 = vadd.f32 0.0, %v2635
        %2637 = vdwg.mxu0
        %2638 = vmatpush.msra.mxu0 0.0
        %2639 = vmatpush.msra.mxu0 0.0
        %2640 = vmatpush.msra.mxu0 0.0
        %2641 = vmatpush.msra.mxu0 0.0
        %2642 = vmatpush.msra.mxu0 0.0
        %2643 = vmatpush.msra.mxu0 0.0
        %2644 = vmatpush.msra.mxu0 0.0
        %2645 = vmatpush.msra.mxu0 0.0
        %2646 = vmatpush.msra.mxu0 0.0
        %2647 = vmatpush.msra.mxu0 0.0
        %2648 = vmatpush.msra.mxu0 0.0
        %2649 = vmatpush.msra.mxu0 0.0
        %2650 = vmatpush.msra.mxu0 0.0
        %2651 = vmatpush.msra.mxu0 0.0
        %2652 = vmatpush.msra.mxu0 %v2610
        %2653 = vmatpush.msra.mxu0 %v2608
        %2654 = vmatmul.f32.gmra.mxu0 %v2616
        %v2655 = vpop.f32.mrf.mxu0
        %v2656 = vadd.f32 0.0, %v2655
        %2657 = vdwg.mxu0
        %2658 = vrot.lane.b32.xlu0 %v2190, 15
        %v2659 = vpop.permute.xlu0 %2658
        %2660 = vrot.lane.b32.xlu0 %v2191, 15
        %v2661 = vpop.permute.xlu0 %2660
        %2662 = vrot.lane.b32.xlu0 %v2192, 15
        %v2663 = vpop.permute.xlu0 %2662
        %2664 = vrot.lane.b32.xlu0 %v2193, 15
        %v2665 = vpop.permute.xlu0 %2664
        %2666 = vrot.lane.b32.xlu0 %v2194, 15
        %v2667 = vpop.permute.xlu0 %2666
        %2668 = vrot.lane.b32.xlu0 %v2195, 15
        %v2669 = vpop.permute.xlu0 %2668
        %v2670 = vsel %vm882, %v2659, %v2661
        %v2671 = vsel %vm882, %v2661, %v2663
        %v2672 = vsel %vm882, %v2665, %v2667
        %v2673 = vsel %vm882, %v2667, %v2669
        %v2679 = vsel %vm521, %v2592, 0
        %2681 = vmatpush.msra.mxu0 0.0
        %2682 = vmatpush.msra.mxu0 0.0
        %2683 = vmatpush.msra.mxu0 0.0
        %2684 = vmatpush.msra.mxu0 0.0
        %2685 = vmatpush.msra.mxu0 0.0
        %2686 = vmatpush.msra.mxu0 0.0
        %2687 = vmatpush.msra.mxu0 0.0
        %2688 = vmatpush.msra.mxu0 0.0
        %2689 = vmatpush.msra.mxu0 0.0
        %2690 = vmatpush.msra.mxu0 0.0
        %2691 = vmatpush.msra.mxu0 0.0
        %2692 = vmatpush.msra.mxu0 0.0
        %2693 = vmatpush.msra.mxu0 0.0
        %2694 = vmatpush.msra.mxu0 0.0
        %2695 = vmatpush.msra.mxu0 %v2672
        %2696 = vmatpush.msra.mxu0 %v2670
        %2697 = vmatmul.f32.gmra.mxu0 %v2679
        %v2698 = vpop.f32.mrf.mxu0
        %v2699 = vadd.f32 %v2636, %v2698
        %2700 = vdwg.mxu0
        %2701 = vmatpush.msra.mxu0 0.0
        %2702 = vmatpush.msra.mxu0 0.0
        %2703 = vmatpush.msra.mxu0 0.0
        %2704 = vmatpush.msra.mxu0 0.0
        %2705 = vmatpush.msra.mxu0 0.0
        %2706 = vmatpush.msra.mxu0 0.0
        %2707 = vmatpush.msra.mxu0 0.0
        %2708 = vmatpush.msra.mxu0 0.0
        %2709 = vmatpush.msra.mxu0 0.0
        %2710 = vmatpush.msra.mxu0 0.0
        %2711 = vmatpush.msra.mxu0 0.0
        %2712 = vmatpush.msra.mxu0 0.0
        %2713 = vmatpush.msra.mxu0 0.0
        %2714 = vmatpush.msra.mxu0 0.0
        %2715 = vmatpush.msra.mxu0 %v2673
        %2716 = vmatpush.msra.mxu0 %v2671
        %2717 = vmatmul.f32.gmra.mxu0 %v2679
        %v2718 = vpop.f32.mrf.mxu0
        %v2719 = vadd.f32 %v2656, %v2718
        %2720 = vdwg.mxu0
        %s2721 = scalar_lea.vmem %s4, 32
        %v2722 = vld [vmem:[%s2721] sm:$0xf]
        %2723 = vrot.lane.b32.xlu0 %v2312, 111
        %v2724 = vpop.permute.xlu0 %2723
        %2725 = vrot.lane.b32.xlu0 %v2313, 111
        %v2726 = vpop.permute.xlu0 %2725
        %2727 = vrot.lane.b32.xlu0 %v2314, 111
        %v2728 = vpop.permute.xlu0 %2727
        %2729 = vrot.lane.b32.xlu0 %v2315, 111
        %v2730 = vpop.permute.xlu0 %2729
        %2731 = vrot.lane.b32.xlu0 %v2316, 111
        %v2732 = vpop.permute.xlu0 %2731
        %2733 = vrot.lane.b32.xlu0 %v2317, 111
        %v2734 = vpop.permute.xlu0 %2733
        %v2735 = vsel %vm940, %v2724, %v2726
        %v2736 = vsel %vm940, %v2726, %v2728
        %v2737 = vsel %vm940, %v2730, %v2732
        %v2738 = vsel %vm940, %v2732, %v2734
        %v2744 = vsel %vm521, %v2722, 0
        %2746 = vmatpush.msra.mxu0 0.0
        %2747 = vmatpush.msra.mxu0 0.0
        %2748 = vmatpush.msra.mxu0 0.0
        %2749 = vmatpush.msra.mxu0 0.0
        %2750 = vmatpush.msra.mxu0 0.0
        %2751 = vmatpush.msra.mxu0 0.0
        %2752 = vmatpush.msra.mxu0 0.0
        %2753 = vmatpush.msra.mxu0 0.0
        %2754 = vmatpush.msra.mxu0 0.0
        %2755 = vmatpush.msra.mxu0 0.0
        %2756 = vmatpush.msra.mxu0 0.0
        %2757 = vmatpush.msra.mxu0 0.0
        %2758 = vmatpush.msra.mxu0 0.0
        %2759 = vmatpush.msra.mxu0 0.0
        %2760 = vmatpush.msra.mxu0 %v2737
        %2761 = vmatpush.msra.mxu0 %v2735
        %2762 = vmatmul.f32.gmra.mxu0 %v2744
        %v2763 = vpop.f32.mrf.mxu0
        %v2764 = vadd.f32 0.0, %v2763
        %2765 = vdwg.mxu0
        %2766 = vmatpush.msra.mxu0 0.0
        %2767 = vmatpush.msra.mxu0 0.0
        %2768 = vmatpush.msra.mxu0 0.0
        %2769 = vmatpush.msra.mxu0 0.0
        %2770 = vmatpush.msra.mxu0 0.0
        %2771 = vmatpush.msra.mxu0 0.0
        %2772 = vmatpush.msra.mxu0 0.0
        %2773 = vmatpush.msra.mxu0 0.0
        %2774 = vmatpush.msra.mxu0 0.0
        %2775 = vmatpush.msra.mxu0 0.0
        %2776 = vmatpush.msra.mxu0 0.0
        %2777 = vmatpush.msra.mxu0 0.0
        %2778 = vmatpush.msra.mxu0 0.0
        %2779 = vmatpush.msra.mxu0 0.0
        %2780 = vmatpush.msra.mxu0 %v2738
        %2781 = vmatpush.msra.mxu0 %v2736
        %2782 = vmatmul.f32.gmra.mxu0 %v2744
        %v2783 = vpop.f32.mrf.mxu0
        %v2784 = vadd.f32 0.0, %v2783
        %2785 = vdwg.mxu0
        %v2786 = vadd.f32 %v2699, %v2764
        %v2787 = vadd.f32 %v2719, %v2784
        %v2788 = vmul.f32 %v454, %v2786
        %v2789 = vmul.f32 %v455, %v2787
        %v2790 = vadd.f32 %v2589, %v2788
        %v2791 = vadd.f32 %v2590, %v2789
        %v2792 = vld [vmem:[%s9] sm:$0xf]
        %2794 = vset.pattern.permute.xlu0 0
        %2795 = vperm.xlu0 %2794, %v2792
        %v2796 = vpop.permute.xlu0 %2795
        %v2798 = vadd.f32 %v2790, %v2796
        %v2799 = vadd.f32 %v2791, %v2796
        %vm2800 = vcmp.ge.f32.partialorder %v2798, 0.0
        %vm2801 = vcmp.ge.f32.partialorder %v2799, 0.0
        %v2802 = vmul.f32 %v2798, 0.01
        %v2803 = vmul.f32 %v2799, 0.01
        %v2804 = vsel %vm2800, %v2798, %v2802
        %v2805 = vsel %vm2801, %v2799, %v2803
        %2806 = vst [vmem:[#allocation2 + $0x48] sm:$0xf] %v2804
        %2807 = vst [vmem:[#allocation2 + $0x50] sm:$0xf] %v2805
        %v2808 = vld [vmem:[#allocation2] sm:$0xff]
        %v2809 = vld [vmem:[#allocation2 + $0x8] sm:$0xff]
        %v2810 = vld [vmem:[#allocation2 + $0x10] sm:$0xff]
        %v2811 = vld [vmem:[#allocation2 + $0x20] sm:$0xff]
        %v2812 = vld [vmem:[#allocation2 + $0x28] sm:$0xff]
        %v2813 = vld [vmem:[#allocation2 + $0x30] sm:$0xff]
        %v2814 = vld [vmem:[#allocation2 + $0x40] sm:$0xf]
        %v2815 = vld [vmem:[#allocation2 + $0x48] sm:$0xf]
        %v2816 = vld [vmem:[#allocation2 + $0x50] sm:$0xf]
        %s2817 = scalar_lea.vmem [#allocation3], 4
        %v2818 = vld [vmem:[%s2817] sm:$0xf]
        %s2819 = scalar_lea.vmem [#allocation3], 16
        %v2820 = vld [vmem:[%s2819] sm:$0xf]
        %vm2821 = vcmask 162816
        %v2823 = vsel %vm2821, %v2820, 0
        %v2826 = vsel %vm467, %v2815, 0
        %v2829 = vsel %vm467, %v2816, 0
        %2831 = vmatpush.msra.mxu0 0.0
        %2832 = vmatpush.msra.mxu0 0.0
        %2833 = vmatpush.msra.mxu0 0.0
        %2834 = vmatpush.msra.mxu0 0.0
        %2835 = vmatpush.msra.mxu0 0.0
        %2836 = vmatpush.msra.mxu0 0.0
        %2837 = vmatpush.msra.mxu0 0.0
        %2838 = vmatpush.msra.mxu0 0.0
        %2839 = vmatpush.msra.mxu0 0.0
        %2840 = vmatpush.msra.mxu0 0.0
        %2841 = vmatpush.msra.mxu0 0.0
        %2842 = vmatpush.msra.mxu0 0.0
        %2843 = vmatpush.msra.mxu0 0.0
        %2844 = vmatpush.msra.mxu0 %v2826
        %2845 = vmatpush.msra.mxu0 %v2812
        %2846 = vmatpush.msra.mxu0 %v2809
        %2847 = vmatmul.f32.gmra.mxu0 %v2823
        %v2848 = vpop.f32.mrf.mxu0
        %v2849 = vadd.f32 0.0, %v2848
        %2850 = vdwg.mxu0
        %2851 = vmatpush.msra.mxu0 0.0
        %2852 = vmatpush.msra.mxu0 0.0
        %2853 = vmatpush.msra.mxu0 0.0
        %2854 = vmatpush.msra.mxu0 0.0
        %2855 = vmatpush.msra.mxu0 0.0
        %2856 = vmatpush.msra.mxu0 0.0
        %2857 = vmatpush.msra.mxu0 0.0
        %2858 = vmatpush.msra.mxu0 0.0
        %2859 = vmatpush.msra.mxu0 0.0
        %2860 = vmatpush.msra.mxu0 0.0
        %2861 = vmatpush.msra.mxu0 0.0
        %2862 = vmatpush.msra.mxu0 0.0
        %2863 = vmatpush.msra.mxu0 0.0
        %2864 = vmatpush.msra.mxu0 %v2829
        %2865 = vmatpush.msra.mxu0 %v2813
        %2866 = vmatpush.msra.mxu0 %v2810
        %2867 = vmatmul.f32.gmra.mxu0 %v2823
        %v2868 = vpop.f32.mrf.mxu0
        %v2869 = vadd.f32 0.0, %v2868
        %2870 = vdwg.mxu0
        %2878 = vrot.lane.b32.xlu0 %v2808, 16
        %v2879 = vpop.permute.xlu0 %2878
        %2880 = vrot.lane.b32.xlu0 %v2809, 16
        %v2881 = vpop.permute.xlu0 %2880
        %2882 = vrot.lane.b32.xlu0 %v2810, 16
        %v2883 = vpop.permute.xlu0 %2882
        %2884 = vrot.lane.b32.xlu0 %v2811, 16
        %v2885 = vpop.permute.xlu0 %2884
        %2886 = vrot.lane.b32.xlu0 %v2812, 16
        %v2887 = vpop.permute.xlu0 %2886
        %2888 = vrot.lane.b32.xlu0 %v2813, 16
        %v2889 = vpop.permute.xlu0 %2888
        %2890 = vrot.lane.b32.xlu0 %v2814, 16
        %v2891 = vpop.permute.xlu0 %2890
        %2892 = vrot.lane.b32.xlu0 %v2815, 16
        %v2893 = vpop.permute.xlu0 %2892
        %2894 = vrot.lane.b32.xlu0 %v2816, 16
        %v2895 = vpop.permute.xlu0 %2894
        %v2896 = vsel %vm521, %v2879, %v2881
        %v2897 = vsel %vm521, %v2881, %v2883
        %v2898 = vsel %vm521, %v2885, %v2887
        %v2899 = vsel %vm521, %v2887, %v2889
        %v2900 = vsel %vm521, %v2891, %v2893
        %v2901 = vsel %vm521, %v2893, %v2895
        %v2907 = vsel %vm2821, %v2818, 0
        %v2909 = vsel %vm467, %v2900, 0
        %v2911 = vsel %vm467, %v2901, 0
        %2913 = vmatpush.msra.mxu0 0.0
        %2914 = vmatpush.msra.mxu0 0.0
        %2915 = vmatpush.msra.mxu0 0.0
        %2916 = vmatpush.msra.mxu0 0.0
        %2917 = vmatpush.msra.mxu0 0.0
        %2918 = vmatpush.msra.mxu0 0.0
        %2919 = vmatpush.msra.mxu0 0.0
        %2920 = vmatpush.msra.mxu0 0.0
        %2921 = vmatpush.msra.mxu0 0.0
        %2922 = vmatpush.msra.mxu0 0.0
        %2923 = vmatpush.msra.mxu0 0.0
        %2924 = vmatpush.msra.mxu0 0.0
        %2925 = vmatpush.msra.mxu0 0.0
        %2926 = vmatpush.msra.mxu0 %v2909
        %2927 = vmatpush.msra.mxu0 %v2898
        %2928 = vmatpush.msra.mxu0 %v2896
        %2929 = vmatmul.f32.gmra.mxu0 %v2907
        %v2930 = vpop.f32.mrf.mxu0
        %v2931 = vadd.f32 %v2849, %v2930
        %2932 = vdwg.mxu0
        %2933 = vmatpush.msra.mxu0 0.0
        %2934 = vmatpush.msra.mxu0 0.0
        %2935 = vmatpush.msra.mxu0 0.0
        %2936 = vmatpush.msra.mxu0 0.0
        %2937 = vmatpush.msra.mxu0 0.0
        %2938 = vmatpush.msra.mxu0 0.0
        %2939 = vmatpush.msra.mxu0 0.0
        %2940 = vmatpush.msra.mxu0 0.0
        %2941 = vmatpush.msra.mxu0 0.0
        %2942 = vmatpush.msra.mxu0 0.0
        %2943 = vmatpush.msra.mxu0 0.0
        %2944 = vmatpush.msra.mxu0 0.0
        %2945 = vmatpush.msra.mxu0 0.0
        %2946 = vmatpush.msra.mxu0 %v2911
        %2947 = vmatpush.msra.mxu0 %v2899
        %2948 = vmatpush.msra.mxu0 %v2897
        %2949 = vmatmul.f32.gmra.mxu0 %v2907
        %v2950 = vpop.f32.mrf.mxu0
        %v2951 = vadd.f32 %v2869, %v2950
        %2952 = vdwg.mxu0
        %v2953 = vld [vmem:[#allocation2 + $0x8] sm:$0xff]
        %v2954 = vld [vmem:[#allocation2 + $0x10] sm:$0xff]
        %v2955 = vld [vmem:[#allocation2 + $0x18] sm:$0xff]
        %v2956 = vld [vmem:[#allocation2 + $0x28] sm:$0xff]
        %v2957 = vld [vmem:[#allocation2 + $0x30] sm:$0xff]
        %v2958 = vld [vmem:[#allocation2 + $0x38] sm:$0xff]
        %v2959 = vld [vmem:[#allocation2 + $0x48] sm:$0xf]
        %v2960 = vld [vmem:[#allocation2 + $0x50] sm:$0xf]
        %v2961 = vld [vmem:[#allocation2 + $0x58] sm:$0xf]
        %s2962 = scalar_lea.vmem [#allocation3], 28
        %v2963 = vld [vmem:[%s2962] sm:$0xf]
        %2973 = vrot.lane.b32.xlu0 %v2953, 112
        %v2974 = vpop.permute.xlu0 %2973
        %2975 = vrot.lane.b32.xlu0 %v2954, 112
        %v2976 = vpop.permute.xlu0 %2975
        %2977 = vrot.lane.b32.xlu0 %v2955, 112
        %v2978 = vpop.permute.xlu0 %2977
        %2979 = vrot.lane.b32.xlu0 %v2956, 112
        %v2980 = vpop.permute.xlu0 %2979
        %2981 = vrot.lane.b32.xlu0 %v2957, 112
        %v2982 = vpop.permute.xlu0 %2981
        %2983 = vrot.lane.b32.xlu0 %v2958, 112
        %v2984 = vpop.permute.xlu0 %2983
        %2985 = vrot.lane.b32.xlu0 %v2959, 112
        %v2986 = vpop.permute.xlu0 %2985
        %2987 = vrot.lane.b32.xlu0 %v2960, 112
        %v2988 = vpop.permute.xlu0 %2987
        %2989 = vrot.lane.b32.xlu0 %v2961, 112
        %v2990 = vpop.permute.xlu0 %2989
        %v2991 = vsel %vm585, %v2974, %v2976
        %v2992 = vsel %vm585, %v2976, %v2978
        %v2993 = vsel %vm585, %v2980, %v2982
        %v2994 = vsel %vm585, %v2982, %v2984
        %v2995 = vsel %vm585, %v2986, %v2988
        %v2996 = vsel %vm585, %v2988, %v2990
        %v3002 = vsel %vm2821, %v2963, 0
        %v3004 = vsel %vm467, %v2995, 0
        %v3006 = vsel %vm467, %v2996, 0
        %3008 = vmatpush.msra.mxu0 0.0
        %3009 = vmatpush.msra.mxu0 0.0
        %3010 = vmatpush.msra.mxu0 0.0
        %3011 = vmatpush.msra.mxu0 0.0
        %3012 = vmatpush.msra.mxu0 0.0
        %3013 = vmatpush.msra.mxu0 0.0
        %3014 = vmatpush.msra.mxu0 0.0
        %3015 = vmatpush.msra.mxu0 0.0
        %3016 = vmatpush.msra.mxu0 0.0
        %3017 = vmatpush.msra.mxu0 0.0
        %3018 = vmatpush.msra.mxu0 0.0
        %3019 = vmatpush.msra.mxu0 0.0
        %3020 = vmatpush.msra.mxu0 0.0
        %3021 = vmatpush.msra.mxu0 %v3004
        %3022 = vmatpush.msra.mxu0 %v2993
        %3023 = vmatpush.msra.mxu0 %v2991
        %3024 = vmatmul.f32.gmra.mxu0 %v3002
        %v3025 = vpop.f32.mrf.mxu0
        %v3026 = vadd.f32 0.0, %v3025
        %3027 = vdwg.mxu0
        %3028 = vmatpush.msra.mxu0 0.0
        %3029 = vmatpush.msra.mxu0 0.0
        %3030 = vmatpush.msra.mxu0 0.0
        %3031 = vmatpush.msra.mxu0 0.0
        %3032 = vmatpush.msra.mxu0 0.0
        %3033 = vmatpush.msra.mxu0 0.0
        %3034 = vmatpush.msra.mxu0 0.0
        %3035 = vmatpush.msra.mxu0 0.0
        %3036 = vmatpush.msra.mxu0 0.0
        %3037 = vmatpush.msra.mxu0 0.0
        %3038 = vmatpush.msra.mxu0 0.0
        %3039 = vmatpush.msra.mxu0 0.0
        %3040 = vmatpush.msra.mxu0 0.0
        %3041 = vmatpush.msra.mxu0 %v3006
        %3042 = vmatpush.msra.mxu0 %v2994
        %3043 = vmatpush.msra.mxu0 %v2992
        %3044 = vmatmul.f32.gmra.mxu0 %v3002
        %v3045 = vpop.f32.mrf.mxu0
        %v3046 = vadd.f32 0.0, %v3045
        %3047 = vdwg.mxu0
        %v3048 = vadd.f32 %v2931, %v3026
        %v3049 = vadd.f32 %v2951, %v3046
        %v3050 = vld [vmem:[#allocation3] sm:$0xf]
        %s3051 = scalar_lea.vmem [#allocation3], 12
        %v3052 = vld [vmem:[%s3051] sm:$0xf]
        %3053 = vrot.lane.b32.xlu0 %v2808, 1
        %v3054 = vpop.permute.xlu0 %3053
        %3055 = vrot.lane.b32.xlu0 %v2809, 1
        %v3056 = vpop.permute.xlu0 %3055
        %3057 = vrot.lane.b32.xlu0 %v2810, 1
        %v3058 = vpop.permute.xlu0 %3057
        %3059 = vrot.lane.b32.xlu0 %v2811, 1
        %v3060 = vpop.permute.xlu0 %3059
        %3061 = vrot.lane.b32.xlu0 %v2812, 1
        %v3062 = vpop.permute.xlu0 %3061
        %3063 = vrot.lane.b32.xlu0 %v2813, 1
        %v3064 = vpop.permute.xlu0 %3063
        %3065 = vrot.lane.b32.xlu0 %v2814, 1
        %v3066 = vpop.permute.xlu0 %3065
        %3067 = vrot.lane.b32.xlu0 %v2815, 1
        %v3068 = vpop.permute.xlu0 %3067
        %3069 = vrot.lane.b32.xlu0 %v2816, 1
        %v3070 = vpop.permute.xlu0 %3069
        %v3071 = vsel %vm646, %v3054, %v3056
        %v3072 = vsel %vm646, %v3056, %v3058
        %v3073 = vsel %vm646, %v3060, %v3062
        %v3074 = vsel %vm646, %v3062, %v3064
        %v3075 = vsel %vm646, %v3066, %v3068
        %v3076 = vsel %vm646, %v3068, %v3070
        %v3082 = vsel %vm2821, %v3052, 0
        %v3084 = vsel %vm467, %v3075, 0
        %v3086 = vsel %vm467, %v3076, 0
        %3088 = vmatpush.msra.mxu0 0.0
        %3089 = vmatpush.msra.mxu0 0.0
        %3090 = vmatpush.msra.mxu0 0.0
        %3091 = vmatpush.msra.mxu0 0.0
        %3092 = vmatpush.msra.mxu0 0.0
        %3093 = vmatpush.msra.mxu0 0.0
        %3094 = vmatpush.msra.mxu0 0.0
        %3095 = vmatpush.msra.mxu0 0.0
        %3096 = vmatpush.msra.mxu0 0.0
        %3097 = vmatpush.msra.mxu0 0.0
        %3098 = vmatpush.msra.mxu0 0.0
        %3099 = vmatpush.msra.mxu0 0.0
        %3100 = vmatpush.msra.mxu0 0.0
        %3101 = vmatpush.msra.mxu0 %v3084
        %3102 = vmatpush.msra.mxu0 %v3073
        %3103 = vmatpush.msra.mxu0 %v3071
        %3104 = vmatmul.f32.gmra.mxu0 %v3082
        %v3105 = vpop.f32.mrf.mxu0
        %v3106 = vadd.f32 0.0, %v3105
        %3107 = vdwg.mxu0
        %3108 = vmatpush.msra.mxu0 0.0
        %3109 = vmatpush.msra.mxu0 0.0
        %3110 = vmatpush.msra.mxu0 0.0
        %3111 = vmatpush.msra.mxu0 0.0
        %3112 = vmatpush.msra.mxu0 0.0
        %3113 = vmatpush.msra.mxu0 0.0
        %3114 = vmatpush.msra.mxu0 0.0
        %3115 = vmatpush.msra.mxu0 0.0
        %3116 = vmatpush.msra.mxu0 0.0
        %3117 = vmatpush.msra.mxu0 0.0
        %3118 = vmatpush.msra.mxu0 0.0
        %3119 = vmatpush.msra.mxu0 0.0
        %3120 = vmatpush.msra.mxu0 0.0
        %3121 = vmatpush.msra.mxu0 %v3086
        %3122 = vmatpush.msra.mxu0 %v3074
        %3123 = vmatpush.msra.mxu0 %v3072
        %3124 = vmatmul.f32.gmra.mxu0 %v3082
        %v3125 = vpop.f32.mrf.mxu0
        %v3126 = vadd.f32 0.0, %v3125
        %3127 = vdwg.mxu0
        %3128 = vrot.lane.b32.xlu0 %v2808, 17
        %v3129 = vpop.permute.xlu0 %3128
        %3130 = vrot.lane.b32.xlu0 %v2809, 17
        %v3131 = vpop.permute.xlu0 %3130
        %3132 = vrot.lane.b32.xlu0 %v2810, 17
        %v3133 = vpop.permute.xlu0 %3132
        %3134 = vrot.lane.b32.xlu0 %v2811, 17
        %v3135 = vpop.permute.xlu0 %3134
        %3136 = vrot.lane.b32.xlu0 %v2812, 17
        %v3137 = vpop.permute.xlu0 %3136
        %3138 = vrot.lane.b32.xlu0 %v2813, 17
        %v3139 = vpop.permute.xlu0 %3138
        %3140 = vrot.lane.b32.xlu0 %v2814, 17
        %v3141 = vpop.permute.xlu0 %3140
        %3142 = vrot.lane.b32.xlu0 %v2815, 17
        %v3143 = vpop.permute.xlu0 %3142
        %3144 = vrot.lane.b32.xlu0 %v2816, 17
        %v3145 = vpop.permute.xlu0 %3144
        %v3146 = vsel %vm702, %v3129, %v3131
        %v3147 = vsel %vm702, %v3131, %v3133
        %v3148 = vsel %vm702, %v3135, %v3137
        %v3149 = vsel %vm702, %v3137, %v3139
        %v3150 = vsel %vm702, %v3141, %v3143
        %v3151 = vsel %vm702, %v3143, %v3145
        %v3157 = vsel %vm2821, %v3050, 0
        %v3159 = vsel %vm467, %v3150, 0
        %v3161 = vsel %vm467, %v3151, 0
        %3163 = vmatpush.msra.mxu0 0.0
        %3164 = vmatpush.msra.mxu0 0.0
        %3165 = vmatpush.msra.mxu0 0.0
        %3166 = vmatpush.msra.mxu0 0.0
        %3167 = vmatpush.msra.mxu0 0.0
        %3168 = vmatpush.msra.mxu0 0.0
        %3169 = vmatpush.msra.mxu0 0.0
        %3170 = vmatpush.msra.mxu0 0.0
        %3171 = vmatpush.msra.mxu0 0.0
        %3172 = vmatpush.msra.mxu0 0.0
        %3173 = vmatpush.msra.mxu0 0.0
        %3174 = vmatpush.msra.mxu0 0.0
        %3175 = vmatpush.msra.mxu0 0.0
        %3176 = vmatpush.msra.mxu0 %v3159
        %3177 = vmatpush.msra.mxu0 %v3148
        %3178 = vmatpush.msra.mxu0 %v3146
        %3179 = vmatmul.f32.gmra.mxu0 %v3157
        %v3180 = vpop.f32.mrf.mxu0
        %v3181 = vadd.f32 %v3106, %v3180
        %3182 = vdwg.mxu0
        %3183 = vmatpush.msra.mxu0 0.0
        %3184 = vmatpush.msra.mxu0 0.0
        %3185 = vmatpush.msra.mxu0 0.0
        %3186 = vmatpush.msra.mxu0 0.0
        %3187 = vmatpush.msra.mxu0 0.0
        %3188 = vmatpush.msra.mxu0 0.0
        %3189 = vmatpush.msra.mxu0 0.0
        %3190 = vmatpush.msra.mxu0 0.0
        %3191 = vmatpush.msra.mxu0 0.0
        %3192 = vmatpush.msra.mxu0 0.0
        %3193 = vmatpush.msra.mxu0 0.0
        %3194 = vmatpush.msra.mxu0 0.0
        %3195 = vmatpush.msra.mxu0 0.0
        %3196 = vmatpush.msra.mxu0 %v3161
        %3197 = vmatpush.msra.mxu0 %v3149
        %3198 = vmatpush.msra.mxu0 %v3147
        %3199 = vmatmul.f32.gmra.mxu0 %v3157
        %v3200 = vpop.f32.mrf.mxu0
        %v3201 = vadd.f32 %v3126, %v3200
        %3202 = vdwg.mxu0
        %s3203 = scalar_lea.vmem [#allocation3], 24
        %v3204 = vld [vmem:[%s3203] sm:$0xf]
        %3205 = vrot.lane.b32.xlu0 %v2953, 113
        %v3206 = vpop.permute.xlu0 %3205
        %3207 = vrot.lane.b32.xlu0 %v2954, 113
        %v3208 = vpop.permute.xlu0 %3207
        %3209 = vrot.lane.b32.xlu0 %v2955, 113
        %v3210 = vpop.permute.xlu0 %3209
        %3211 = vrot.lane.b32.xlu0 %v2956, 113
        %v3212 = vpop.permute.xlu0 %3211
        %3213 = vrot.lane.b32.xlu0 %v2957, 113
        %v3214 = vpop.permute.xlu0 %3213
        %3215 = vrot.lane.b32.xlu0 %v2958, 113
        %v3216 = vpop.permute.xlu0 %3215
        %3217 = vrot.lane.b32.xlu0 %v2959, 113
        %v3218 = vpop.permute.xlu0 %3217
        %3219 = vrot.lane.b32.xlu0 %v2960, 113
        %v3220 = vpop.permute.xlu0 %3219
        %3221 = vrot.lane.b32.xlu0 %v2961, 113
        %v3222 = vpop.permute.xlu0 %3221
        %v3223 = vsel %vm760, %v3206, %v3208
        %v3224 = vsel %vm760, %v3208, %v3210
        %v3225 = vsel %vm760, %v3212, %v3214
        %v3226 = vsel %vm760, %v3214, %v3216
        %v3227 = vsel %vm760, %v3218, %v3220
        %v3228 = vsel %vm760, %v3220, %v3222
        %v3234 = vsel %vm2821, %v3204, 0
        %v3236 = vsel %vm467, %v3227, 0
        %v3238 = vsel %vm467, %v3228, 0
        %3240 = vmatpush.msra.mxu0 0.0
        %3241 = vmatpush.msra.mxu0 0.0
        %3242 = vmatpush.msra.mxu0 0.0
        %3243 = vmatpush.msra.mxu0 0.0
        %3244 = vmatpush.msra.mxu0 0.0
        %3245 = vmatpush.msra.mxu0 0.0
        %3246 = vmatpush.msra.mxu0 0.0
        %3247 = vmatpush.msra.mxu0 0.0
        %3248 = vmatpush.msra.mxu0 0.0
        %3249 = vmatpush.msra.mxu0 0.0
        %3250 = vmatpush.msra.mxu0 0.0
        %3251 = vmatpush.msra.mxu0 0.0
        %3252 = vmatpush.msra.mxu0 0.0
        %3253 = vmatpush.msra.mxu0 %v3236
        %3254 = vmatpush.msra.mxu0 %v3225
        %3255 = vmatpush.msra.mxu0 %v3223
        %3256 = vmatmul.f32.gmra.mxu0 %v3234
        %v3257 = vpop.f32.mrf.mxu0
        %v3258 = vadd.f32 0.0, %v3257
        %3259 = vdwg.mxu0
        %3260 = vmatpush.msra.mxu0 0.0
        %3261 = vmatpush.msra.mxu0 0.0
        %3262 = vmatpush.msra.mxu0 0.0
        %3263 = vmatpush.msra.mxu0 0.0
        %3264 = vmatpush.msra.mxu0 0.0
        %3265 = vmatpush.msra.mxu0 0.0
        %3266 = vmatpush.msra.mxu0 0.0
        %3267 = vmatpush.msra.mxu0 0.0
        %3268 = vmatpush.msra.mxu0 0.0
        %3269 = vmatpush.msra.mxu0 0.0
        %3270 = vmatpush.msra.mxu0 0.0
        %3271 = vmatpush.msra.mxu0 0.0
        %3272 = vmatpush.msra.mxu0 0.0
        %3273 = vmatpush.msra.mxu0 %v3238
        %3274 = vmatpush.msra.mxu0 %v3226
        %3275 = vmatpush.msra.mxu0 %v3224
        %3276 = vmatmul.f32.gmra.mxu0 %v3234
        %v3277 = vpop.f32.mrf.mxu0
        %v3278 = vadd.f32 0.0, %v3277
        %3279 = vdwg.mxu0
        %v3280 = vadd.f32 %v3181, %v3258
        %v3281 = vadd.f32 %v3201, %v3278
        %v3282 = vmul.f32 %v448, %v3280
        %v3283 = vmul.f32 %v449, %v3281
        %v3284 = vadd.f32 %v3048, %v3282
        %v3285 = vadd.f32 %v3049, %v3283
        %s3286 = scalar_lea.vmem [#allocation3], 8
        %v3287 = vld [vmem:[%s3286] sm:$0xf]
        %s3288 = scalar_lea.vmem [#allocation3], 20
        %v3289 = vld [vmem:[%s3288] sm:$0xf]
        %3290 = vrot.lane.b32.xlu0 %v2953, 127
        %v3291 = vpop.permute.xlu0 %3290
        %3292 = vrot.lane.b32.xlu0 %v2954, 127
        %v3293 = vpop.permute.xlu0 %3292
        %3294 = vrot.lane.b32.xlu0 %v2955, 127
        %v3295 = vpop.permute.xlu0 %3294
        %3296 = vrot.lane.b32.xlu0 %v2956, 127
        %v3297 = vpop.permute.xlu0 %3296
        %3298 = vrot.lane.b32.xlu0 %v2957, 127
        %v3299 = vpop.permute.xlu0 %3298
        %3300 = vrot.lane.b32.xlu0 %v2958, 127
        %v3301 = vpop.permute.xlu0 %3300
        %3302 = vrot.lane.b32.xlu0 %v2959, 127
        %v3303 = vpop.permute.xlu0 %3302
        %3304 = vrot.lane.b32.xlu0 %v2960, 127
        %v3305 = vpop.permute.xlu0 %3304
        %3306 = vrot.lane.b32.xlu0 %v2961, 127
        %v3307 = vpop.permute.xlu0 %3306
        %v3308 = vsel %vm826, %v3291, %v3293
        %v3309 = vsel %vm826, %v3293, %v3295
        %v3310 = vsel %vm826, %v3297, %v3299
        %v3311 = vsel %vm826, %v3299, %v3301
        %v3312 = vsel %vm826, %v3303, %v3305
        %v3313 = vsel %vm826, %v3305, %v3307
        %v3319 = vsel %vm2821, %v3289, 0
        %v3321 = vsel %vm467, %v3312, 0
        %v3323 = vsel %vm467, %v3313, 0
        %3325 = vmatpush.msra.mxu0 0.0
        %3326 = vmatpush.msra.mxu0 0.0
        %3327 = vmatpush.msra.mxu0 0.0
        %3328 = vmatpush.msra.mxu0 0.0
        %3329 = vmatpush.msra.mxu0 0.0
        %3330 = vmatpush.msra.mxu0 0.0
        %3331 = vmatpush.msra.mxu0 0.0
        %3332 = vmatpush.msra.mxu0 0.0
        %3333 = vmatpush.msra.mxu0 0.0
        %3334 = vmatpush.msra.mxu0 0.0
        %3335 = vmatpush.msra.mxu0 0.0
        %3336 = vmatpush.msra.mxu0 0.0
        %3337 = vmatpush.msra.mxu0 0.0
        %3338 = vmatpush.msra.mxu0 %v3321
        %3339 = vmatpush.msra.mxu0 %v3310
        %3340 = vmatpush.msra.mxu0 %v3308
        %3341 = vmatmul.f32.gmra.mxu0 %v3319
        %v3342 = vpop.f32.mrf.mxu0
        %v3343 = vadd.f32 0.0, %v3342
        %3344 = vdwg.mxu0
        %3345 = vmatpush.msra.mxu0 0.0
        %3346 = vmatpush.msra.mxu0 0.0
        %3347 = vmatpush.msra.mxu0 0.0
        %3348 = vmatpush.msra.mxu0 0.0
        %3349 = vmatpush.msra.mxu0 0.0
        %3350 = vmatpush.msra.mxu0 0.0
        %3351 = vmatpush.msra.mxu0 0.0
        %3352 = vmatpush.msra.mxu0 0.0
        %3353 = vmatpush.msra.mxu0 0.0
        %3354 = vmatpush.msra.mxu0 0.0
        %3355 = vmatpush.msra.mxu0 0.0
        %3356 = vmatpush.msra.mxu0 0.0
        %3357 = vmatpush.msra.mxu0 0.0
        %3358 = vmatpush.msra.mxu0 %v3323
        %3359 = vmatpush.msra.mxu0 %v3311
        %3360 = vmatpush.msra.mxu0 %v3309
        %3361 = vmatmul.f32.gmra.mxu0 %v3319
        %v3362 = vpop.f32.mrf.mxu0
        %v3363 = vadd.f32 0.0, %v3362
        %3364 = vdwg.mxu0
        %3365 = vrot.lane.b32.xlu0 %v2808, 15
        %v3366 = vpop.permute.xlu0 %3365
        %3367 = vrot.lane.b32.xlu0 %v2809, 15
        %v3368 = vpop.permute.xlu0 %3367
        %3369 = vrot.lane.b32.xlu0 %v2810, 15
        %v3370 = vpop.permute.xlu0 %3369
        %3371 = vrot.lane.b32.xlu0 %v2811, 15
        %v3372 = vpop.permute.xlu0 %3371
        %3373 = vrot.lane.b32.xlu0 %v2812, 15
        %v3374 = vpop.permute.xlu0 %3373
        %3375 = vrot.lane.b32.xlu0 %v2813, 15
        %v3376 = vpop.permute.xlu0 %3375
        %3377 = vrot.lane.b32.xlu0 %v2814, 15
        %v3378 = vpop.permute.xlu0 %3377
        %3379 = vrot.lane.b32.xlu0 %v2815, 15
        %v3380 = vpop.permute.xlu0 %3379
        %3381 = vrot.lane.b32.xlu0 %v2816, 15
        %v3382 = vpop.permute.xlu0 %3381
        %v3383 = vsel %vm882, %v3366, %v3368
        %v3384 = vsel %vm882, %v3368, %v3370
        %v3385 = vsel %vm882, %v3372, %v3374
        %v3386 = vsel %vm882, %v3374, %v3376
        %v3387 = vsel %vm882, %v3378, %v3380
        %v3388 = vsel %vm882, %v3380, %v3382
        %v3394 = vsel %vm2821, %v3287, 0
        %v3396 = vsel %vm467, %v3387, 0
        %v3398 = vsel %vm467, %v3388, 0
        %3400 = vmatpush.msra.mxu0 0.0
        %3401 = vmatpush.msra.mxu0 0.0
        %3402 = vmatpush.msra.mxu0 0.0
        %3403 = vmatpush.msra.mxu0 0.0
        %3404 = vmatpush.msra.mxu0 0.0
        %3405 = vmatpush.msra.mxu0 0.0
        %3406 = vmatpush.msra.mxu0 0.0
        %3407 = vmatpush.msra.mxu0 0.0
        %3408 = vmatpush.msra.mxu0 0.0
        %3409 = vmatpush.msra.mxu0 0.0
        %3410 = vmatpush.msra.mxu0 0.0
        %3411 = vmatpush.msra.mxu0 0.0
        %3412 = vmatpush.msra.mxu0 0.0
        %3413 = vmatpush.msra.mxu0 %v3396
        %3414 = vmatpush.msra.mxu0 %v3385
        %3415 = vmatpush.msra.mxu0 %v3383
        %3416 = vmatmul.f32.gmra.mxu0 %v3394
        %v3417 = vpop.f32.mrf.mxu0
        %v3418 = vadd.f32 %v3343, %v3417
        %3419 = vdwg.mxu0
        %3420 = vmatpush.msra.mxu0 0.0
        %3421 = vmatpush.msra.mxu0 0.0
        %3422 = vmatpush.msra.mxu0 0.0
        %3423 = vmatpush.msra.mxu0 0.0
        %3424 = vmatpush.msra.mxu0 0.0
        %3425 = vmatpush.msra.mxu0 0.0
        %3426 = vmatpush.msra.mxu0 0.0
        %3427 = vmatpush.msra.mxu0 0.0
        %3428 = vmatpush.msra.mxu0 0.0
        %3429 = vmatpush.msra.mxu0 0.0
        %3430 = vmatpush.msra.mxu0 0.0
        %3431 = vmatpush.msra.mxu0 0.0
        %3432 = vmatpush.msra.mxu0 0.0
        %3433 = vmatpush.msra.mxu0 %v3398
        %3434 = vmatpush.msra.mxu0 %v3386
        %3435 = vmatpush.msra.mxu0 %v3384
        %3436 = vmatmul.f32.gmra.mxu0 %v3394
        %v3437 = vpop.f32.mrf.mxu0
        %v3438 = vadd.f32 %v3363, %v3437
        %3439 = vdwg.mxu0
        %s3440 = scalar_lea.vmem [#allocation3], 32
        %v3441 = vld [vmem:[%s3440] sm:$0xf]
        %3442 = vrot.lane.b32.xlu0 %v2953, 111
        %v3443 = vpop.permute.xlu0 %3442
        %3444 = vrot.lane.b32.xlu0 %v2954, 111
        %v3445 = vpop.permute.xlu0 %3444
        %3446 = vrot.lane.b32.xlu0 %v2955, 111
        %v3447 = vpop.permute.xlu0 %3446
        %3448 = vrot.lane.b32.xlu0 %v2956, 111
        %v3449 = vpop.permute.xlu0 %3448
        %3450 = vrot.lane.b32.xlu0 %v2957, 111
        %v3451 = vpop.permute.xlu0 %3450
        %3452 = vrot.lane.b32.xlu0 %v2958, 111
        %v3453 = vpop.permute.xlu0 %3452
        %3454 = vrot.lane.b32.xlu0 %v2959, 111
        %v3455 = vpop.permute.xlu0 %3454
        %3456 = vrot.lane.b32.xlu0 %v2960, 111
        %v3457 = vpop.permute.xlu0 %3456
        %3458 = vrot.lane.b32.xlu0 %v2961, 111
        %v3459 = vpop.permute.xlu0 %3458
        %v3460 = vsel %vm940, %v3443, %v3445
        %v3461 = vsel %vm940, %v3445, %v3447
        %v3462 = vsel %vm940, %v3449, %v3451
        %v3463 = vsel %vm940, %v3451, %v3453
        %v3464 = vsel %vm940, %v3455, %v3457
        %v3465 = vsel %vm940, %v3457, %v3459
        %v3471 = vsel %vm2821, %v3441, 0
        %v3473 = vsel %vm467, %v3464, 0
        %v3475 = vsel %vm467, %v3465, 0
        %3477 = vmatpush.msra.mxu0 0.0
        %3478 = vmatpush.msra.mxu0 0.0
        %3479 = vmatpush.msra.mxu0 0.0
        %3480 = vmatpush.msra.mxu0 0.0
        %3481 = vmatpush.msra.mxu0 0.0
        %3482 = vmatpush.msra.mxu0 0.0
        %3483 = vmatpush.msra.mxu0 0.0
        %3484 = vmatpush.msra.mxu0 0.0
        %3485 = vmatpush.msra.mxu0 0.0
        %3486 = vmatpush.msra.mxu0 0.0
        %3487 = vmatpush.msra.mxu0 0.0
        %3488 = vmatpush.msra.mxu0 0.0
        %3489 = vmatpush.msra.mxu0 0.0
        %3490 = vmatpush.msra.mxu0 %v3473
        %3491 = vmatpush.msra.mxu0 %v3462
        %3492 = vmatpush.msra.mxu0 %v3460
        %3493 = vmatmul.f32.gmra.mxu0 %v3471
        %v3494 = vpop.f32.mrf.mxu0
        %v3495 = vadd.f32 0.0, %v3494
        %3496 = vdwg.mxu0
        %3497 = vmatpush.msra.mxu0 0.0
        %3498 = vmatpush.msra.mxu0 0.0
        %3499 = vmatpush.msra.mxu0 0.0
        %3500 = vmatpush.msra.mxu0 0.0
        %3501 = vmatpush.msra.mxu0 0.0
        %3502 = vmatpush.msra.mxu0 0.0
        %3503 = vmatpush.msra.mxu0 0.0
        %3504 = vmatpush.msra.mxu0 0.0
        %3505 = vmatpush.msra.mxu0 0.0
        %3506 = vmatpush.msra.mxu0 0.0
        %3507 = vmatpush.msra.mxu0 0.0
        %3508 = vmatpush.msra.mxu0 0.0
        %3509 = vmatpush.msra.mxu0 0.0
        %3510 = vmatpush.msra.mxu0 %v3475
        %3511 = vmatpush.msra.mxu0 %v3463
        %3512 = vmatpush.msra.mxu0 %v3461
        %3513 = vmatmul.f32.gmra.mxu0 %v3471
        %v3514 = vpop.f32.mrf.mxu0
        %v3515 = vadd.f32 0.0, %v3514
        %3516 = vdwg.mxu0
        %v3517 = vadd.f32 %v3418, %v3495
        %v3518 = vadd.f32 %v3438, %v3515
        %v3519 = vmul.f32 %v454, %v3517
        %v3520 = vmul.f32 %v455, %v3518
        %v3521 = vadd.f32 %v3284, %v3519
        %v3522 = vadd.f32 %v3285, %v3520
        %v3523 = vld [vmem:[%s10] sm:$0xf]
        %3525 = vset.pattern.permute.xlu0 0
        %3526 = vperm.xlu0 %3525, %v3523
        %v3527 = vpop.permute.xlu0 %3526
        %v3529 = vadd.f32 %v3521, %v3527
        %v3530 = vadd.f32 %v3522, %v3527
        %v3533 = vrot.slane %v3530, 4
        %v3534 = vsel %vm467, %v3529, %v3533
        %3536 = vst [vmem:[%s396] sm:$0xff] %v3534
        %s3537 = sand.u32 %s270, 1
        %s3538 = scalar_lea.sflag [#allocation5], %s3537
        %s3539 = sand.u32 %s270, 1
        %s3540 = smul.addr %s3539, 8
        %s3541 = scalar_lea.vmem [#allocation6], %s3540
        // Predicated region
        $region69: #{tpu_custom_call.1} parent=63 // pred_check
          %p3542 = pneg %p280
        $region70: #{tpu_custom_call.1} parent=63 // pred_check_branch
          %3544 = sbr.rel (%p3542) target = $region72
        $region71: #{tpu_custom_call.1} parent=63 // pred_region
          %3546 = vsyncadd %s3538, 0
          %s3547 = smul.addr %s26, 2
          %s3548 = smul.addr %s3547, 4
          %s3549 = scalar_lea.hbm %s11, %s3548
          %s3551 = sshll.u32 %s3541, 4
          %s3552 = int_to_ptr.vmem [resolvable:$true] %s3551
          %s3553 = sshll.u32 %s3549, 4
          %s3554 = int_to_ptr.hbm [resolvable:$true] %s3553
          %3556 = dma.vmem_to_hbm [thread:$0]  %s3552, 128, %s3554, %s3538
        $region72: #{tpu_custom_call.1} parent=63 // pred_fallthru
          _
      $region64: #{tpu_custom_call.1} parent=5 // pred_fallthru
        _
      %p3557 = scmp.le.s32.totalorder 2, %s21
      // Predicated region
      $region73: #{tpu_custom_call.1} parent=5 // pred_check
        %p3558 = pneg %p3557
      $region74: #{tpu_custom_call.1} parent=5 // pred_check_branch
        %3560 = sbr.rel (%p3558) target = $region76
      $region75: #{tpu_custom_call.1} parent=5 // pred_region
        %s3561 = ssub.s32 %s21, 2
        // Predicated region
        $region77: #{tpu_custom_call.1} parent=75 // pred_check
          %p3562 = pneg %p286
        $region78: #{tpu_custom_call.1} parent=75 // pred_check_branch
          %3564 = sbr.rel (%p3562) target = $region80
        $region79: #{tpu_custom_call.1} parent=75 // pred_region
          %s3565 = sand.u32 %s271, 1
          %s3566 = scalar_lea.sflag [#allocation5], %s3565
          %s3567 = sand.u32 %s271, 1
          %s3568 = smul.addr %s3567, 8
          %s3569 = scalar_lea.vmem [#allocation6], %s3568
          %3571 = dma.done %s3566, 128
        $region80: #{tpu_custom_call.1} parent=75 // pred_fallthru
          _
      $region76: #{tpu_custom_call.1} parent=5 // pred_fallthru
        _
    $region6: #{tpu_custom_call.1} parent=1 // loop_footer
      %s25 = sadd.s32 1, %s21
    $region7: #{tpu_custom_call.1} parent=1 // loop_footer_branch
      %20 = sbr.rel target = $region3
    $region8: #{tpu_custom_call.1} parent=1 // loop_exit
      _
    %3572 = vsyncpa [#allocation4], 1
    %s3573 = scalar_lea.sflag [#allocation4], 1
    %3574 = vsyncpa %s3573, 1
    %3575 = vsyncpa [#allocation5], 1
    %s3576 = scalar_lea.sflag [#allocation5], 1
    %3577 = vsyncpa %s3576, 1

</llo_original>
